<compile_context>
chip_gen: v6e
topology: v6e:2x2x1
jax: 0.10.0
libtpu: 0.0.40
codegen_flags: <defaults>
</compile_context>

<pallas_src>
import jax
import jax.numpy as jnp
from jax import lax
from jax.experimental import pallas as pl
from jax.experimental.pallas import tpu as pltpu
import numpy as np


def _round_up(n, m):
    return ((n + m - 1) // m) * m


# ----------------------------------------------------------------------------
# Kernel: one batch block per grid step.
#   x_ref   : (28, Bb, 28)    rows=(y, b), lanes = x-pixel
#   w1t_ref : (5, 28, 240)    Toeplitz conv1 weights, cols=(parity, oc, ox//2)
#   b1t_ref : (1, 240)
#   w2t_ref : (5, 120, 160)   Toeplitz conv2 weights, rows=(c, x), cols=(parity, oc, ox//2)
#   b2t_ref : (1, 160)
#   fw1_ref : (4, 80, 50)     fc1 split over the 4 spatial rows, rows=(c, x)
#   fb1_ref : (1, 50)
#   fw2_ref : (50, 10)
#   fb2_ref : (1, 10)
#   out_ref : (Bb, 10)
# ----------------------------------------------------------------------------
def _net_kernel(x_ref, w1t_ref, b1t_ref, w2t_ref, b2t_ref,
                fw1_ref, fb1_ref, fw2_ref, fb2_ref, out_ref):
    Bb = x_ref.shape[1]
    x = x_ref[...]                                        # (28, Bb, 28)

    # ---- conv1: 5 accumulated Toeplitz matmuls, M=24*Bb, K=28, N=240 ----
    acc1 = jnp.dot(x[0:24].reshape(24 * Bb, 28), w1t_ref[0],
                   preferred_element_type=jnp.float32)
    for ky in range(1, 5):
        acc1 = acc1 + jnp.dot(x[ky:ky + 24].reshape(24 * Bb, 28), w1t_ref[ky],
                              preferred_element_type=jnp.float32)
    acc1 = acc1 + b1t_ref[...]                            # (24*Bb, 240)

    # ---- maxpool 2x2 then relu -> (12, Bb, 120), cols = (oc, x) ----
    a = acc1.reshape(12, 2, Bb, 240)
    a = jnp.maximum(a[:, 0], a[:, 1])                     # pool over y
    a = jnp.maximum(a[..., :120], a[..., 120:])           # pool over x (even/odd halves)
    h1 = jnp.maximum(a, 0.0)                              # (12, Bb, 120)

    # ---- conv2: 5 accumulated Toeplitz matmuls, M=8*Bb, K=120, N=160 ----
    acc2 = jnp.dot(h1[0:8].reshape(8 * Bb, 120), w2t_ref[0],
                   preferred_element_type=jnp.float32)
    for ky in range(1, 5):
        acc2 = acc2 + jnp.dot(h1[ky:ky + 8].reshape(8 * Bb, 120), w2t_ref[ky],
                              preferred_element_type=jnp.float32)
    acc2 = acc2 + b2t_ref[...]                            # (8*Bb, 160)
    # TODO(synk): training-mode Dropout2d / F.dropout not reproduced; eval-mode
    # semantics (identity) are implemented here.

    # ---- maxpool 2x2 then relu -> (4, Bb, 80), cols = (oc, x) ----
    a2 = acc2.reshape(4, 2, Bb, 160)
    a2 = jnp.maximum(a2[:, 0], a2[:, 1])                  # pool over y
    a2 = jnp.maximum(a2[..., :80], a2[..., 80:])          # pool over x
    h2 = jnp.maximum(a2, 0.0)                             # (4, Bb, 80)

    # ---- fc1: 4 accumulated (Bb,80)x(80,50) matmuls + relu ----
    f1 = jnp.dot(h2[0], fw1_ref[0], preferred_element_type=jnp.float32)
    for y in range(1, 4):
        f1 = f1 + jnp.dot(h2[y], fw1_ref[y], preferred_element_type=jnp.float32)
    f1 = jnp.maximum(f1 + fb1_ref[...], 0.0)              # (Bb, 50)

    # ---- fc2 + log_softmax ----
    logits = jnp.dot(f1, fw2_ref[...], preferred_element_type=jnp.float32)
    logits = logits + fb2_ref[...]                        # (Bb, 10)
    m = jnp.max(logits, axis=-1, keepdims=True)
    e = jnp.exp(logits - m)
    s = jnp.sum(e, axis=-1, keepdims=True)
    out_ref[...] = logits - m - jnp.log(s)


def _full_spec(shape):
    nd = len(shape)
    return pl.BlockSpec(shape, lambda b, _nd=nd: (0,) * _nd)


# ----------------------------------------------------------------------------
# Wrapper-side weight preparation (pure one-time numpy glue).
# Column ordering for conv outputs:  col = (ox % 2) * (C*W//2) + oc * (W//2) + ox // 2
# so x-pooling inside the kernel is a max of two contiguous lane halves, and
# the pooled column order (oc, x) matches the next layer's expected row order.
# ----------------------------------------------------------------------------
def _prep_params(params):
    w1, b1, w2, b2, fw1, fb1, fw2, fb2 = [np.asarray(p, np.float32) for p in params]

    # conv1 -> 5 Toeplitz matrices (28, 240)
    w1t = np.zeros((5, 28, 240), np.float32)
    b1t = np.zeros((1, 240), np.float32)
    for oc in range(10):
        for ox in range(24):
            col = (ox % 2) * 120 + oc * 12 + ox // 2
            b1t[0, col] = b1[oc]
            for ky in range(5):
                for kx in range(5):
                    w1t[ky, ox + kx, col] = w1[oc, 0, ky, kx]

    # conv2 -> 5 Toeplitz matrices (120, 160); rows = (cin, x) matching pooled conv1 cols
    w2t = np.zeros((5, 120, 160), np.float32)
    b2t = np.zeros((1, 160), np.float32)
    for oc in range(20):
        for ox in range(8):
            col = (ox % 2) * 80 + oc * 4 + ox // 2
            b2t[0, col] = b2[oc]
            for c in range(10):
                for ky in range(5):
                    for kx in range(5):
                        w2t[ky, c * 12 + ox + kx, col] = w2[oc, c, ky, kx]

    # fc1: torch flattens NCHW as idx = c*16 + y*4 + x; kernel H2 cols are (c, x),
    # split the weight into 4 per-row (y) matrices of shape (80, 50).
    fw1r = fw1.reshape(50, 20, 4, 4)                       # (j, c, y, x)
    fw1t = np.ascontiguousarray(np.transpose(fw1r, (2, 1, 3, 0)).reshape(4, 80, 50))
    fb1t = np.ascontiguousarray(fb1.reshape(1, 50))
    fw2t = np.ascontiguousarray(fw2.T)                     # (50, 10)
    fb2t = np.ascontiguousarray(fb2.reshape(1, 10))

    return tuple(jnp.asarray(a) for a in
                 (w1t, b1t, w2t, b2t, fw1t, fb1t, fw2t, fb2t))


def net_forward(x_nchw, params, block_b=128):
    """Forward pass identical to the PyTorch module in eval mode."""
    B = x_nchw.shape[0]
    Bb = min(_round_up(block_b, 8), _round_up(B, 8))
    Bpad = _round_up(B, Bb)

    w1t, b1t, w2t, b2t, fw1t, fb1t, fw2t, fb2t = _prep_params(params)

    # input: (B,1,28,28) -> (28, Bpad, 28)  rows=(y, b), lanes = x
    x = x_nchw[:, 0].astype(jnp.float32)                   # (B, 28, 28)
    if Bpad > B:
        x = jnp.pad(x, ((0, Bpad - B), (0, 0), (0, 0)))
    xk = jnp.transpose(x, (1, 0, 2))                       # (28, Bpad, 28)

    out = pl.pallas_call(
        _net_kernel,
        out_shape=jax.ShapeDtypeStruct((Bpad, 10), jnp.float32),
        grid_spec=pltpu.PrefetchScalarGridSpec(
            num_scalar_prefetch=0,
            grid=(Bpad // Bb,),
            in_specs=[
                pl.BlockSpec((28, Bb, 28), lambda i: (0, i, 0)),
                _full_spec((5, 28, 240)),
                _full_spec((1, 240)),
                _full_spec((5, 120, 160)),
                _full_spec((1, 160)),
                _full_spec((4, 80, 50)),
                _full_spec((1, 50)),
                _full_spec((50, 10)),
                _full_spec((1, 10)),
            ],
            out_specs=pl.BlockSpec((Bb, 10), lambda i: (i, 0)),
        ),
        compiler_params=pltpu.CompilerParams(
            dimension_semantics=("parallel",),
            vmem_limit_bytes=32 * 1024 * 1024),
    )(xk, w1t, b1t, w2t, b2t, fw1t, fb1t, fw2t, fb2t)
    return out[:B]


def init_params(key):
    """Deterministic, PyTorch-shaped parameters (uniform(-1/sqrt(fan_in), ...))."""
    ks = jax.random.split(key, 8)

    def u(k, shape, fan_in):
        bound = 1.0 / np.sqrt(fan_in)
        return jax.random.uniform(k, shape, jnp.float32, -bound, bound)

    w1 = u(ks[0], (10, 1, 5, 5), 1 * 5 * 5)
    b1 = u(ks[1], (10,), 1 * 5 * 5)
    w2 = u(ks[2], (20, 10, 5, 5), 10 * 5 * 5)
    b2 = u(ks[3], (20,), 10 * 5 * 5)
    fw1 = u(ks[4], (50, 320), 320)
    fb1 = u(ks[5], (50,), 320)
    fw2 = u(ks[6], (10, 50), 50)
    fb2 = u(ks[7], (10,), 50)
    return (w1, b1, w2, b2, fw1, fb1, fw2, fb2)


def reference_forward(x_nchw, params):
    """Pure-JAX reference matching the PyTorch forward (eval mode), NCHW."""
    w1, b1, w2, b2, fw1, fb1, fw2, fb2 = params
    dn = ("NCHW", "OIHW", "NCHW")
    y = lax.conv_general_dilated(x_nchw, w1, (1, 1), "VALID",
                                 dimension_numbers=dn)
    y = y + b1[None, :, None, None]
    y = lax.reduce_window(y, -jnp.inf, lax.max, (1, 1, 2, 2), (1, 1, 2, 2),
                          "VALID")
    y = jnp.maximum(y, 0.0)
    y = lax.conv_general_dilated(y, w2, (1, 1), "VALID",
                                 dimension_numbers=dn)
    y = y + b2[None, :, None, None]
    y = lax.reduce_window(y, -jnp.inf, lax.max, (1, 1, 2, 2), (1, 1, 2, 2),
                          "VALID")
    y = jnp.maximum(y, 0.0)
    y = y.reshape(y.shape[0], -1)                # == torch x.view(-1, 320)
    y = jnp.maximum(y @ fw1.T + fb1, 0.0)
    y = y @ fw2.T + fb2
    return jax.nn.log_softmax(y, axis=1)


if __name__ == "__main__":
    key = jax.random.PRNGKey(0)
    kx, kp = jax.random.split(key)
    params = init_params(kp)
    x = jax.random.normal(kx, (2, 1, 28, 28), jnp.float32)  # MNIST-style input

    out = jax.block_until_ready(net_forward(x, params))
    ref = jax.block_until_ready(reference_forward(x, params))

    assert out.shape == (2, 10)
    np.testing.assert_allclose(np.asarray(out), np.asarray(ref),
                               atol=1e-4, rtol=1e-4)
    print("KERNEL_OK")
</pallas_src>

<mosaic_0001>
module attributes {stable_mosaic.version = 11 : i64} {
  func.func @_net_kernel(%arg0: i32, %arg1: memref<28x8x28xf32, #tpu.memory_space<vmem>>, %arg2: memref<5x28x240xf32, #tpu.memory_space<vmem>>, %arg3: memref<1x240xf32, #tpu.memory_space<vmem>>, %arg4: memref<5x120x160xf32, #tpu.memory_space<vmem>>, %arg5: memref<1x160xf32, #tpu.memory_space<vmem>>, %arg6: memref<4x80x50xf32, #tpu.memory_space<vmem>>, %arg7: memref<1x50xf32, #tpu.memory_space<vmem>>, %arg8: memref<50x10xf32, #tpu.memory_space<vmem>>, %arg9: memref<1x10xf32, #tpu.memory_space<vmem>>, %arg10: memref<8x10xf32, #tpu.memory_space<vmem>>) attributes {dimension_semantics = [#tpu.dimension_semantics<parallel>], iteration_bounds = array<i64: 1>, scalar_prefetch = 0 : i64, scratch_operands = 0 : i64, tpu.core_type = #tpu.core_type<tc>, window_params = [{transform_indices = @transform_0, window_bounds = array<i64: 28, 8, 28>}, {pipeline_mode = #tpu.pipeline_mode<synchronous>, transform_indices = @transform_1, window_bounds = array<i64: 5, 28, 240>}, {pipeline_mode = #tpu.pipeline_mode<synchronous>, transform_indices = @transform_2, window_bounds = array<i64: 1, 240>}, {pipeline_mode = #tpu.pipeline_mode<synchronous>, transform_indices = @transform_3, window_bounds = array<i64: 5, 120, 160>}, {pipeline_mode = #tpu.pipeline_mode<synchronous>, transform_indices = @transform_4, window_bounds = array<i64: 1, 160>}, {pipeline_mode = #tpu.pipeline_mode<synchronous>, transform_indices = @transform_5, window_bounds = array<i64: 4, 80, 50>}, {pipeline_mode = #tpu.pipeline_mode<synchronous>, transform_indices = @transform_6, window_bounds = array<i64: 1, 50>}, {pipeline_mode = #tpu.pipeline_mode<synchronous>, transform_indices = @transform_7, window_bounds = array<i64: 50, 10>}, {pipeline_mode = #tpu.pipeline_mode<synchronous>, transform_indices = @transform_8, window_bounds = array<i64: 1, 10>}, {transform_indices = @transform_9, window_bounds = array<i64: 8, 10>}]} {
    %c0 = arith.constant 0 : index
    %c0_0 = arith.constant 0 : index
    %c0_1 = arith.constant 0 : index
    %0 = vector.load %arg1[%c0, %c0_0, %c0_1] : memref<28x8x28xf32, #tpu.memory_space<vmem>>, vector<28x8x28xf32>
    %1 = vector.extract_strided_slice %0 {offsets = [0, 0, 0], sizes = [24, 8, 28], strides = [1, 1, 1]} : vector<28x8x28xf32> to vector<24x8x28xf32>
    %2 = vector.shape_cast %1 : vector<24x8x28xf32> to vector<192x28xf32>
    %c0_2 = arith.constant 0 : index
    %c0_3 = arith.constant 0 : index
    %c0_4 = arith.constant 0 : index
    %3 = vector.load %arg2[%c0_2, %c0_3, %c0_4] : memref<5x28x240xf32, #tpu.memory_space<vmem>>, vector<1x28x240xf32>
    %4 = vector.shape_cast %3 : vector<1x28x240xf32> to vector<28x240xf32>
    %cst = arith.constant dense<0.000000e+00> : vector<192x240xf32>
    %5 = tpu.matmul %2, %4, %cst {dimension_numbers = #tpu.dot_dimension_numbers<[1], [0], [0], [1], [0, 0, 1, 1], [], []>} : vector<192x28xf32>, vector<28x240xf32>, vector<192x240xf32> -> vector<192x240xf32>
    %6 = vector.extract_strided_slice %0 {offsets = [1, 0, 0], sizes = [24, 8, 28], strides = [1, 1, 1]} : vector<28x8x28xf32> to vector<24x8x28xf32>
    %7 = vector.shape_cast %6 : vector<24x8x28xf32> to vector<192x28xf32>
    %c1 = arith.constant 1 : index
    %c0_5 = arith.constant 0 : index
    %c0_6 = arith.constant 0 : index
    %8 = vector.load %arg2[%c1, %c0_5, %c0_6] : memref<5x28x240xf32, #tpu.memory_space<vmem>>, vector<1x28x240xf32>
    %9 = vector.shape_cast %8 : vector<1x28x240xf32> to vector<28x240xf32>
    %cst_7 = arith.constant dense<0.000000e+00> : vector<192x240xf32>
    %10 = tpu.matmul %7, %9, %cst_7 {dimension_numbers = #tpu.dot_dimension_numbers<[1], [0], [0], [1], [0, 0, 1, 1], [], []>} : vector<192x28xf32>, vector<28x240xf32>, vector<192x240xf32> -> vector<192x240xf32>
    %11 = arith.addf %5, %10 : vector<192x240xf32>
    %12 = vector.extract_strided_slice %0 {offsets = [2, 0, 0], sizes = [24, 8, 28], strides = [1, 1, 1]} : vector<28x8x28xf32> to vector<24x8x28xf32>
    %13 = vector.shape_cast %12 : vector<24x8x28xf32> to vector<192x28xf32>
    %c2 = arith.constant 2 : index
    %c0_8 = arith.constant 0 : index
    %c0_9 = arith.constant 0 : index
    %14 = vector.load %arg2[%c2, %c0_8, %c0_9] : memref<5x28x240xf32, #tpu.memory_space<vmem>>, vector<1x28x240xf32>
    %15 = vector.shape_cast %14 : vector<1x28x240xf32> to vector<28x240xf32>
    %cst_10 = arith.constant dense<0.000000e+00> : vector<192x240xf32>
    %16 = tpu.matmul %13, %15, %cst_10 {dimension_numbers = #tpu.dot_dimension_numbers<[1], [0], [0], [1], [0, 0, 1, 1], [], []>} : vector<192x28xf32>, vector<28x240xf32>, vector<192x240xf32> -> vector<192x240xf32>
    %17 = arith.addf %11, %16 : vector<192x240xf32>
    %18 = vector.extract_strided_slice %0 {offsets = [3, 0, 0], sizes = [24, 8, 28], strides = [1, 1, 1]} : vector<28x8x28xf32> to vector<24x8x28xf32>
    %19 = vector.shape_cast %18 : vector<24x8x28xf32> to vector<192x28xf32>
    %c3 = arith.constant 3 : index
    %c0_11 = arith.constant 0 : index
    %c0_12 = arith.constant 0 : index
    %20 = vector.load %arg2[%c3, %c0_11, %c0_12] : memref<5x28x240xf32, #tpu.memory_space<vmem>>, vector<1x28x240xf32>
    %21 = vector.shape_cast %20 : vector<1x28x240xf32> to vector<28x240xf32>
    %cst_13 = arith.constant dense<0.000000e+00> : vector<192x240xf32>
    %22 = tpu.matmul %19, %21, %cst_13 {dimension_numbers = #tpu.dot_dimension_numbers<[1], [0], [0], [1], [0, 0, 1, 1], [], []>} : vector<192x28xf32>, vector<28x240xf32>, vector<192x240xf32> -> vector<192x240xf32>
    %23 = arith.addf %17, %22 : vector<192x240xf32>
    %24 = vector.extract_strided_slice %0 {offsets = [4, 0, 0], sizes = [24, 8, 28], strides = [1, 1, 1]} : vector<28x8x28xf32> to vector<24x8x28xf32>
    %25 = vector.shape_cast %24 : vector<24x8x28xf32> to vector<192x28xf32>
    %c4 = arith.constant 4 : index
    %c0_14 = arith.constant 0 : index
    %c0_15 = arith.constant 0 : index
    %26 = vector.load %arg2[%c4, %c0_14, %c0_15] : memref<5x28x240xf32, #tpu.memory_space<vmem>>, vector<1x28x240xf32>
    %27 = vector.shape_cast %26 : vector<1x28x240xf32> to vector<28x240xf32>
    %cst_16 = arith.constant dense<0.000000e+00> : vector<192x240xf32>
    %28 = tpu.matmul %25, %27, %cst_16 {dimension_numbers = #tpu.dot_dimension_numbers<[1], [0], [0], [1], [0, 0, 1, 1], [], []>} : vector<192x28xf32>, vector<28x240xf32>, vector<192x240xf32> -> vector<192x240xf32>
    %29 = arith.addf %23, %28 : vector<192x240xf32>
    %c0_17 = arith.constant 0 : index
    %c0_18 = arith.constant 0 : index
    %30 = vector.load %arg3[%c0_17, %c0_18] : memref<1x240xf32, #tpu.memory_space<vmem>>, vector<1x240xf32>
    %31 = vector.broadcast %30 : vector<1x240xf32> to vector<192x240xf32>
    %32 = arith.addf %29, %31 : vector<192x240xf32>
    %33 = vector.shape_cast %32 : vector<192x240xf32> to vector<12x2x8x240xf32>
    %34 = vector.extract_strided_slice %33 {offsets = [0, 0, 0, 0], sizes = [12, 1, 8, 240], strides = [1, 1, 1, 1]} : vector<12x2x8x240xf32> to vector<12x1x8x240xf32>
    %35 = vector.shape_cast %34 : vector<12x1x8x240xf32> to vector<12x8x240xf32>
    %36 = vector.extract_strided_slice %33 {offsets = [0, 1, 0, 0], sizes = [12, 1, 8, 240], strides = [1, 1, 1, 1]} : vector<12x2x8x240xf32> to vector<12x1x8x240xf32>
    %37 = vector.shape_cast %36 : vector<12x1x8x240xf32> to vector<12x8x240xf32>
    %38 = arith.maximumf %35, %37 : vector<12x8x240xf32>
    %39 = vector.extract_strided_slice %38 {offsets = [0, 0, 0], sizes = [12, 8, 120], strides = [1, 1, 1]} : vector<12x8x240xf32> to vector<12x8x120xf32>
    %40 = vector.extract_strided_slice %38 {offsets = [0, 0, 120], sizes = [12, 8, 120], strides = [1, 1, 1]} : vector<12x8x240xf32> to vector<12x8x120xf32>
    %41 = arith.maximumf %39, %40 : vector<12x8x120xf32>
    %cst_19 = arith.constant 0.000000e+00 : f32
    %42 = vector.broadcast %cst_19 : f32 to vector<12x8x120xf32>
    %43 = arith.maximumf %41, %42 : vector<12x8x120xf32>
    %44 = vector.extract_strided_slice %43 {offsets = [0, 0, 0], sizes = [8, 8, 120], strides = [1, 1, 1]} : vector<12x8x120xf32> to vector<8x8x120xf32>
    %45 = vector.shape_cast %44 : vector<8x8x120xf32> to vector<64x120xf32>
    %c0_20 = arith.constant 0 : index
    %c0_21 = arith.constant 0 : index
    %c0_22 = arith.constant 0 : index
    %46 = vector.load %arg4[%c0_20, %c0_21, %c0_22] : memref<5x120x160xf32, #tpu.memory_space<vmem>>, vector<1x120x160xf32>
    %47 = vector.shape_cast %46 : vector<1x120x160xf32> to vector<120x160xf32>
    %cst_23 = arith.constant dense<0.000000e+00> : vector<64x160xf32>
    %48 = tpu.matmul %45, %47, %cst_23 {dimension_numbers = #tpu.dot_dimension_numbers<[1], [0], [0], [1], [0, 0, 1, 1], [], []>} : vector<64x120xf32>, vector<120x160xf32>, vector<64x160xf32> -> vector<64x160xf32>
    %49 = vector.extract_strided_slice %43 {offsets = [1, 0, 0], sizes = [8, 8, 120], strides = [1, 1, 1]} : vector<12x8x120xf32> to vector<8x8x120xf32>
    %50 = vector.shape_cast %49 : vector<8x8x120xf32> to vector<64x120xf32>
    %c1_24 = arith.constant 1 : index
    %c0_25 = arith.constant 0 : index
    %c0_26 = arith.constant 0 : index
    %51 = vector.load %arg4[%c1_24, %c0_25, %c0_26] : memref<5x120x160xf32, #tpu.memory_space<vmem>>, vector<1x120x160xf32>
    %52 = vector.shape_cast %51 : vector<1x120x160xf32> to vector<120x160xf32>
    %cst_27 = arith.constant dense<0.000000e+00> : vector<64x160xf32>
    %53 = tpu.matmul %50, %52, %cst_27 {dimension_numbers = #tpu.dot_dimension_numbers<[1], [0], [0], [1], [0, 0, 1, 1], [], []>} : vector<64x120xf32>, vector<120x160xf32>, vector<64x160xf32> -> vector<64x160xf32>
    %54 = arith.addf %48, %53 : vector<64x160xf32>
    %55 = vector.extract_strided_slice %43 {offsets = [2, 0, 0], sizes = [8, 8, 120], strides = [1, 1, 1]} : vector<12x8x120xf32> to vector<8x8x120xf32>
    %56 = vector.shape_cast %55 : vector<8x8x120xf32> to vector<64x120xf32>
    %c2_28 = arith.constant 2 : index
    %c0_29 = arith.constant 0 : index
    %c0_30 = arith.constant 0 : index
    %57 = vector.load %arg4[%c2_28, %c0_29, %c0_30] : memref<5x120x160xf32, #tpu.memory_space<vmem>>, vector<1x120x160xf32>
    %58 = vector.shape_cast %57 : vector<1x120x160xf32> to vector<120x160xf32>
    %cst_31 = arith.constant dense<0.000000e+00> : vector<64x160xf32>
    %59 = tpu.matmul %56, %58, %cst_31 {dimension_numbers = #tpu.dot_dimension_numbers<[1], [0], [0], [1], [0, 0, 1, 1], [], []>} : vector<64x120xf32>, vector<120x160xf32>, vector<64x160xf32> -> vector<64x160xf32>
    %60 = arith.addf %54, %59 : vector<64x160xf32>
    %61 = vector.extract_strided_slice %43 {offsets = [3, 0, 0], sizes = [8, 8, 120], strides = [1, 1, 1]} : vector<12x8x120xf32> to vector<8x8x120xf32>
    %62 = vector.shape_cast %61 : vector<8x8x120xf32> to vector<64x120xf32>
    %c3_32 = arith.constant 3 : index
    %c0_33 = arith.constant 0 : index
    %c0_34 = arith.constant 0 : index
    %63 = vector.load %arg4[%c3_32, %c0_33, %c0_34] : memref<5x120x160xf32, #tpu.memory_space<vmem>>, vector<1x120x160xf32>
    %64 = vector.shape_cast %63 : vector<1x120x160xf32> to vector<120x160xf32>
    %cst_35 = arith.constant dense<0.000000e+00> : vector<64x160xf32>
    %65 = tpu.matmul %62, %64, %cst_35 {dimension_numbers = #tpu.dot_dimension_numbers<[1], [0], [0], [1], [0, 0, 1, 1], [], []>} : vector<64x120xf32>, vector<120x160xf32>, vector<64x160xf32> -> vector<64x160xf32>
    %66 = arith.addf %60, %65 : vector<64x160xf32>
    %67 = vector.extract_strided_slice %43 {offsets = [4, 0, 0], sizes = [8, 8, 120], strides = [1, 1, 1]} : vector<12x8x120xf32> to vector<8x8x120xf32>
    %68 = vector.shape_cast %67 : vector<8x8x120xf32> to vector<64x120xf32>
    %c4_36 = arith.constant 4 : index
    %c0_37 = arith.constant 0 : index
    %c0_38 = arith.constant 0 : index
    %69 = vector.load %arg4[%c4_36, %c0_37, %c0_38] : memref<5x120x160xf32, #tpu.memory_space<vmem>>, vector<1x120x160xf32>
    %70 = vector.shape_cast %69 : vector<1x120x160xf32> to vector<120x160xf32>
    %cst_39 = arith.constant dense<0.000000e+00> : vector<64x160xf32>
    %71 = tpu.matmul %68, %70, %cst_39 {dimension_numbers = #tpu.dot_dimension_numbers<[1], [0], [0], [1], [0, 0, 1, 1], [], []>} : vector<64x120xf32>, vector<120x160xf32>, vector<64x160xf32> -> vector<64x160xf32>
    %72 = arith.addf %66, %71 : vector<64x160xf32>
    %c0_40 = arith.constant 0 : index
    %c0_41 = arith.constant 0 : index
    %73 = vector.load %arg5[%c0_40, %c0_41] : memref<1x160xf32, #tpu.memory_space<vmem>>, vector<1x160xf32>
    %74 = vector.broadcast %73 : vector<1x160xf32> to vector<64x160xf32>
    %75 = arith.addf %72, %74 : vector<64x160xf32>
    %76 = vector.shape_cast %75 : vector<64x160xf32> to vector<4x2x8x160xf32>
    %77 = vector.extract_strided_slice %76 {offsets = [0, 0, 0, 0], sizes = [4, 1, 8, 160], strides = [1, 1, 1, 1]} : vector<4x2x8x160xf32> to vector<4x1x8x160xf32>
    %78 = vector.shape_cast %77 : vector<4x1x8x160xf32> to vector<4x8x160xf32>
    %79 = vector.extract_strided_slice %76 {offsets = [0, 1, 0, 0], sizes = [4, 1, 8, 160], strides = [1, 1, 1, 1]} : vector<4x2x8x160xf32> to vector<4x1x8x160xf32>
    %80 = vector.shape_cast %79 : vector<4x1x8x160xf32> to vector<4x8x160xf32>
    %81 = arith.maximumf %78, %80 : vector<4x8x160xf32>
    %82 = vector.extract_strided_slice %81 {offsets = [0, 0, 0], sizes = [4, 8, 80], strides = [1, 1, 1]} : vector<4x8x160xf32> to vector<4x8x80xf32>
    %83 = vector.extract_strided_slice %81 {offsets = [0, 0, 80], sizes = [4, 8, 80], strides = [1, 1, 1]} : vector<4x8x160xf32> to vector<4x8x80xf32>
    %84 = arith.maximumf %82, %83 : vector<4x8x80xf32>
    %cst_42 = arith.constant 0.000000e+00 : f32
    %85 = vector.broadcast %cst_42 : f32 to vector<4x8x80xf32>
    %86 = arith.maximumf %84, %85 : vector<4x8x80xf32>
    %87 = vector.extract_strided_slice %86 {offsets = [0, 0, 0], sizes = [1, 8, 80], strides = [1, 1, 1]} : vector<4x8x80xf32> to vector<1x8x80xf32>
    %88 = vector.shape_cast %87 : vector<1x8x80xf32> to vector<8x80xf32>
    %c0_43 = arith.constant 0 : index
    %c0_44 = arith.constant 0 : index
    %c0_45 = arith.constant 0 : index
    %89 = vector.load %arg6[%c0_43, %c0_44, %c0_45] : memref<4x80x50xf32, #tpu.memory_space<vmem>>, vector<1x80x50xf32>
    %90 = vector.shape_cast %89 : vector<1x80x50xf32> to vector<80x50xf32>
    %cst_46 = arith.constant dense<0.000000e+00> : vector<8x50xf32>
    %91 = tpu.matmul %88, %90, %cst_46 {dimension_numbers = #tpu.dot_dimension_numbers<[1], [0], [0], [1], [0, 0, 1, 1], [], []>} : vector<8x80xf32>, vector<80x50xf32>, vector<8x50xf32> -> vector<8x50xf32>
    %92 = vector.extract_strided_slice %86 {offsets = [1, 0, 0], sizes = [1, 8, 80], strides = [1, 1, 1]} : vector<4x8x80xf32> to vector<1x8x80xf32>
    %93 = vector.shape_cast %92 : vector<1x8x80xf32> to vector<8x80xf32>
    %c1_47 = arith.constant 1 : index
    %c0_48 = arith.constant 0 : index
    %c0_49 = arith.constant 0 : index
    %94 = vector.load %arg6[%c1_47, %c0_48, %c0_49] : memref<4x80x50xf32, #tpu.memory_space<vmem>>, vector<1x80x50xf32>
    %95 = vector.shape_cast %94 : vector<1x80x50xf32> to vector<80x50xf32>
    %cst_50 = arith.constant dense<0.000000e+00> : vector<8x50xf32>
    %96 = tpu.matmul %93, %95, %cst_50 {dimension_numbers = #tpu.dot_dimension_numbers<[1], [0], [0], [1], [0, 0, 1, 1], [], []>} : vector<8x80xf32>, vector<80x50xf32>, vector<8x50xf32> -> vector<8x50xf32>
    %97 = arith.addf %91, %96 : vector<8x50xf32>
    %98 = vector.extract_strided_slice %86 {offsets = [2, 0, 0], sizes = [1, 8, 80], strides = [1, 1, 1]} : vector<4x8x80xf32> to vector<1x8x80xf32>
    %99 = vector.shape_cast %98 : vector<1x8x80xf32> to vector<8x80xf32>
    %c2_51 = arith.constant 2 : index
    %c0_52 = arith.constant 0 : index
    %c0_53 = arith.constant 0 : index
    %100 = vector.load %arg6[%c2_51, %c0_52, %c0_53] : memref<4x80x50xf32, #tpu.memory_space<vmem>>, vector<1x80x50xf32>
    %101 = vector.shape_cast %100 : vector<1x80x50xf32> to vector<80x50xf32>
    %cst_54 = arith.constant dense<0.000000e+00> : vector<8x50xf32>
    %102 = tpu.matmul %99, %101, %cst_54 {dimension_numbers = #tpu.dot_dimension_numbers<[1], [0], [0], [1], [0, 0, 1, 1], [], []>} : vector<8x80xf32>, vector<80x50xf32>, vector<8x50xf32> -> vector<8x50xf32>
    %103 = arith.addf %97, %102 : vector<8x50xf32>
    %104 = vector.extract_strided_slice %86 {offsets = [3, 0, 0], sizes = [1, 8, 80], strides = [1, 1, 1]} : vector<4x8x80xf32> to vector<1x8x80xf32>
    %105 = vector.shape_cast %104 : vector<1x8x80xf32> to vector<8x80xf32>
    %c3_55 = arith.constant 3 : index
    %c0_56 = arith.constant 0 : index
    %c0_57 = arith.constant 0 : index
    %106 = vector.load %arg6[%c3_55, %c0_56, %c0_57] : memref<4x80x50xf32, #tpu.memory_space<vmem>>, vector<1x80x50xf32>
    %107 = vector.shape_cast %106 : vector<1x80x50xf32> to vector<80x50xf32>
    %cst_58 = arith.constant dense<0.000000e+00> : vector<8x50xf32>
    %108 = tpu.matmul %105, %107, %cst_58 {dimension_numbers = #tpu.dot_dimension_numbers<[1], [0], [0], [1], [0, 0, 1, 1], [], []>} : vector<8x80xf32>, vector<80x50xf32>, vector<8x50xf32> -> vector<8x50xf32>
    %109 = arith.addf %103, %108 : vector<8x50xf32>
    %c0_59 = arith.constant 0 : index
    %c0_60 = arith.constant 0 : index
    %110 = vector.load %arg7[%c0_59, %c0_60] : memref<1x50xf32, #tpu.memory_space<vmem>>, vector<1x50xf32>
    %111 = vector.broadcast %110 : vector<1x50xf32> to vector<8x50xf32>
    %112 = arith.addf %109, %111 : vector<8x50xf32>
    %cst_61 = arith.constant 0.000000e+00 : f32
    %113 = vector.broadcast %cst_61 : f32 to vector<8x50xf32>
    %114 = arith.maximumf %112, %113 : vector<8x50xf32>
    %c0_62 = arith.constant 0 : index
    %c0_63 = arith.constant 0 : index
    %115 = vector.load %arg8[%c0_62, %c0_63] : memref<50x10xf32, #tpu.memory_space<vmem>>, vector<50x10xf32>
    %cst_64 = arith.constant dense<0.000000e+00> : vector<8x10xf32>
    %116 = tpu.matmul %114, %115, %cst_64 {dimension_numbers = #tpu.dot_dimension_numbers<[1], [0], [0], [1], [0, 0, 1, 1], [], []>} : vector<8x50xf32>, vector<50x10xf32>, vector<8x10xf32> -> vector<8x10xf32>
    %c0_65 = arith.constant 0 : index
    %c0_66 = arith.constant 0 : index
    %117 = vector.load %arg9[%c0_65, %c0_66] : memref<1x10xf32, #tpu.memory_space<vmem>>, vector<1x10xf32>
    %118 = vector.broadcast %117 : vector<1x10xf32> to vector<8x10xf32>
    %119 = arith.addf %116, %118 : vector<8x10xf32>
    %cst_67 = arith.constant dense<0xFF800000> : vector<8xf32>
    %120 = vector.multi_reduction <maximumf>, %119, %cst_67 [1] : vector<8x10xf32> to vector<8xf32>
    %121 = vector.shape_cast %120 : vector<8xf32> to vector<8x1xf32>
    %122 = vector.broadcast %121 : vector<8x1xf32> to vector<8x10xf32>
    %123 = arith.subf %119, %122 : vector<8x10xf32>
    %124 = math.exp %123 : vector<8x10xf32>
    %cst_68 = arith.constant dense<0.000000e+00> : vector<8xf32>
    %125 = vector.multi_reduction <add>, %124, %cst_68 [1] : vector<8x10xf32> to vector<8xf32>
    %126 = vector.shape_cast %125 : vector<8xf32> to vector<8x1xf32>
    %127 = vector.broadcast %121 : vector<8x1xf32> to vector<8x10xf32>
    %128 = arith.subf %119, %127 : vector<8x10xf32>
    %129 = math.log %126 : vector<8x1xf32>
    %130 = vector.broadcast %129 : vector<8x1xf32> to vector<8x10xf32>
    %131 = arith.subf %128, %130 : vector<8x10xf32>
    %c0_69 = arith.constant 0 : index
    %c0_70 = arith.constant 0 : index
    %132 = vector.load %arg10[%c0_69, %c0_70] : memref<8x10xf32, #tpu.memory_space<vmem>>, vector<8x10xf32>
    tpu.vector_store %arg10[%c0_69, %c0_70], %131 {strides = array<i32>} : memref<8x10xf32, #tpu.memory_space<vmem>>, vector<8x10xf32>,
    return
  }
  func.func @transform_0(%arg0: i32) -> (i32, i32, i32) {
    %c0_i32 = arith.constant 0 : i32
    %c0_i32_0 = arith.constant 0 : i32
    %c0_i32_1 = arith.constant 0 : i32
    return %c0_i32, %arg0, %c0_i32_0 : i32, i32, i32
  }
  func.func @transform_1(%arg0: i32) -> (i32, i32, i32) {
    %c0_i32 = arith.constant 0 : i32
    %c0_i32_0 = arith.constant 0 : i32
    %c0_i32_1 = arith.constant 0 : i32
    %c0_i32_2 = arith.constant 0 : i32
    return %c0_i32, %c0_i32_0, %c0_i32_1 : i32, i32, i32
  }
  func.func @transform_2(%arg0: i32) -> (i32, i32) {
    %c0_i32 = arith.constant 0 : i32
    %c0_i32_0 = arith.constant 0 : i32
    %c0_i32_1 = arith.constant 0 : i32
    return %c0_i32, %c0_i32_0 : i32, i32
  }
  func.func @transform_3(%arg0: i32) -> (i32, i32, i32) {
    %c0_i32 = arith.constant 0 : i32
    %c0_i32_0 = arith.constant 0 : i32
    %c0_i32_1 = arith.constant 0 : i32
    %c0_i32_2 = arith.constant 0 : i32
    return %c0_i32, %c0_i32_0, %c0_i32_1 : i32, i32, i32
  }
  func.func @transform_4(%arg0: i32) -> (i32, i32) {
    %c0_i32 = arith.constant 0 : i32
    %c0_i32_0 = arith.constant 0 : i32
    %c0_i32_1 = arith.constant 0 : i32
    return %c0_i32, %c0_i32_0 : i32, i32
  }
  func.func @transform_5(%arg0: i32) -> (i32, i32, i32) {
    %c0_i32 = arith.constant 0 : i32
    %c0_i32_0 = arith.constant 0 : i32
    %c0_i32_1 = arith.constant 0 : i32
    %c0_i32_2 = arith.constant 0 : i32
    return %c0_i32, %c0_i32_0, %c0_i32_1 : i32, i32, i32
  }
  func.func @transform_6(%arg0: i32) -> (i32, i32) {
    %c0_i32 = arith.constant 0 : i32
    %c0_i32_0 = arith.constant 0 : i32
    %c0_i32_1 = arith.constant 0 : i32
    return %c0_i32, %c0_i32_0 : i32, i32
  }
  func.func @transform_7(%arg0: i32) -> (i32, i32) {
    %c0_i32 = arith.constant 0 : i32
    %c0_i32_0 = arith.constant 0 : i32
    %c0_i32_1 = arith.constant 0 : i32
    return %c0_i32, %c0_i32_0 : i32, i32
  }
  func.func @transform_8(%arg0: i32) -> (i32, i32) {
    %c0_i32 = arith.constant 0 : i32
    %c0_i32_0 = arith.constant 0 : i32
    %c0_i32_1 = arith.constant 0 : i32
    return %c0_i32, %c0_i32_0 : i32, i32
  }
  func.func @transform_9(%arg0: i32) -> (i32, i32) {
    %c0_i32 = arith.constant 0 : i32
    %c0_i32_0 = arith.constant 0 : i32
    return %arg0, %c0_i32 : i32, i32
  }
}

</mosaic_0001>

<llo_original>
// kernel: tpu_custom_call.1
$region0: #{tpu_custom_call.1}
  #allocation0 [shape = 'u32[]', space=smem, size = 0x4, offset = 0x4, fixed_abs, tag = 'smem constant byte address 0x4 - core index']
  #allocation1 [shape = 'u32[144,128]{1,0:T(1,128)}', space=vmem, size = 0x12000, scoped, tag = 'internal scratch']
  %s0 = inlined_call_operand.vmem [shape: f32[28,8,28], index: 0, kind: input, shape index: {}]
  %s1 = inlined_call_operand.vmem [shape: f32[5,28,240], index: 1, kind: input, shape index: {}]
  %s2 = inlined_call_operand.vmem [shape: f32[1,240], index: 2, kind: input, shape index: {}]
  %s3 = inlined_call_operand.vmem [shape: f32[5,120,160], index: 3, kind: input, shape index: {}]
  %s4 = inlined_call_operand.vmem [shape: f32[1,160], index: 4, kind: input, shape index: {}]
  %s5 = inlined_call_operand.vmem [shape: f32[4,80,50], index: 5, kind: input, shape index: {}]
  %s6 = inlined_call_operand.vmem [shape: f32[1,50], index: 6, kind: input, shape index: {}]
  %s7 = inlined_call_operand.vmem [shape: f32[50,10], index: 7, kind: input, shape index: {}]
  %s8 = inlined_call_operand.vmem [shape: f32[1,10], index: 8, kind: input, shape index: {}]
  %s9 = inlined_call_operand.hbm [shape: f32[8,10], index: 9, kind: output, shape index: {}]
  %s10 = sld [smem:[#allocation0]]
  $region46: #{tpu_custom_call.1} parent=0
    _
  %s12 = ssub.s32 1, %s10
  %s13 = scalar_select 0, %s12, %s10
  $region1: #{tpu_custom_call.1} parent=0
    #allocation2 [shape = 'u8[4096]{0}', space=vmem, size = 0x1000, scoped, tag = 'output window, operand 0, single buffered']
    #allocation3 [shape = 's32[1]{0}', space=sflag, size = 0x4, scoped, tag = 'scoped memory for tpu_custom_call.1']
    %14 = vsyncpa [#allocation3], 0
    // Predicated region
    $region2: #{tpu_custom_call.1} parent=1 // pred_check
      _
    $region3: #{tpu_custom_call.1} parent=1 // pred_check_branch
      %16 = sbr.rel (0) target = $region5
    $region4: #{tpu_custom_call.1} parent=1 // pred_region
      _
    $region5: #{tpu_custom_call.1} parent=1 // pred_fallthru
      _
    // Predicated region
    $region6: #{tpu_custom_call.1} parent=1 // pred_check
      _
    $region7: #{tpu_custom_call.1} parent=1 // pred_check_branch
      %18 = sbr.rel (0) target = $region9
    $region8: #{tpu_custom_call.1} parent=1 // pred_region
      _
    $region9: #{tpu_custom_call.1} parent=1 // pred_fallthru
      _
    // Predicated region
    $region10: #{tpu_custom_call.1} parent=1 // pred_check
      _
    $region11: #{tpu_custom_call.1} parent=1 // pred_check_branch
      %20 = sbr.rel (0) target = $region13
    $region12: #{tpu_custom_call.1} parent=1 // pred_region
      _
    $region13: #{tpu_custom_call.1} parent=1 // pred_fallthru
      _
    // Predicated region
    $region14: #{tpu_custom_call.1} parent=1 // pred_check
      _
    $region15: #{tpu_custom_call.1} parent=1 // pred_check_branch
      %22 = sbr.rel (0) target = $region17
    $region16: #{tpu_custom_call.1} parent=1 // pred_region
      _
    $region17: #{tpu_custom_call.1} parent=1 // pred_fallthru
      _
    // Predicated region
    $region18: #{tpu_custom_call.1} parent=1 // pred_check
      _
    $region19: #{tpu_custom_call.1} parent=1 // pred_check_branch
      %24 = sbr.rel (0) target = $region21
    $region20: #{tpu_custom_call.1} parent=1 // pred_region
      _
    $region21: #{tpu_custom_call.1} parent=1 // pred_fallthru
      _
    // Predicated region
    $region22: #{tpu_custom_call.1} parent=1 // pred_check
      _
    $region23: #{tpu_custom_call.1} parent=1 // pred_check_branch
      %26 = sbr.rel (0) target = $region25
    $region24: #{tpu_custom_call.1} parent=1 // pred_region
      _
    $region25: #{tpu_custom_call.1} parent=1 // pred_fallthru
      _
    // Predicated region
    $region26: #{tpu_custom_call.1} parent=1 // pred_check
      _
    $region27: #{tpu_custom_call.1} parent=1 // pred_check_branch
      %28 = sbr.rel (0) target = $region29
    $region28: #{tpu_custom_call.1} parent=1 // pred_region
      _
    $region29: #{tpu_custom_call.1} parent=1 // pred_fallthru
      _
    // Predicated region
    $region30: #{tpu_custom_call.1} parent=1 // pred_check
      _
    $region31: #{tpu_custom_call.1} parent=1 // pred_check_branch
      %30 = sbr.rel (0) target = $region33
    $region32: #{tpu_custom_call.1} parent=1 // pred_region
      _
    $region33: #{tpu_custom_call.1} parent=1 // pred_fallthru
      _
    // Predicated region
    $region34: #{tpu_custom_call.1} parent=1 // pred_check
      _
    $region35: #{tpu_custom_call.1} parent=1 // pred_check_branch
      %32 = sbr.rel (0) target = $region37
    $region36: #{tpu_custom_call.1} parent=1 // pred_region
      _
    $region37: #{tpu_custom_call.1} parent=1 // pred_fallthru
      _
    %v33 = vld [vmem:[%s0] sm:$0xff]
    %v34 = vld [vmem:[%s0 + $0x8] sm:$0xff]
    %v35 = vld [vmem:[%s0 + $0x10] sm:$0xff]
    %v36 = vld [vmem:[%s0 + $0x18] sm:$0xff]
    %v37 = vld [vmem:[%s0 + $0x20] sm:$0xff]
    %v38 = vld [vmem:[%s0 + $0x28] sm:$0xff]
    %v39 = vld [vmem:[%s0 + $0x30] sm:$0xff]
    %v40 = vld [vmem:[%s0 + $0x38] sm:$0xff]
    %v41 = vld [vmem:[%s0 + $0x40] sm:$0xff]
    %v42 = vld [vmem:[%s0 + $0x48] sm:$0xff]
    %v43 = vld [vmem:[%s0 + $0x50] sm:$0xff]
    %v44 = vld [vmem:[%s0 + $0x58] sm:$0xff]
    %v45 = vld [vmem:[%s0 + $0x60] sm:$0xff]
    %v46 = vld [vmem:[%s0 + $0x68] sm:$0xff]
    %v47 = vld [vmem:[%s0 + $0x70] sm:$0xff]
    %v48 = vld [vmem:[%s0 + $0x78] sm:$0xff]
    %v49 = vld [vmem:[%s0 + $0x80] sm:$0xff]
    %v50 = vld [vmem:[%s0 + $0x88] sm:$0xff]
    %v51 = vld [vmem:[%s0 + $0x90] sm:$0xff]
    %v52 = vld [vmem:[%s0 + $0x98] sm:$0xff]
    %v53 = vld [vmem:[%s0 + $0xa0] sm:$0xff]
    %v54 = vld [vmem:[%s0 + $0xa8] sm:$0xff]
    %v55 = vld [vmem:[%s0 + $0xb0] sm:$0xff]
    %v56 = vld [vmem:[%s0 + $0xb8] sm:$0xff]
    %v57 = vld [vmem:[%s0 + $0xc0] sm:$0xff]
    %v58 = vld [vmem:[%s0 + $0xc8] sm:$0xff]
    %v59 = vld [vmem:[%s0 + $0xd0] sm:$0xff]
    %v60 = vld [vmem:[%s0 + $0xd8] sm:$0xff]
    %v61 = vld [vmem:[%s1] sm:$0xff]
    %v62 = vld [vmem:[%s1 + $0x8] sm:$0xff]
    %v63 = vld [vmem:[%s1 + $0x10] sm:$0xff]
    %v64 = vld [vmem:[%s1 + $0x18] sm:$0xff]
    %v65 = vld [vmem:[%s1 + $0x20] sm:$0xff]
    %v66 = vld [vmem:[%s1 + $0x28] sm:$0xff]
    %v67 = vld [vmem:[%s1 + $0x30] sm:$0xf]
    %v68 = vld [vmem:[%s1 + $0x38] sm:$0xf]
    %s69 = scalar_lea.vmem %s1, 64
    %v70 = vld [vmem:[%s69] sm:$0xff]
    %v71 = vld [vmem:[%s69 + $0x8] sm:$0xff]
    %v72 = vld [vmem:[%s69 + $0x10] sm:$0xff]
    %v73 = vld [vmem:[%s69 + $0x18] sm:$0xff]
    %v74 = vld [vmem:[%s69 + $0x20] sm:$0xff]
    %v75 = vld [vmem:[%s69 + $0x28] sm:$0xff]
    %v76 = vld [vmem:[%s69 + $0x30] sm:$0xf]
    %v77 = vld [vmem:[%s69 + $0x38] sm:$0xf]
    %vm78 = vcmask 228352
    %v80 = vsel %vm78, %v34, 0
    %v83 = vsel %vm78, %v35, 0
    %v86 = vsel %vm78, %v36, 0
    %v89 = vsel %vm78, %v37, 0
    %v92 = vsel %vm78, %v38, 0
    %v95 = vsel %vm78, %v39, 0
    %v98 = vsel %vm78, %v40, 0
    %v101 = vsel %vm78, %v41, 0
    %v104 = vsel %vm78, %v42, 0
    %v107 = vsel %vm78, %v43, 0
    %v110 = vsel %vm78, %v44, 0
    %v113 = vsel %vm78, %v45, 0
    %v116 = vsel %vm78, %v46, 0
    %v119 = vsel %vm78, %v47, 0
    %v122 = vsel %vm78, %v48, 0
    %v125 = vsel %vm78, %v49, 0
    %v128 = vsel %vm78, %v50, 0
    %v131 = vsel %vm78, %v51, 0
    %v134 = vsel %vm78, %v52, 0
    %v137 = vsel %vm78, %v53, 0
    %v140 = vsel %vm78, %v54, 0
    %v143 = vsel %vm78, %v55, 0
    %v146 = vsel %vm78, %v56, 0
    %v149 = vsel %vm78, %v57, 0
    %vm151 = vcmask 1043456
    %v153 = vsel %vm151, %v76, 0
    %v156 = vsel %vm151, %v77, 0
    %158 = vmatprep.subr.mxu0 0.0
    %159 = vmatpush1.msra.mxu0 0.0
    %160 = vmatprep.subr.mxu0 0.0
    %161 = vmatpush1.msra.mxu0 0.0
    %162 = vmatprep.subr.mxu0 0.0
    %163 = vmatpush1.msra.mxu0 0.0
    %164 = vmatprep.subr.mxu0 0.0
    %165 = vmatpush1.msra.mxu0 0.0
    %166 = vmatprep.subr.mxu0 0.0
    %167 = vmatpush1.msra.mxu0 0.0
    %168 = vmatprep.subr.mxu0 0.0
    %169 = vmatpush1.msra.mxu0 0.0
    %170 = vmatprep.subr.mxu0 0.0
    %171 = vmatpush1.msra.mxu0 0.0
    %172 = vmatprep.subr.mxu0 0.0
    %173 = vmatpush1.msra.mxu0 0.0
    %174 = vmatprep.subr.mxu0 0.0
    %175 = vmatpush1.msra.mxu0 0.0
    %176 = vmatprep.subr.mxu0 0.0
    %177 = vmatpush1.msra.mxu0 0.0
    %178 = vmatprep.subr.mxu0 0.0
    %179 = vmatpush1.msra.mxu0 0.0
    %180 = vmatprep.subr.mxu0 0.0
    %181 = vmatpush1.msra.mxu0 0.0
    %182 = vmatprep.subr.mxu0 %v156
    %183 = vmatpush1.msra.mxu0 %v153
    %184 = vmatprep.subr.mxu0 %v75
    %185 = vmatpush1.msra.mxu0 %v74
    %186 = vmatprep.subr.mxu0 %v73
    %187 = vmatpush1.msra.mxu0 %v72
    %188 = vmatprep.subr.mxu0 %v71
    %189 = vmatpush1.msra.mxu0 %v70
    %190 = vmatprep.subr.mxu0 0.0
    %191 = vmatpush2.msra.mxu0 0.0
    %192 = vmatprep.subr.mxu0 0.0
    %193 = vmatpush2.msra.mxu0 0.0
    %194 = vmatprep.subr.mxu0 0.0
    %195 = vmatpush2.msra.mxu0 0.0
    %196 = vmatprep.subr.mxu0 0.0
    %197 = vmatpush2.msra.mxu0 0.0
    %198 = vmatprep.subr.mxu0 0.0
    %199 = vmatpush2.msra.mxu0 0.0
    %200 = vmatprep.subr.mxu0 0.0
    %201 = vmatpush2.msra.mxu0 0.0
    %202 = vmatprep.subr.mxu0 0.0
    %203 = vmatpush2.msra.mxu0 0.0
    %204 = vmatprep.subr.mxu0 0.0
    %205 = vmatpush2.msra.mxu0 0.0
    %206 = vmatprep.subr.mxu0 0.0
    %207 = vmatpush2.msra.mxu0 0.0
    %208 = vmatprep.subr.mxu0 0.0
    %209 = vmatpush2.msra.mxu0 0.0
    %210 = vmatprep.subr.mxu0 0.0
    %211 = vmatpush2.msra.mxu0 0.0
    %212 = vmatprep.subr.mxu0 0.0
    %213 = vmatpush2.msra.mxu0 0.0
    %214 = vmatprep.subr.mxu0 0.0
    %215 = vmatpush2.msra.mxu0 0.0
    %216 = vmatprep.subr.mxu0 0.0
    %217 = vmatpush2.msra.mxu0 0.0
    %218 = vmatprep.subr.mxu0 0.0
    %219 = vmatpush2.msra.mxu0 0.0
    %220 = vmatprep.subr.mxu0 0.0
    %221 = vmatpush2.msra.mxu0 0.0
    %222 = vmatprep.mubr.f32.mxu0 0.0
    %223 = vmatmul.mubr.f32.gmra.mxu0 %v80
    %v224 = vpop.f32.mrf.mxu0
    %v225 = vadd.f32 0.0, %v224
    %v226 = vpop.f32.mrf.mxu0
    %v227 = vadd.f32 0.0, %v226
    %228 = vmatprep.mubr.f32.mxu0 0.0
    %229 = vmatmul.mubr.f32.gmra.mxu0 %v83
    %v230 = vpop.f32.mrf.mxu0
    %v231 = vadd.f32 0.0, %v230
    %v232 = vpop.f32.mrf.mxu0
    %v233 = vadd.f32 0.0, %v232
    %234 = vmatprep.mubr.f32.mxu0 0.0
    %235 = vmatmul.mubr.f32.gmra.mxu0 %v86
    %v236 = vpop.f32.mrf.mxu0
    %v237 = vadd.f32 0.0, %v236
    %v238 = vpop.f32.mrf.mxu0
    %v239 = vadd.f32 0.0, %v238
    %240 = vmatprep.mubr.f32.mxu0 0.0
    %241 = vmatmul.mubr.f32.gmra.mxu0 %v89
    %v242 = vpop.f32.mrf.mxu0
    %v243 = vadd.f32 0.0, %v242
    %v244 = vpop.f32.mrf.mxu0
    %v245 = vadd.f32 0.0, %v244
    %246 = vmatprep.mubr.f32.mxu0 0.0
    %247 = vmatmul.mubr.f32.gmra.mxu0 %v92
    %v248 = vpop.f32.mrf.mxu0
    %v249 = vadd.f32 0.0, %v248
    %v250 = vpop.f32.mrf.mxu0
    %v251 = vadd.f32 0.0, %v250
    %252 = vmatprep.mubr.f32.mxu0 0.0
    %253 = vmatmul.mubr.f32.gmra.mxu0 %v95
    %v254 = vpop.f32.mrf.mxu0
    %v255 = vadd.f32 0.0, %v254
    %v256 = vpop.f32.mrf.mxu0
    %v257 = vadd.f32 0.0, %v256
    %258 = vmatprep.mubr.f32.mxu0 0.0
    %259 = vmatmul.mubr.f32.gmra.mxu0 %v98
    %v260 = vpop.f32.mrf.mxu0
    %v261 = vadd.f32 0.0, %v260
    %v262 = vpop.f32.mrf.mxu0
    %v263 = vadd.f32 0.0, %v262
    %264 = vmatprep.mubr.f32.mxu0 0.0
    %265 = vmatmul.mubr.f32.gmra.mxu0 %v101
    %v266 = vpop.f32.mrf.mxu0
    %v267 = vadd.f32 0.0, %v266
    %v268 = vpop.f32.mrf.mxu0
    %v269 = vadd.f32 0.0, %v268
    %270 = vmatprep.mubr.f32.mxu0 0.0
    %271 = vmatmul.mubr.f32.gmra.mxu0 %v104
    %v272 = vpop.f32.mrf.mxu0
    %v273 = vadd.f32 0.0, %v272
    %v274 = vpop.f32.mrf.mxu0
    %v275 = vadd.f32 0.0, %v274
    %276 = vmatprep.mubr.f32.mxu0 0.0
    %277 = vmatmul.mubr.f32.gmra.mxu0 %v107
    %v278 = vpop.f32.mrf.mxu0
    %v279 = vadd.f32 0.0, %v278
    %v280 = vpop.f32.mrf.mxu0
    %v281 = vadd.f32 0.0, %v280
    %282 = vmatprep.mubr.f32.mxu0 0.0
    %283 = vmatmul.mubr.f32.gmra.mxu0 %v110
    %v284 = vpop.f32.mrf.mxu0
    %v285 = vadd.f32 0.0, %v284
    %v286 = vpop.f32.mrf.mxu0
    %v287 = vadd.f32 0.0, %v286
    %288 = vmatprep.mubr.f32.mxu0 0.0
    %289 = vmatmul.mubr.f32.gmra.mxu0 %v113
    %v290 = vpop.f32.mrf.mxu0
    %v291 = vadd.f32 0.0, %v290
    %v292 = vpop.f32.mrf.mxu0
    %v293 = vadd.f32 0.0, %v292
    %294 = vmatprep.mubr.f32.mxu0 0.0
    %295 = vmatmul.mubr.f32.gmra.mxu0 %v116
    %v296 = vpop.f32.mrf.mxu0
    %v297 = vadd.f32 0.0, %v296
    %v298 = vpop.f32.mrf.mxu0
    %v299 = vadd.f32 0.0, %v298
    %300 = vmatprep.mubr.f32.mxu0 0.0
    %301 = vmatmul.mubr.f32.gmra.mxu0 %v119
    %v302 = vpop.f32.mrf.mxu0
    %v303 = vadd.f32 0.0, %v302
    %v304 = vpop.f32.mrf.mxu0
    %v305 = vadd.f32 0.0, %v304
    %306 = vmatprep.mubr.f32.mxu0 0.0
    %307 = vmatmul.mubr.f32.gmra.mxu0 %v122
    %v308 = vpop.f32.mrf.mxu0
    %v309 = vadd.f32 0.0, %v308
    %v310 = vpop.f32.mrf.mxu0
    %v311 = vadd.f32 0.0, %v310
    %312 = vmatprep.mubr.f32.mxu0 0.0
    %313 = vmatmul.mubr.f32.gmra.mxu0 %v125
    %v314 = vpop.f32.mrf.mxu0
    %v315 = vadd.f32 0.0, %v314
    %v316 = vpop.f32.mrf.mxu0
    %v317 = vadd.f32 0.0, %v316
    %318 = vmatprep.mubr.f32.mxu0 0.0
    %319 = vmatmul.mubr.f32.gmra.mxu0 %v128
    %v320 = vpop.f32.mrf.mxu0
    %v321 = vadd.f32 0.0, %v320
    %v322 = vpop.f32.mrf.mxu0
    %v323 = vadd.f32 0.0, %v322
    %324 = vmatprep.mubr.f32.mxu0 0.0
    %325 = vmatmul.mubr.f32.gmra.mxu0 %v131
    %v326 = vpop.f32.mrf.mxu0
    %v327 = vadd.f32 0.0, %v326
    %v328 = vpop.f32.mrf.mxu0
    %v329 = vadd.f32 0.0, %v328
    %330 = vmatprep.mubr.f32.mxu0 0.0
    %331 = vmatmul.mubr.f32.gmra.mxu0 %v134
    %v332 = vpop.f32.mrf.mxu0
    %v333 = vadd.f32 0.0, %v332
    %v334 = vpop.f32.mrf.mxu0
    %v335 = vadd.f32 0.0, %v334
    %336 = vmatprep.mubr.f32.mxu0 0.0
    %337 = vmatmul.mubr.f32.gmra.mxu0 %v137
    %v338 = vpop.f32.mrf.mxu0
    %v339 = vadd.f32 0.0, %v338
    %v340 = vpop.f32.mrf.mxu0
    %v341 = vadd.f32 0.0, %v340
    %342 = vmatprep.mubr.f32.mxu0 0.0
    %343 = vmatmul.mubr.f32.gmra.mxu0 %v140
    %v344 = vpop.f32.mrf.mxu0
    %v345 = vadd.f32 0.0, %v344
    %v346 = vpop.f32.mrf.mxu0
    %v347 = vadd.f32 0.0, %v346
    %348 = vmatprep.mubr.f32.mxu0 0.0
    %349 = vmatmul.mubr.f32.gmra.mxu0 %v143
    %v350 = vpop.f32.mrf.mxu0
    %v351 = vadd.f32 0.0, %v350
    %v352 = vpop.f32.mrf.mxu0
    %v353 = vadd.f32 0.0, %v352
    %354 = vmatprep.mubr.f32.mxu0 0.0
    %355 = vmatmul.mubr.f32.gmra.mxu0 %v146
    %v356 = vpop.f32.mrf.mxu0
    %v357 = vadd.f32 0.0, %v356
    %v358 = vpop.f32.mrf.mxu0
    %v359 = vadd.f32 0.0, %v358
    %360 = vmatprep.mubr.f32.mxu0 0.0
    %361 = vmatmul.mubr.f32.gmra.mxu0 %v149
    %v362 = vpop.f32.mrf.mxu0
    %v363 = vadd.f32 0.0, %v362
    %v364 = vpop.f32.mrf.mxu0
    %v365 = vadd.f32 0.0, %v364
    %366 = vdwg.mxu0
    %v368 = vsel %vm78, %v33, 0
    %v371 = vsel %vm151, %v67, 0
    %v374 = vsel %vm151, %v68, 0
    %376 = vmatprep.subr.mxu0 0.0
    %377 = vmatpush1.msra.mxu0 0.0
    %378 = vmatprep.subr.mxu0 0.0
    %379 = vmatpush1.msra.mxu0 0.0
    %380 = vmatprep.subr.mxu0 0.0
    %381 = vmatpush1.msra.mxu0 0.0
    %382 = vmatprep.subr.mxu0 0.0
    %383 = vmatpush1.msra.mxu0 0.0
    %384 = vmatprep.subr.mxu0 0.0
    %385 = vmatpush1.msra.mxu0 0.0
    %386 = vmatprep.subr.mxu0 0.0
    %387 = vmatpush1.msra.mxu0 0.0
    %388 = vmatprep.subr.mxu0 0.0
    %389 = vmatpush1.msra.mxu0 0.0
    %390 = vmatprep.subr.mxu0 0.0
    %391 = vmatpush1.msra.mxu0 0.0
    %392 = vmatprep.subr.mxu0 0.0
    %393 = vmatpush1.msra.mxu0 0.0
    %394 = vmatprep.subr.mxu0 0.0
    %395 = vmatpush1.msra.mxu0 0.0
    %396 = vmatprep.subr.mxu0 0.0
    %397 = vmatpush1.msra.mxu0 0.0
    %398 = vmatprep.subr.mxu0 0.0
    %399 = vmatpush1.msra.mxu0 0.0
    %400 = vmatprep.subr.mxu0 %v374
    %401 = vmatpush1.msra.mxu0 %v371
    %402 = vmatprep.subr.mxu0 %v66
    %403 = vmatpush1.msra.mxu0 %v65
    %404 = vmatprep.subr.mxu0 %v64
    %405 = vmatpush1.msra.mxu0 %v63
    %406 = vmatprep.subr.mxu0 %v62
    %407 = vmatpush1.msra.mxu0 %v61
    %408 = vmatprep.subr.mxu0 0.0
    %409 = vmatpush2.msra.mxu0 0.0
    %410 = vmatprep.subr.mxu0 0.0
    %411 = vmatpush2.msra.mxu0 0.0
    %412 = vmatprep.subr.mxu0 0.0
    %413 = vmatpush2.msra.mxu0 0.0
    %414 = vmatprep.subr.mxu0 0.0
    %415 = vmatpush2.msra.mxu0 0.0
    %416 = vmatprep.subr.mxu0 0.0
    %417 = vmatpush2.msra.mxu0 0.0
    %418 = vmatprep.subr.mxu0 0.0
    %419 = vmatpush2.msra.mxu0 0.0
    %420 = vmatprep.subr.mxu0 0.0
    %421 = vmatpush2.msra.mxu0 0.0
    %422 = vmatprep.subr.mxu0 0.0
    %423 = vmatpush2.msra.mxu0 0.0
    %424 = vmatprep.subr.mxu0 0.0
    %425 = vmatpush2.msra.mxu0 0.0
    %426 = vmatprep.subr.mxu0 0.0
    %427 = vmatpush2.msra.mxu0 0.0
    %428 = vmatprep.subr.mxu0 0.0
    %429 = vmatpush2.msra.mxu0 0.0
    %430 = vmatprep.subr.mxu0 0.0
    %431 = vmatpush2.msra.mxu0 0.0
    %432 = vmatprep.subr.mxu0 0.0
    %433 = vmatpush2.msra.mxu0 0.0
    %434 = vmatprep.subr.mxu0 0.0
    %435 = vmatpush2.msra.mxu0 0.0
    %436 = vmatprep.subr.mxu0 0.0
    %437 = vmatpush2.msra.mxu0 0.0
    %438 = vmatprep.subr.mxu0 0.0
    %439 = vmatpush2.msra.mxu0 0.0
    %440 = vmatprep.mubr.f32.mxu0 0.0
    %441 = vmatmul.mubr.f32.gmra.mxu0 %v368
    %v442 = vpop.f32.mrf.mxu0
    %v443 = vadd.f32 %v225, %v442
    %v444 = vpop.f32.mrf.mxu0
    %v445 = vadd.f32 %v227, %v444
    %446 = vmatprep.mubr.f32.mxu0 0.0
    %447 = vmatmul.mubr.f32.gmra.mxu0 %v80
    %v448 = vpop.f32.mrf.mxu0
    %v449 = vadd.f32 %v231, %v448
    %v450 = vpop.f32.mrf.mxu0
    %v451 = vadd.f32 %v233, %v450
    %452 = vmatprep.mubr.f32.mxu0 0.0
    %453 = vmatmul.mubr.f32.gmra.mxu0 %v83
    %v454 = vpop.f32.mrf.mxu0
    %v455 = vadd.f32 %v237, %v454
    %v456 = vpop.f32.mrf.mxu0
    %v457 = vadd.f32 %v239, %v456
    %458 = vmatprep.mubr.f32.mxu0 0.0
    %459 = vmatmul.mubr.f32.gmra.mxu0 %v86
    %v460 = vpop.f32.mrf.mxu0
    %v461 = vadd.f32 %v243, %v460
    %v462 = vpop.f32.mrf.mxu0
    %v463 = vadd.f32 %v245, %v462
    %464 = vmatprep.mubr.f32.mxu0 0.0
    %465 = vmatmul.mubr.f32.gmra.mxu0 %v89
    %v466 = vpop.f32.mrf.mxu0
    %v467 = vadd.f32 %v249, %v466
    %v468 = vpop.f32.mrf.mxu0
    %v469 = vadd.f32 %v251, %v468
    %470 = vmatprep.mubr.f32.mxu0 0.0
    %471 = vmatmul.mubr.f32.gmra.mxu0 %v92
    %v472 = vpop.f32.mrf.mxu0
    %v473 = vadd.f32 %v255, %v472
    %v474 = vpop.f32.mrf.mxu0
    %v475 = vadd.f32 %v257, %v474
    %476 = vmatprep.mubr.f32.mxu0 0.0
    %477 = vmatmul.mubr.f32.gmra.mxu0 %v95
    %v478 = vpop.f32.mrf.mxu0
    %v479 = vadd.f32 %v261, %v478
    %v480 = vpop.f32.mrf.mxu0
    %v481 = vadd.f32 %v263, %v480
    %482 = vmatprep.mubr.f32.mxu0 0.0
    %483 = vmatmul.mubr.f32.gmra.mxu0 %v98
    %v484 = vpop.f32.mrf.mxu0
    %v485 = vadd.f32 %v267, %v484
    %v486 = vpop.f32.mrf.mxu0
    %v487 = vadd.f32 %v269, %v486
    %488 = vmatprep.mubr.f32.mxu0 0.0
    %489 = vmatmul.mubr.f32.gmra.mxu0 %v101
    %v490 = vpop.f32.mrf.mxu0
    %v491 = vadd.f32 %v273, %v490
    %v492 = vpop.f32.mrf.mxu0
    %v493 = vadd.f32 %v275, %v492
    %494 = vmatprep.mubr.f32.mxu0 0.0
    %495 = vmatmul.mubr.f32.gmra.mxu0 %v104
    %v496 = vpop.f32.mrf.mxu0
    %v497 = vadd.f32 %v279, %v496
    %v498 = vpop.f32.mrf.mxu0
    %v499 = vadd.f32 %v281, %v498
    %500 = vmatprep.mubr.f32.mxu0 0.0
    %501 = vmatmul.mubr.f32.gmra.mxu0 %v107
    %v502 = vpop.f32.mrf.mxu0
    %v503 = vadd.f32 %v285, %v502
    %v504 = vpop.f32.mrf.mxu0
    %v505 = vadd.f32 %v287, %v504
    %506 = vmatprep.mubr.f32.mxu0 0.0
    %507 = vmatmul.mubr.f32.gmra.mxu0 %v110
    %v508 = vpop.f32.mrf.mxu0
    %v509 = vadd.f32 %v291, %v508
    %v510 = vpop.f32.mrf.mxu0
    %v511 = vadd.f32 %v293, %v510
    %512 = vmatprep.mubr.f32.mxu0 0.0
    %513 = vmatmul.mubr.f32.gmra.mxu0 %v113
    %v514 = vpop.f32.mrf.mxu0
    %v515 = vadd.f32 %v297, %v514
    %v516 = vpop.f32.mrf.mxu0
    %v517 = vadd.f32 %v299, %v516
    %518 = vmatprep.mubr.f32.mxu0 0.0
    %519 = vmatmul.mubr.f32.gmra.mxu0 %v116
    %v520 = vpop.f32.mrf.mxu0
    %v521 = vadd.f32 %v303, %v520
    %v522 = vpop.f32.mrf.mxu0
    %v523 = vadd.f32 %v305, %v522
    %524 = vmatprep.mubr.f32.mxu0 0.0
    %525 = vmatmul.mubr.f32.gmra.mxu0 %v119
    %v526 = vpop.f32.mrf.mxu0
    %v527 = vadd.f32 %v309, %v526
    %v528 = vpop.f32.mrf.mxu0
    %v529 = vadd.f32 %v311, %v528
    %530 = vmatprep.mubr.f32.mxu0 0.0
    %531 = vmatmul.mubr.f32.gmra.mxu0 %v122
    %v532 = vpop.f32.mrf.mxu0
    %v533 = vadd.f32 %v315, %v532
    %v534 = vpop.f32.mrf.mxu0
    %v535 = vadd.f32 %v317, %v534
    %536 = vmatprep.mubr.f32.mxu0 0.0
    %537 = vmatmul.mubr.f32.gmra.mxu0 %v125
    %v538 = vpop.f32.mrf.mxu0
    %v539 = vadd.f32 %v321, %v538
    %v540 = vpop.f32.mrf.mxu0
    %v541 = vadd.f32 %v323, %v540
    %542 = vmatprep.mubr.f32.mxu0 0.0
    %543 = vmatmul.mubr.f32.gmra.mxu0 %v128
    %v544 = vpop.f32.mrf.mxu0
    %v545 = vadd.f32 %v327, %v544
    %v546 = vpop.f32.mrf.mxu0
    %v547 = vadd.f32 %v329, %v546
    %548 = vmatprep.mubr.f32.mxu0 0.0
    %549 = vmatmul.mubr.f32.gmra.mxu0 %v131
    %v550 = vpop.f32.mrf.mxu0
    %v551 = vadd.f32 %v333, %v550
    %v552 = vpop.f32.mrf.mxu0
    %v553 = vadd.f32 %v335, %v552
    %554 = vmatprep.mubr.f32.mxu0 0.0
    %555 = vmatmul.mubr.f32.gmra.mxu0 %v134
    %v556 = vpop.f32.mrf.mxu0
    %v557 = vadd.f32 %v339, %v556
    %v558 = vpop.f32.mrf.mxu0
    %v559 = vadd.f32 %v341, %v558
    %560 = vmatprep.mubr.f32.mxu0 0.0
    %561 = vmatmul.mubr.f32.gmra.mxu0 %v137
    %v562 = vpop.f32.mrf.mxu0
    %v563 = vadd.f32 %v345, %v562
    %v564 = vpop.f32.mrf.mxu0
    %v565 = vadd.f32 %v347, %v564
    %566 = vmatprep.mubr.f32.mxu0 0.0
    %567 = vmatmul.mubr.f32.gmra.mxu0 %v140
    %v568 = vpop.f32.mrf.mxu0
    %v569 = vadd.f32 %v351, %v568
    %v570 = vpop.f32.mrf.mxu0
    %v571 = vadd.f32 %v353, %v570
    %572 = vmatprep.mubr.f32.mxu0 0.0
    %573 = vmatmul.mubr.f32.gmra.mxu0 %v143
    %v574 = vpop.f32.mrf.mxu0
    %v575 = vadd.f32 %v357, %v574
    %v576 = vpop.f32.mrf.mxu0
    %v577 = vadd.f32 %v359, %v576
    %578 = vmatprep.mubr.f32.mxu0 0.0
    %579 = vmatmul.mubr.f32.gmra.mxu0 %v146
    %v580 = vpop.f32.mrf.mxu0
    %v581 = vadd.f32 %v363, %v580
    %v582 = vpop.f32.mrf.mxu0
    %v583 = vadd.f32 %v365, %v582
    %584 = vdwg.mxu0
    %s585 = scalar_lea.vmem %s1, 128
    %v586 = vld [vmem:[%s585] sm:$0xff]
    %v587 = vld [vmem:[%s585 + $0x8] sm:$0xff]
    %v588 = vld [vmem:[%s585 + $0x10] sm:$0xff]
    %v589 = vld [vmem:[%s585 + $0x18] sm:$0xff]
    %v590 = vld [vmem:[%s585 + $0x20] sm:$0xff]
    %v591 = vld [vmem:[%s585 + $0x28] sm:$0xff]
    %v592 = vld [vmem:[%s585 + $0x30] sm:$0xf]
    %v593 = vld [vmem:[%s585 + $0x38] sm:$0xf]
    %v595 = vsel %vm78, %v58, 0
    %v598 = vsel %vm151, %v592, 0
    %v601 = vsel %vm151, %v593, 0
    %603 = vmatprep.subr.mxu0 0.0
    %604 = vmatpush1.msra.mxu0 0.0
    %605 = vmatprep.subr.mxu0 0.0
    %606 = vmatpush1.msra.mxu0 0.0
    %607 = vmatprep.subr.mxu0 0.0
    %608 = vmatpush1.msra.mxu0 0.0
    %609 = vmatprep.subr.mxu0 0.0
    %610 = vmatpush1.msra.mxu0 0.0
    %611 = vmatprep.subr.mxu0 0.0
    %612 = vmatpush1.msra.mxu0 0.0
    %613 = vmatprep.subr.mxu0 0.0
    %614 = vmatpush1.msra.mxu0 0.0
    %615 = vmatprep.subr.mxu0 0.0
    %616 = vmatpush1.msra.mxu0 0.0
    %617 = vmatprep.subr.mxu0 0.0
    %618 = vmatpush1.msra.mxu0 0.0
    %619 = vmatprep.subr.mxu0 0.0
    %620 = vmatpush1.msra.mxu0 0.0
    %621 = vmatprep.subr.mxu0 0.0
    %622 = vmatpush1.msra.mxu0 0.0
    %623 = vmatprep.subr.mxu0 0.0
    %624 = vmatpush1.msra.mxu0 0.0
    %625 = vmatprep.subr.mxu0 0.0
    %626 = vmatpush1.msra.mxu0 0.0
    %627 = vmatprep.subr.mxu0 %v601
    %628 = vmatpush1.msra.mxu0 %v598
    %629 = vmatprep.subr.mxu0 %v591
    %630 = vmatpush1.msra.mxu0 %v590
    %631 = vmatprep.subr.mxu0 %v589
    %632 = vmatpush1.msra.mxu0 %v588
    %633 = vmatprep.subr.mxu0 %v587
    %634 = vmatpush1.msra.mxu0 %v586
    %635 = vmatprep.subr.mxu0 0.0
    %636 = vmatpush2.msra.mxu0 0.0
    %637 = vmatprep.subr.mxu0 0.0
    %638 = vmatpush2.msra.mxu0 0.0
    %639 = vmatprep.subr.mxu0 0.0
    %640 = vmatpush2.msra.mxu0 0.0
    %641 = vmatprep.subr.mxu0 0.0
    %642 = vmatpush2.msra.mxu0 0.0
    %643 = vmatprep.subr.mxu0 0.0
    %644 = vmatpush2.msra.mxu0 0.0
    %645 = vmatprep.subr.mxu0 0.0
    %646 = vmatpush2.msra.mxu0 0.0
    %647 = vmatprep.subr.mxu0 0.0
    %648 = vmatpush2.msra.mxu0 0.0
    %649 = vmatprep.subr.mxu0 0.0
    %650 = vmatpush2.msra.mxu0 0.0
    %651 = vmatprep.subr.mxu0 0.0
    %652 = vmatpush2.msra.mxu0 0.0
    %653 = vmatprep.subr.mxu0 0.0
    %654 = vmatpush2.msra.mxu0 0.0
    %655 = vmatprep.subr.mxu0 0.0
    %656 = vmatpush2.msra.mxu0 0.0
    %657 = vmatprep.subr.mxu0 0.0
    %658 = vmatpush2.msra.mxu0 0.0
    %659 = vmatprep.subr.mxu0 0.0
    %660 = vmatpush2.msra.mxu0 0.0
    %661 = vmatprep.subr.mxu0 0.0
    %662 = vmatpush2.msra.mxu0 0.0
    %663 = vmatprep.subr.mxu0 0.0
    %664 = vmatpush2.msra.mxu0 0.0
    %665 = vmatprep.subr.mxu0 0.0
    %666 = vmatpush2.msra.mxu0 0.0
    %667 = vmatprep.mubr.f32.mxu0 0.0
    %668 = vmatmul.mubr.f32.gmra.mxu0 %v83
    %v669 = vpop.f32.mrf.mxu0
    %v670 = vadd.f32 0.0, %v669
    %v671 = vpop.f32.mrf.mxu0
    %v672 = vadd.f32 0.0, %v671
    %673 = vmatprep.mubr.f32.mxu0 0.0
    %674 = vmatmul.mubr.f32.gmra.mxu0 %v86
    %v675 = vpop.f32.mrf.mxu0
    %v676 = vadd.f32 0.0, %v675
    %v677 = vpop.f32.mrf.mxu0
    %v678 = vadd.f32 0.0, %v677
    %679 = vmatprep.mubr.f32.mxu0 0.0
    %680 = vmatmul.mubr.f32.gmra.mxu0 %v89
    %v681 = vpop.f32.mrf.mxu0
    %v682 = vadd.f32 0.0, %v681
    %v683 = vpop.f32.mrf.mxu0
    %v684 = vadd.f32 0.0, %v683
    %685 = vmatprep.mubr.f32.mxu0 0.0
    %686 = vmatmul.mubr.f32.gmra.mxu0 %v92
    %v687 = vpop.f32.mrf.mxu0
    %v688 = vadd.f32 0.0, %v687
    %v689 = vpop.f32.mrf.mxu0
    %v690 = vadd.f32 0.0, %v689
    %691 = vmatprep.mubr.f32.mxu0 0.0
    %692 = vmatmul.mubr.f32.gmra.mxu0 %v95
    %v693 = vpop.f32.mrf.mxu0
    %v694 = vadd.f32 0.0, %v693
    %v695 = vpop.f32.mrf.mxu0
    %v696 = vadd.f32 0.0, %v695
    %697 = vmatprep.mubr.f32.mxu0 0.0
    %698 = vmatmul.mubr.f32.gmra.mxu0 %v98
    %v699 = vpop.f32.mrf.mxu0
    %v700 = vadd.f32 0.0, %v699
    %v701 = vpop.f32.mrf.mxu0
    %v702 = vadd.f32 0.0, %v701
    %703 = vmatprep.mubr.f32.mxu0 0.0
    %704 = vmatmul.mubr.f32.gmra.mxu0 %v101
    %v705 = vpop.f32.mrf.mxu0
    %v706 = vadd.f32 0.0, %v705
    %v707 = vpop.f32.mrf.mxu0
    %v708 = vadd.f32 0.0, %v707
    %709 = vmatprep.mubr.f32.mxu0 0.0
    %710 = vmatmul.mubr.f32.gmra.mxu0 %v104
    %v711 = vpop.f32.mrf.mxu0
    %v712 = vadd.f32 0.0, %v711
    %v713 = vpop.f32.mrf.mxu0
    %v714 = vadd.f32 0.0, %v713
    %715 = vmatprep.mubr.f32.mxu0 0.0
    %716 = vmatmul.mubr.f32.gmra.mxu0 %v107
    %v717 = vpop.f32.mrf.mxu0
    %v718 = vadd.f32 0.0, %v717
    %v719 = vpop.f32.mrf.mxu0
    %v720 = vadd.f32 0.0, %v719
    %721 = vmatprep.mubr.f32.mxu0 0.0
    %722 = vmatmul.mubr.f32.gmra.mxu0 %v110
    %v723 = vpop.f32.mrf.mxu0
    %v724 = vadd.f32 0.0, %v723
    %v725 = vpop.f32.mrf.mxu0
    %v726 = vadd.f32 0.0, %v725
    %727 = vmatprep.mubr.f32.mxu0 0.0
    %728 = vmatmul.mubr.f32.gmra.mxu0 %v113
    %v729 = vpop.f32.mrf.mxu0
    %v730 = vadd.f32 0.0, %v729
    %v731 = vpop.f32.mrf.mxu0
    %v732 = vadd.f32 0.0, %v731
    %733 = vmatprep.mubr.f32.mxu0 0.0
    %734 = vmatmul.mubr.f32.gmra.mxu0 %v116
    %v735 = vpop.f32.mrf.mxu0
    %v736 = vadd.f32 0.0, %v735
    %v737 = vpop.f32.mrf.mxu0
    %v738 = vadd.f32 0.0, %v737
    %739 = vmatprep.mubr.f32.mxu0 0.0
    %740 = vmatmul.mubr.f32.gmra.mxu0 %v119
    %v741 = vpop.f32.mrf.mxu0
    %v742 = vadd.f32 0.0, %v741
    %v743 = vpop.f32.mrf.mxu0
    %v744 = vadd.f32 0.0, %v743
    %745 = vmatprep.mubr.f32.mxu0 0.0
    %746 = vmatmul.mubr.f32.gmra.mxu0 %v122
    %v747 = vpop.f32.mrf.mxu0
    %v748 = vadd.f32 0.0, %v747
    %v749 = vpop.f32.mrf.mxu0
    %v750 = vadd.f32 0.0, %v749
    %751 = vmatprep.mubr.f32.mxu0 0.0
    %752 = vmatmul.mubr.f32.gmra.mxu0 %v125
    %v753 = vpop.f32.mrf.mxu0
    %v754 = vadd.f32 0.0, %v753
    %v755 = vpop.f32.mrf.mxu0
    %v756 = vadd.f32 0.0, %v755
    %757 = vmatprep.mubr.f32.mxu0 0.0
    %758 = vmatmul.mubr.f32.gmra.mxu0 %v128
    %v759 = vpop.f32.mrf.mxu0
    %v760 = vadd.f32 0.0, %v759
    %v761 = vpop.f32.mrf.mxu0
    %v762 = vadd.f32 0.0, %v761
    %763 = vmatprep.mubr.f32.mxu0 0.0
    %764 = vmatmul.mubr.f32.gmra.mxu0 %v131
    %v765 = vpop.f32.mrf.mxu0
    %v766 = vadd.f32 0.0, %v765
    %v767 = vpop.f32.mrf.mxu0
    %v768 = vadd.f32 0.0, %v767
    %769 = vmatprep.mubr.f32.mxu0 0.0
    %770 = vmatmul.mubr.f32.gmra.mxu0 %v134
    %v771 = vpop.f32.mrf.mxu0
    %v772 = vadd.f32 0.0, %v771
    %v773 = vpop.f32.mrf.mxu0
    %v774 = vadd.f32 0.0, %v773
    %775 = vmatprep.mubr.f32.mxu0 0.0
    %776 = vmatmul.mubr.f32.gmra.mxu0 %v137
    %v777 = vpop.f32.mrf.mxu0
    %v778 = vadd.f32 0.0, %v777
    %v779 = vpop.f32.mrf.mxu0
    %v780 = vadd.f32 0.0, %v779
    %781 = vmatprep.mubr.f32.mxu0 0.0
    %782 = vmatmul.mubr.f32.gmra.mxu0 %v140
    %v783 = vpop.f32.mrf.mxu0
    %v784 = vadd.f32 0.0, %v783
    %v785 = vpop.f32.mrf.mxu0
    %v786 = vadd.f32 0.0, %v785
    %787 = vmatprep.mubr.f32.mxu0 0.0
    %788 = vmatmul.mubr.f32.gmra.mxu0 %v143
    %v789 = vpop.f32.mrf.mxu0
    %v790 = vadd.f32 0.0, %v789
    %v791 = vpop.f32.mrf.mxu0
    %v792 = vadd.f32 0.0, %v791
    %793 = vmatprep.mubr.f32.mxu0 0.0
    %794 = vmatmul.mubr.f32.gmra.mxu0 %v146
    %v795 = vpop.f32.mrf.mxu0
    %v796 = vadd.f32 0.0, %v795
    %v797 = vpop.f32.mrf.mxu0
    %v798 = vadd.f32 0.0, %v797
    %799 = vmatprep.mubr.f32.mxu0 0.0
    %800 = vmatmul.mubr.f32.gmra.mxu0 %v149
    %v801 = vpop.f32.mrf.mxu0
    %v802 = vadd.f32 0.0, %v801
    %v803 = vpop.f32.mrf.mxu0
    %v804 = vadd.f32 0.0, %v803
    %805 = vmatprep.mubr.f32.mxu0 0.0
    %806 = vmatmul.mubr.f32.gmra.mxu0 %v595
    %v807 = vpop.f32.mrf.mxu0
    %v808 = vadd.f32 0.0, %v807
    %v809 = vpop.f32.mrf.mxu0
    %v810 = vadd.f32 0.0, %v809
    %811 = vdwg.mxu0
    %v812 = vadd.f32 %v443, %v670
    %v813 = vadd.f32 %v445, %v672
    %v814 = vadd.f32 %v449, %v676
    %v815 = vadd.f32 %v451, %v678
    %v816 = vadd.f32 %v455, %v682
    %v817 = vadd.f32 %v457, %v684
    %v818 = vadd.f32 %v461, %v688
    %v819 = vadd.f32 %v463, %v690
    %v820 = vadd.f32 %v467, %v694
    %v821 = vadd.f32 %v469, %v696
    %v822 = vadd.f32 %v473, %v700
    %v823 = vadd.f32 %v475, %v702
    %v824 = vadd.f32 %v479, %v706
    %v825 = vadd.f32 %v481, %v708
    %v826 = vadd.f32 %v485, %v712
    %v827 = vadd.f32 %v487, %v714
    %v828 = vadd.f32 %v491, %v718
    %v829 = vadd.f32 %v493, %v720
    %v830 = vadd.f32 %v497, %v724
    %v831 = vadd.f32 %v499, %v726
    %v832 = vadd.f32 %v503, %v730
    %v833 = vadd.f32 %v505, %v732
    %v834 = vadd.f32 %v509, %v736
    %v835 = vadd.f32 %v511, %v738
    %v836 = vadd.f32 %v515, %v742
    %v837 = vadd.f32 %v517, %v744
    %v838 = vadd.f32 %v521, %v748
    %v839 = vadd.f32 %v523, %v750
    %v840 = vadd.f32 %v527, %v754
    %v841 = vadd.f32 %v529, %v756
    %v842 = vadd.f32 %v533, %v760
    %v843 = vadd.f32 %v535, %v762
    %v844 = vadd.f32 %v539, %v766
    %v845 = vadd.f32 %v541, %v768
    %v846 = vadd.f32 %v545, %v772
    %v847 = vadd.f32 %v547, %v774
    %v848 = vadd.f32 %v551, %v778
    %v849 = vadd.f32 %v553, %v780
    %v850 = vadd.f32 %v557, %v784
    %v851 = vadd.f32 %v559, %v786
    %v852 = vadd.f32 %v563, %v790
    %v853 = vadd.f32 %v565, %v792
    %v854 = vadd.f32 %v569, %v796
    %v855 = vadd.f32 %v571, %v798
    %v856 = vadd.f32 %v575, %v802
    %v857 = vadd.f32 %v577, %v804
    %v858 = vadd.f32 %v581, %v808
    %v859 = vadd.f32 %v583, %v810
    %s860 = scalar_lea.vmem %s1, 192
    %v861 = vld [vmem:[%s860] sm:$0xff]
    %v862 = vld [vmem:[%s860 + $0x8] sm:$0xff]
    %v863 = vld [vmem:[%s860 + $0x10] sm:$0xff]
    %v864 = vld [vmem:[%s860 + $0x18] sm:$0xff]
    %v865 = vld [vmem:[%s860 + $0x20] sm:$0xff]
    %v866 = vld [vmem:[%s860 + $0x28] sm:$0xff]
    %v867 = vld [vmem:[%s860 + $0x30] sm:$0xf]
    %v868 = vld [vmem:[%s860 + $0x38] sm:$0xf]
    %v870 = vsel %vm78, %v59, 0
    %v873 = vsel %vm151, %v867, 0
    %v876 = vsel %vm151, %v868, 0
    %878 = vmatprep.subr.mxu0 0.0
    %879 = vmatpush1.msra.mxu0 0.0
    %880 = vmatprep.subr.mxu0 0.0
    %881 = vmatpush1.msra.mxu0 0.0
    %882 = vmatprep.subr.mxu0 0.0
    %883 = vmatpush1.msra.mxu0 0.0
    %884 = vmatprep.subr.mxu0 0.0
    %885 = vmatpush1.msra.mxu0 0.0
    %886 = vmatprep.subr.mxu0 0.0
    %887 = vmatpush1.msra.mxu0 0.0
    %888 = vmatprep.subr.mxu0 0.0
    %889 = vmatpush1.msra.mxu0 0.0
    %890 = vmatprep.subr.mxu0 0.0
    %891 = vmatpush1.msra.mxu0 0.0
    %892 = vmatprep.subr.mxu0 0.0
    %893 = vmatpush1.msra.mxu0 0.0
    %894 = vmatprep.subr.mxu0 0.0
    %895 = vmatpush1.msra.mxu0 0.0
    %896 = vmatprep.subr.mxu0 0.0
    %897 = vmatpush1.msra.mxu0 0.0
    %898 = vmatprep.subr.mxu0 0.0
    %899 = vmatpush1.msra.mxu0 0.0
    %900 = vmatprep.subr.mxu0 0.0
    %901 = vmatpush1.msra.mxu0 0.0
    %902 = vmatprep.subr.mxu0 %v876
    %903 = vmatpush1.msra.mxu0 %v873
    %904 = vmatprep.subr.mxu0 %v866
    %905 = vmatpush1.msra.mxu0 %v865
    %906 = vmatprep.subr.mxu0 %v864
    %907 = vmatpush1.msra.mxu0 %v863
    %908 = vmatprep.subr.mxu0 %v862
    %909 = vmatpush1.msra.mxu0 %v861
    %910 = vmatprep.subr.mxu0 0.0
    %911 = vmatpush2.msra.mxu0 0.0
    %912 = vmatprep.subr.mxu0 0.0
    %913 = vmatpush2.msra.mxu0 0.0
    %914 = vmatprep.subr.mxu0 0.0
    %915 = vmatpush2.msra.mxu0 0.0
    %916 = vmatprep.subr.mxu0 0.0
    %917 = vmatpush2.msra.mxu0 0.0
    %918 = vmatprep.subr.mxu0 0.0
    %919 = vmatpush2.msra.mxu0 0.0
    %920 = vmatprep.subr.mxu0 0.0
    %921 = vmatpush2.msra.mxu0 0.0
    %922 = vmatprep.subr.mxu0 0.0
    %923 = vmatpush2.msra.mxu0 0.0
    %924 = vmatprep.subr.mxu0 0.0
    %925 = vmatpush2.msra.mxu0 0.0
    %926 = vmatprep.subr.mxu0 0.0
    %927 = vmatpush2.msra.mxu0 0.0
    %928 = vmatprep.subr.mxu0 0.0
    %929 = vmatpush2.msra.mxu0 0.0
    %930 = vmatprep.subr.mxu0 0.0
    %931 = vmatpush2.msra.mxu0 0.0
    %932 = vmatprep.subr.mxu0 0.0
    %933 = vmatpush2.msra.mxu0 0.0
    %934 = vmatprep.subr.mxu0 0.0
    %935 = vmatpush2.msra.mxu0 0.0
    %936 = vmatprep.subr.mxu0 0.0
    %937 = vmatpush2.msra.mxu0 0.0
    %938 = vmatprep.subr.mxu0 0.0
    %939 = vmatpush2.msra.mxu0 0.0
    %940 = vmatprep.subr.mxu0 0.0
    %941 = vmatpush2.msra.mxu0 0.0
    %942 = vmatprep.mubr.f32.mxu0 0.0
    %943 = vmatmul.mubr.f32.gmra.mxu0 %v86
    %v944 = vpop.f32.mrf.mxu0
    %v945 = vadd.f32 0.0, %v944
    %v946 = vpop.f32.mrf.mxu0
    %v947 = vadd.f32 0.0, %v946
    %948 = vmatprep.mubr.f32.mxu0 0.0
    %949 = vmatmul.mubr.f32.gmra.mxu0 %v89
    %v950 = vpop.f32.mrf.mxu0
    %v951 = vadd.f32 0.0, %v950
    %v952 = vpop.f32.mrf.mxu0
    %v953 = vadd.f32 0.0, %v952
    %954 = vmatprep.mubr.f32.mxu0 0.0
    %955 = vmatmul.mubr.f32.gmra.mxu0 %v92
    %v956 = vpop.f32.mrf.mxu0
    %v957 = vadd.f32 0.0, %v956
    %v958 = vpop.f32.mrf.mxu0
    %v959 = vadd.f32 0.0, %v958
    %960 = vmatprep.mubr.f32.mxu0 0.0
    %961 = vmatmul.mubr.f32.gmra.mxu0 %v95
    %v962 = vpop.f32.mrf.mxu0
    %v963 = vadd.f32 0.0, %v962
    %v964 = vpop.f32.mrf.mxu0
    %v965 = vadd.f32 0.0, %v964
    %966 = vmatprep.mubr.f32.mxu0 0.0
    %967 = vmatmul.mubr.f32.gmra.mxu0 %v98
    %v968 = vpop.f32.mrf.mxu0
    %v969 = vadd.f32 0.0, %v968
    %v970 = vpop.f32.mrf.mxu0
    %v971 = vadd.f32 0.0, %v970
    %972 = vmatprep.mubr.f32.mxu0 0.0
    %973 = vmatmul.mubr.f32.gmra.mxu0 %v101
    %v974 = vpop.f32.mrf.mxu0
    %v975 = vadd.f32 0.0, %v974
    %v976 = vpop.f32.mrf.mxu0
    %v977 = vadd.f32 0.0, %v976
    %978 = vmatprep.mubr.f32.mxu0 0.0
    %979 = vmatmul.mubr.f32.gmra.mxu0 %v104
    %v980 = vpop.f32.mrf.mxu0
    %v981 = vadd.f32 0.0, %v980
    %v982 = vpop.f32.mrf.mxu0
    %v983 = vadd.f32 0.0, %v982
    %984 = vmatprep.mubr.f32.mxu0 0.0
    %985 = vmatmul.mubr.f32.gmra.mxu0 %v107
    %v986 = vpop.f32.mrf.mxu0
    %v987 = vadd.f32 0.0, %v986
    %v988 = vpop.f32.mrf.mxu0
    %v989 = vadd.f32 0.0, %v988
    %990 = vmatprep.mubr.f32.mxu0 0.0
    %991 = vmatmul.mubr.f32.gmra.mxu0 %v110
    %v992 = vpop.f32.mrf.mxu0
    %v993 = vadd.f32 0.0, %v992
    %v994 = vpop.f32.mrf.mxu0
    %v995 = vadd.f32 0.0, %v994
    %996 = vmatprep.mubr.f32.mxu0 0.0
    %997 = vmatmul.mubr.f32.gmra.mxu0 %v113
    %v998 = vpop.f32.mrf.mxu0
    %v999 = vadd.f32 0.0, %v998
    %v1000 = vpop.f32.mrf.mxu0
    %v1001 = vadd.f32 0.0, %v1000
    %1002 = vmatprep.mubr.f32.mxu0 0.0
    %1003 = vmatmul.mubr.f32.gmra.mxu0 %v116
    %v1004 = vpop.f32.mrf.mxu0
    %v1005 = vadd.f32 0.0, %v1004
    %v1006 = vpop.f32.mrf.mxu0
    %v1007 = vadd.f32 0.0, %v1006
    %1008 = vmatprep.mubr.f32.mxu0 0.0
    %1009 = vmatmul.mubr.f32.gmra.mxu0 %v119
    %v1010 = vpop.f32.mrf.mxu0
    %v1011 = vadd.f32 0.0, %v1010
    %v1012 = vpop.f32.mrf.mxu0
    %v1013 = vadd.f32 0.0, %v1012
    %1014 = vmatprep.mubr.f32.mxu0 0.0
    %1015 = vmatmul.mubr.f32.gmra.mxu0 %v122
    %v1016 = vpop.f32.mrf.mxu0
    %v1017 = vadd.f32 0.0, %v1016
    %v1018 = vpop.f32.mrf.mxu0
    %v1019 = vadd.f32 0.0, %v1018
    %1020 = vmatprep.mubr.f32.mxu0 0.0
    %1021 = vmatmul.mubr.f32.gmra.mxu0 %v125
    %v1022 = vpop.f32.mrf.mxu0
    %v1023 = vadd.f32 0.0, %v1022
    %v1024 = vpop.f32.mrf.mxu0
    %v1025 = vadd.f32 0.0, %v1024
    %1026 = vmatprep.mubr.f32.mxu0 0.0
    %1027 = vmatmul.mubr.f32.gmra.mxu0 %v128
    %v1028 = vpop.f32.mrf.mxu0
    %v1029 = vadd.f32 0.0, %v1028
    %v1030 = vpop.f32.mrf.mxu0
    %v1031 = vadd.f32 0.0, %v1030
    %1032 = vmatprep.mubr.f32.mxu0 0.0
    %1033 = vmatmul.mubr.f32.gmra.mxu0 %v131
    %v1034 = vpop.f32.mrf.mxu0
    %v1035 = vadd.f32 0.0, %v1034
    %v1036 = vpop.f32.mrf.mxu0
    %v1037 = vadd.f32 0.0, %v1036
    %1038 = vmatprep.mubr.f32.mxu0 0.0
    %1039 = vmatmul.mubr.f32.gmra.mxu0 %v134
    %v1040 = vpop.f32.mrf.mxu0
    %v1041 = vadd.f32 0.0, %v1040
    %v1042 = vpop.f32.mrf.mxu0
    %v1043 = vadd.f32 0.0, %v1042
    %1044 = vmatprep.mubr.f32.mxu0 0.0
    %1045 = vmatmul.mubr.f32.gmra.mxu0 %v137
    %v1046 = vpop.f32.mrf.mxu0
    %v1047 = vadd.f32 0.0, %v1046
    %v1048 = vpop.f32.mrf.mxu0
    %v1049 = vadd.f32 0.0, %v1048
    %1050 = vmatprep.mubr.f32.mxu0 0.0
    %1051 = vmatmul.mubr.f32.gmra.mxu0 %v140
    %v1052 = vpop.f32.mrf.mxu0
    %v1053 = vadd.f32 0.0, %v1052
    %v1054 = vpop.f32.mrf.mxu0
    %v1055 = vadd.f32 0.0, %v1054
    %1056 = vmatprep.mubr.f32.mxu0 0.0
    %1057 = vmatmul.mubr.f32.gmra.mxu0 %v143
    %v1058 = vpop.f32.mrf.mxu0
    %v1059 = vadd.f32 0.0, %v1058
    %v1060 = vpop.f32.mrf.mxu0
    %v1061 = vadd.f32 0.0, %v1060
    %1062 = vmatprep.mubr.f32.mxu0 0.0
    %1063 = vmatmul.mubr.f32.gmra.mxu0 %v146
    %v1064 = vpop.f32.mrf.mxu0
    %v1065 = vadd.f32 0.0, %v1064
    %v1066 = vpop.f32.mrf.mxu0
    %v1067 = vadd.f32 0.0, %v1066
    %1068 = vmatprep.mubr.f32.mxu0 0.0
    %1069 = vmatmul.mubr.f32.gmra.mxu0 %v149
    %v1070 = vpop.f32.mrf.mxu0
    %v1071 = vadd.f32 0.0, %v1070
    %v1072 = vpop.f32.mrf.mxu0
    %v1073 = vadd.f32 0.0, %v1072
    %1074 = vmatprep.mubr.f32.mxu0 0.0
    %1075 = vmatmul.mubr.f32.gmra.mxu0 %v595
    %v1076 = vpop.f32.mrf.mxu0
    %v1077 = vadd.f32 0.0, %v1076
    %v1078 = vpop.f32.mrf.mxu0
    %v1079 = vadd.f32 0.0, %v1078
    %1080 = vmatprep.mubr.f32.mxu0 0.0
    %1081 = vmatmul.mubr.f32.gmra.mxu0 %v870
    %v1082 = vpop.f32.mrf.mxu0
    %v1083 = vadd.f32 0.0, %v1082
    %v1084 = vpop.f32.mrf.mxu0
    %v1085 = vadd.f32 0.0, %v1084
    %1086 = vdwg.mxu0
    %v1087 = vadd.f32 %v812, %v945
    %v1088 = vadd.f32 %v813, %v947
    %v1089 = vadd.f32 %v814, %v951
    %v1090 = vadd.f32 %v815, %v953
    %v1091 = vadd.f32 %v816, %v957
    %v1092 = vadd.f32 %v817, %v959
    %v1093 = vadd.f32 %v818, %v963
    %v1094 = vadd.f32 %v819, %v965
    %v1095 = vadd.f32 %v820, %v969
    %v1096 = vadd.f32 %v821, %v971
    %v1097 = vadd.f32 %v822, %v975
    %v1098 = vadd.f32 %v823, %v977
    %v1099 = vadd.f32 %v824, %v981
    %v1100 = vadd.f32 %v825, %v983
    %v1101 = vadd.f32 %v826, %v987
    %v1102 = vadd.f32 %v827, %v989
    %v1103 = vadd.f32 %v828, %v993
    %v1104 = vadd.f32 %v829, %v995
    %v1105 = vadd.f32 %v830, %v999
    %v1106 = vadd.f32 %v831, %v1001
    %v1107 = vadd.f32 %v832, %v1005
    %v1108 = vadd.f32 %v833, %v1007
    %v1109 = vadd.f32 %v834, %v1011
    %v1110 = vadd.f32 %v835, %v1013
    %v1111 = vadd.f32 %v836, %v1017
    %v1112 = vadd.f32 %v837, %v1019
    %v1113 = vadd.f32 %v838, %v1023
    %v1114 = vadd.f32 %v839, %v1025
    %v1115 = vadd.f32 %v840, %v1029
    %v1116 = vadd.f32 %v841, %v1031
    %v1117 = vadd.f32 %v842, %v1035
    %v1118 = vadd.f32 %v843, %v1037
    %v1119 = vadd.f32 %v844, %v1041
    %v1120 = vadd.f32 %v845, %v1043
    %v1121 = vadd.f32 %v846, %v1047
    %v1122 = vadd.f32 %v847, %v1049
    %v1123 = vadd.f32 %v848, %v1053
    %v1124 = vadd.f32 %v849, %v1055
    %v1125 = vadd.f32 %v850, %v1059
    %v1126 = vadd.f32 %v851, %v1061
    %v1127 = vadd.f32 %v852, %v1065
    %v1128 = vadd.f32 %v853, %v1067
    %v1129 = vadd.f32 %v854, %v1071
    %v1130 = vadd.f32 %v855, %v1073
    %v1131 = vadd.f32 %v856, %v1077
    %v1132 = vadd.f32 %v857, %v1079
    %v1133 = vadd.f32 %v858, %v1083
    %v1134 = vadd.f32 %v859, %v1085
    %s1135 = scalar_lea.vmem %s1, 256
    %v1136 = vld [vmem:[%s1135] sm:$0xff]
    %v1137 = vld [vmem:[%s1135 + $0x8] sm:$0xff]
    %v1138 = vld [vmem:[%s1135 + $0x10] sm:$0xff]
    %v1139 = vld [vmem:[%s1135 + $0x18] sm:$0xff]
    %v1140 = vld [vmem:[%s1135 + $0x20] sm:$0xff]
    %v1141 = vld [vmem:[%s1135 + $0x28] sm:$0xff]
    %v1142 = vld [vmem:[%s1135 + $0x30] sm:$0xf]
    %v1143 = vld [vmem:[%s1135 + $0x38] sm:$0xf]
    %v1145 = vsel %vm78, %v60, 0
    %v1148 = vsel %vm151, %v1142, 0
    %v1151 = vsel %vm151, %v1143, 0
    %1153 = vmatprep.subr.mxu0 0.0
    %1154 = vmatpush1.msra.mxu0 0.0
    %1155 = vmatprep.subr.mxu0 0.0
    %1156 = vmatpush1.msra.mxu0 0.0
    %1157 = vmatprep.subr.mxu0 0.0
    %1158 = vmatpush1.msra.mxu0 0.0
    %1159 = vmatprep.subr.mxu0 0.0
    %1160 = vmatpush1.msra.mxu0 0.0
    %1161 = vmatprep.subr.mxu0 0.0
    %1162 = vmatpush1.msra.mxu0 0.0
    %1163 = vmatprep.subr.mxu0 0.0
    %1164 = vmatpush1.msra.mxu0 0.0
    %1165 = vmatprep.subr.mxu0 0.0
    %1166 = vmatpush1.msra.mxu0 0.0
    %1167 = vmatprep.subr.mxu0 0.0
    %1168 = vmatpush1.msra.mxu0 0.0
    %1169 = vmatprep.subr.mxu0 0.0
    %1170 = vmatpush1.msra.mxu0 0.0
    %1171 = vmatprep.subr.mxu0 0.0
    %1172 = vmatpush1.msra.mxu0 0.0
    %1173 = vmatprep.subr.mxu0 0.0
    %1174 = vmatpush1.msra.mxu0 0.0
    %1175 = vmatprep.subr.mxu0 0.0
    %1176 = vmatpush1.msra.mxu0 0.0
    %1177 = vmatprep.subr.mxu0 %v1151
    %1178 = vmatpush1.msra.mxu0 %v1148
    %1179 = vmatprep.subr.mxu0 %v1141
    %1180 = vmatpush1.msra.mxu0 %v1140
    %1181 = vmatprep.subr.mxu0 %v1139
    %1182 = vmatpush1.msra.mxu0 %v1138
    %1183 = vmatprep.subr.mxu0 %v1137
    %1184 = vmatpush1.msra.mxu0 %v1136
    %1185 = vmatprep.subr.mxu0 0.0
    %1186 = vmatpush2.msra.mxu0 0.0
    %1187 = vmatprep.subr.mxu0 0.0
    %1188 = vmatpush2.msra.mxu0 0.0
    %1189 = vmatprep.subr.mxu0 0.0
    %1190 = vmatpush2.msra.mxu0 0.0
    %1191 = vmatprep.subr.mxu0 0.0
    %1192 = vmatpush2.msra.mxu0 0.0
    %1193 = vmatprep.subr.mxu0 0.0
    %1194 = vmatpush2.msra.mxu0 0.0
    %1195 = vmatprep.subr.mxu0 0.0
    %1196 = vmatpush2.msra.mxu0 0.0
    %1197 = vmatprep.subr.mxu0 0.0
    %1198 = vmatpush2.msra.mxu0 0.0
    %1199 = vmatprep.subr.mxu0 0.0
    %1200 = vmatpush2.msra.mxu0 0.0
    %1201 = vmatprep.subr.mxu0 0.0
    %1202 = vmatpush2.msra.mxu0 0.0
    %1203 = vmatprep.subr.mxu0 0.0
    %1204 = vmatpush2.msra.mxu0 0.0
    %1205 = vmatprep.subr.mxu0 0.0
    %1206 = vmatpush2.msra.mxu0 0.0
    %1207 = vmatprep.subr.mxu0 0.0
    %1208 = vmatpush2.msra.mxu0 0.0
    %1209 = vmatprep.subr.mxu0 0.0
    %1210 = vmatpush2.msra.mxu0 0.0
    %1211 = vmatprep.subr.mxu0 0.0
    %1212 = vmatpush2.msra.mxu0 0.0
    %1213 = vmatprep.subr.mxu0 0.0
    %1214 = vmatpush2.msra.mxu0 0.0
    %1215 = vmatprep.subr.mxu0 0.0
    %1216 = vmatpush2.msra.mxu0 0.0
    %1217 = vmatprep.mubr.f32.mxu0 0.0
    %1218 = vmatmul.mubr.f32.gmra.mxu0 %v89
    %v1219 = vpop.f32.mrf.mxu0
    %v1220 = vadd.f32 0.0, %v1219
    %v1221 = vpop.f32.mrf.mxu0
    %v1222 = vadd.f32 0.0, %v1221
    %1223 = vmatprep.mubr.f32.mxu0 0.0
    %1224 = vmatmul.mubr.f32.gmra.mxu0 %v92
    %v1225 = vpop.f32.mrf.mxu0
    %v1226 = vadd.f32 0.0, %v1225
    %v1227 = vpop.f32.mrf.mxu0
    %v1228 = vadd.f32 0.0, %v1227
    %1229 = vmatprep.mubr.f32.mxu0 0.0
    %1230 = vmatmul.mubr.f32.gmra.mxu0 %v95
    %v1231 = vpop.f32.mrf.mxu0
    %v1232 = vadd.f32 0.0, %v1231
    %v1233 = vpop.f32.mrf.mxu0
    %v1234 = vadd.f32 0.0, %v1233
    %1235 = vmatprep.mubr.f32.mxu0 0.0
    %1236 = vmatmul.mubr.f32.gmra.mxu0 %v98
    %v1237 = vpop.f32.mrf.mxu0
    %v1238 = vadd.f32 0.0, %v1237
    %v1239 = vpop.f32.mrf.mxu0
    %v1240 = vadd.f32 0.0, %v1239
    %1241 = vmatprep.mubr.f32.mxu0 0.0
    %1242 = vmatmul.mubr.f32.gmra.mxu0 %v101
    %v1243 = vpop.f32.mrf.mxu0
    %v1244 = vadd.f32 0.0, %v1243
    %v1245 = vpop.f32.mrf.mxu0
    %v1246 = vadd.f32 0.0, %v1245
    %1247 = vmatprep.mubr.f32.mxu0 0.0
    %1248 = vmatmul.mubr.f32.gmra.mxu0 %v104
    %v1249 = vpop.f32.mrf.mxu0
    %v1250 = vadd.f32 0.0, %v1249
    %v1251 = vpop.f32.mrf.mxu0
    %v1252 = vadd.f32 0.0, %v1251
    %1253 = vmatprep.mubr.f32.mxu0 0.0
    %1254 = vmatmul.mubr.f32.gmra.mxu0 %v107
    %v1255 = vpop.f32.mrf.mxu0
    %v1256 = vadd.f32 0.0, %v1255
    %v1257 = vpop.f32.mrf.mxu0
    %v1258 = vadd.f32 0.0, %v1257
    %1259 = vmatprep.mubr.f32.mxu0 0.0
    %1260 = vmatmul.mubr.f32.gmra.mxu0 %v110
    %v1261 = vpop.f32.mrf.mxu0
    %v1262 = vadd.f32 0.0, %v1261
    %v1263 = vpop.f32.mrf.mxu0
    %v1264 = vadd.f32 0.0, %v1263
    %1265 = vmatprep.mubr.f32.mxu0 0.0
    %1266 = vmatmul.mubr.f32.gmra.mxu0 %v113
    %v1267 = vpop.f32.mrf.mxu0
    %v1268 = vadd.f32 0.0, %v1267
    %v1269 = vpop.f32.mrf.mxu0
    %v1270 = vadd.f32 0.0, %v1269
    %1271 = vmatprep.mubr.f32.mxu0 0.0
    %1272 = vmatmul.mubr.f32.gmra.mxu0 %v116
    %v1273 = vpop.f32.mrf.mxu0
    %v1274 = vadd.f32 0.0, %v1273
    %v1275 = vpop.f32.mrf.mxu0
    %v1276 = vadd.f32 0.0, %v1275
    %1277 = vmatprep.mubr.f32.mxu0 0.0
    %1278 = vmatmul.mubr.f32.gmra.mxu0 %v119
    %v1279 = vpop.f32.mrf.mxu0
    %v1280 = vadd.f32 0.0, %v1279
    %v1281 = vpop.f32.mrf.mxu0
    %v1282 = vadd.f32 0.0, %v1281
    %1283 = vmatprep.mubr.f32.mxu0 0.0
    %1284 = vmatmul.mubr.f32.gmra.mxu0 %v122
    %v1285 = vpop.f32.mrf.mxu0
    %v1286 = vadd.f32 0.0, %v1285
    %v1287 = vpop.f32.mrf.mxu0
    %v1288 = vadd.f32 0.0, %v1287
    %1289 = vmatprep.mubr.f32.mxu0 0.0
    %1290 = vmatmul.mubr.f32.gmra.mxu0 %v125
    %v1291 = vpop.f32.mrf.mxu0
    %v1292 = vadd.f32 0.0, %v1291
    %v1293 = vpop.f32.mrf.mxu0
    %v1294 = vadd.f32 0.0, %v1293
    %1295 = vmatprep.mubr.f32.mxu0 0.0
    %1296 = vmatmul.mubr.f32.gmra.mxu0 %v128
    %v1297 = vpop.f32.mrf.mxu0
    %v1298 = vadd.f32 0.0, %v1297
    %v1299 = vpop.f32.mrf.mxu0
    %v1300 = vadd.f32 0.0, %v1299
    %1301 = vmatprep.mubr.f32.mxu0 0.0
    %1302 = vmatmul.mubr.f32.gmra.mxu0 %v131
    %v1303 = vpop.f32.mrf.mxu0
    %v1304 = vadd.f32 0.0, %v1303
    %v1305 = vpop.f32.mrf.mxu0
    %v1306 = vadd.f32 0.0, %v1305
    %1307 = vmatprep.mubr.f32.mxu0 0.0
    %1308 = vmatmul.mubr.f32.gmra.mxu0 %v134
    %v1309 = vpop.f32.mrf.mxu0
    %v1310 = vadd.f32 0.0, %v1309
    %v1311 = vpop.f32.mrf.mxu0
    %v1312 = vadd.f32 0.0, %v1311
    %1313 = vmatprep.mubr.f32.mxu0 0.0
    %1314 = vmatmul.mubr.f32.gmra.mxu0 %v137
    %v1315 = vpop.f32.mrf.mxu0
    %v1316 = vadd.f32 0.0, %v1315
    %v1317 = vpop.f32.mrf.mxu0
    %v1318 = vadd.f32 0.0, %v1317
    %1319 = vmatprep.mubr.f32.mxu0 0.0
    %1320 = vmatmul.mubr.f32.gmra.mxu0 %v140
    %v1321 = vpop.f32.mrf.mxu0
    %v1322 = vadd.f32 0.0, %v1321
    %v1323 = vpop.f32.mrf.mxu0
    %v1324 = vadd.f32 0.0, %v1323
    %1325 = vmatprep.mubr.f32.mxu0 0.0
    %1326 = vmatmul.mubr.f32.gmra.mxu0 %v143
    %v1327 = vpop.f32.mrf.mxu0
    %v1328 = vadd.f32 0.0, %v1327
    %v1329 = vpop.f32.mrf.mxu0
    %v1330 = vadd.f32 0.0, %v1329
    %1331 = vmatprep.mubr.f32.mxu0 0.0
    %1332 = vmatmul.mubr.f32.gmra.mxu0 %v146
    %v1333 = vpop.f32.mrf.mxu0
    %v1334 = vadd.f32 0.0, %v1333
    %v1335 = vpop.f32.mrf.mxu0
    %v1336 = vadd.f32 0.0, %v1335
    %1337 = vmatprep.mubr.f32.mxu0 0.0
    %1338 = vmatmul.mubr.f32.gmra.mxu0 %v149
    %v1339 = vpop.f32.mrf.mxu0
    %v1340 = vadd.f32 0.0, %v1339
    %v1341 = vpop.f32.mrf.mxu0
    %v1342 = vadd.f32 0.0, %v1341
    %1343 = vmatprep.mubr.f32.mxu0 0.0
    %1344 = vmatmul.mubr.f32.gmra.mxu0 %v595
    %v1345 = vpop.f32.mrf.mxu0
    %v1346 = vadd.f32 0.0, %v1345
    %v1347 = vpop.f32.mrf.mxu0
    %v1348 = vadd.f32 0.0, %v1347
    %1349 = vmatprep.mubr.f32.mxu0 0.0
    %1350 = vmatmul.mubr.f32.gmra.mxu0 %v870
    %v1351 = vpop.f32.mrf.mxu0
    %v1352 = vadd.f32 0.0, %v1351
    %v1353 = vpop.f32.mrf.mxu0
    %v1354 = vadd.f32 0.0, %v1353
    %1355 = vmatprep.mubr.f32.mxu0 0.0
    %1356 = vmatmul.mubr.f32.gmra.mxu0 %v1145
    %v1357 = vpop.f32.mrf.mxu0
    %v1358 = vadd.f32 0.0, %v1357
    %v1359 = vpop.f32.mrf.mxu0
    %v1360 = vadd.f32 0.0, %v1359
    %1361 = vdwg.mxu0
    %v1362 = vadd.f32 %v1087, %v1220
    %v1363 = vadd.f32 %v1088, %v1222
    %v1364 = vadd.f32 %v1089, %v1226
    %v1365 = vadd.f32 %v1090, %v1228
    %v1366 = vadd.f32 %v1091, %v1232
    %v1367 = vadd.f32 %v1092, %v1234
    %v1368 = vadd.f32 %v1093, %v1238
    %v1369 = vadd.f32 %v1094, %v1240
    %v1370 = vadd.f32 %v1095, %v1244
    %v1371 = vadd.f32 %v1096, %v1246
    %v1372 = vadd.f32 %v1097, %v1250
    %v1373 = vadd.f32 %v1098, %v1252
    %v1374 = vadd.f32 %v1099, %v1256
    %v1375 = vadd.f32 %v1100, %v1258
    %v1376 = vadd.f32 %v1101, %v1262
    %v1377 = vadd.f32 %v1102, %v1264
    %v1378 = vadd.f32 %v1103, %v1268
    %v1379 = vadd.f32 %v1104, %v1270
    %v1380 = vadd.f32 %v1105, %v1274
    %v1381 = vadd.f32 %v1106, %v1276
    %v1382 = vadd.f32 %v1107, %v1280
    %v1383 = vadd.f32 %v1108, %v1282
    %v1384 = vadd.f32 %v1109, %v1286
    %v1385 = vadd.f32 %v1110, %v1288
    %v1386 = vadd.f32 %v1111, %v1292
    %v1387 = vadd.f32 %v1112, %v1294
    %v1388 = vadd.f32 %v1113, %v1298
    %v1389 = vadd.f32 %v1114, %v1300
    %v1390 = vadd.f32 %v1115, %v1304
    %v1391 = vadd.f32 %v1116, %v1306
    %v1392 = vadd.f32 %v1117, %v1310
    %v1393 = vadd.f32 %v1118, %v1312
    %v1394 = vadd.f32 %v1119, %v1316
    %v1395 = vadd.f32 %v1120, %v1318
    %v1396 = vadd.f32 %v1121, %v1322
    %v1397 = vadd.f32 %v1122, %v1324
    %v1398 = vadd.f32 %v1123, %v1328
    %v1399 = vadd.f32 %v1124, %v1330
    %v1400 = vadd.f32 %v1125, %v1334
    %v1401 = vadd.f32 %v1126, %v1336
    %v1402 = vadd.f32 %v1127, %v1340
    %v1403 = vadd.f32 %v1128, %v1342
    %v1404 = vadd.f32 %v1129, %v1346
    %v1405 = vadd.f32 %v1130, %v1348
    %v1406 = vadd.f32 %v1131, %v1352
    %v1407 = vadd.f32 %v1132, %v1354
    %v1408 = vadd.f32 %v1133, %v1358
    %v1409 = vadd.f32 %v1134, %v1360
    %v1410 = vld [vmem:[%s2] sm:$0x3]
    %v1412 = vlaneseq
    %v1413 = vshrl.u32 %v1412, 7
    %v1414 = vsub.s32 0, %v1413
    %v1415 = vrot.slane %v1410, %v1414
    %v1416 = vlaneseq
    %v1417 = vshrl.u32 %v1416, 7
    %v1418 = vsub.s32 1, %v1417
    %v1419 = vrot.slane %v1410, %v1418
    %v1422 = vadd.f32 %v1362, %v1415
    %v1423 = vadd.f32 %v1363, %v1419
    %v1424 = vadd.f32 %v1364, %v1415
    %v1425 = vadd.f32 %v1365, %v1419
    %v1426 = vadd.f32 %v1366, %v1415
    %v1427 = vadd.f32 %v1367, %v1419
    %v1428 = vadd.f32 %v1368, %v1415
    %v1429 = vadd.f32 %v1369, %v1419
    %v1430 = vadd.f32 %v1370, %v1415
    %v1431 = vadd.f32 %v1371, %v1419
    %v1432 = vadd.f32 %v1372, %v1415
    %v1433 = vadd.f32 %v1373, %v1419
    %v1434 = vadd.f32 %v1374, %v1415
    %v1435 = vadd.f32 %v1375, %v1419
    %v1436 = vadd.f32 %v1376, %v1415
    %v1437 = vadd.f32 %v1377, %v1419
    %v1438 = vadd.f32 %v1378, %v1415
    %v1439 = vadd.f32 %v1379, %v1419
    %v1440 = vadd.f32 %v1380, %v1415
    %v1441 = vadd.f32 %v1381, %v1419
    %v1442 = vadd.f32 %v1382, %v1415
    %v1443 = vadd.f32 %v1383, %v1419
    %v1444 = vadd.f32 %v1384, %v1415
    %v1445 = vadd.f32 %v1385, %v1419
    %v1446 = vadd.f32 %v1386, %v1415
    %v1447 = vadd.f32 %v1387, %v1419
    %v1448 = vadd.f32 %v1388, %v1415
    %v1449 = vadd.f32 %v1389, %v1419
    %v1450 = vadd.f32 %v1390, %v1415
    %v1451 = vadd.f32 %v1391, %v1419
    %v1452 = vadd.f32 %v1392, %v1415
    %v1453 = vadd.f32 %v1393, %v1419
    %v1454 = vadd.f32 %v1394, %v1415
    %v1455 = vadd.f32 %v1395, %v1419
    %v1456 = vadd.f32 %v1396, %v1415
    %v1457 = vadd.f32 %v1397, %v1419
    %v1458 = vadd.f32 %v1398, %v1415
    %v1459 = vadd.f32 %v1399, %v1419
    %v1460 = vadd.f32 %v1400, %v1415
    %v1461 = vadd.f32 %v1401, %v1419
    %v1462 = vadd.f32 %v1402, %v1415
    %v1463 = vadd.f32 %v1403, %v1419
    %v1464 = vadd.f32 %v1404, %v1415
    %v1465 = vadd.f32 %v1405, %v1419
    %v1466 = vadd.f32 %v1406, %v1415
    %v1467 = vadd.f32 %v1407, %v1419
    %v1468 = vadd.f32 %v1408, %v1415
    %v1469 = vadd.f32 %v1409, %v1419
    %v1470 = vmax.f32 %v1422, %v1424
    %v1471 = vmax.f32 %v1423, %v1425
    %v1472 = vmax.f32 %v1426, %v1428
    %v1473 = vmax.f32 %v1427, %v1429
    %v1474 = vmax.f32 %v1430, %v1432
    %v1475 = vmax.f32 %v1431, %v1433
    %v1476 = vmax.f32 %v1434, %v1436
    %v1477 = vmax.f32 %v1435, %v1437
    %v1478 = vmax.f32 %v1438, %v1440
    %v1479 = vmax.f32 %v1439, %v1441
    %v1480 = vmax.f32 %v1442, %v1444
    %v1481 = vmax.f32 %v1443, %v1445
    %v1482 = vmax.f32 %v1446, %v1448
    %v1483 = vmax.f32 %v1447, %v1449
    %v1484 = vmax.f32 %v1450, %v1452
    %v1485 = vmax.f32 %v1451, %v1453
    %v1486 = vmax.f32 %v1454, %v1456
    %v1487 = vmax.f32 %v1455, %v1457
    %v1488 = vmax.f32 %v1458, %v1460
    %v1489 = vmax.f32 %v1459, %v1461
    %v1490 = vmax.f32 %v1462, %v1464
    %v1491 = vmax.f32 %v1463, %v1465
    %v1492 = vmax.f32 %v1466, %v1468
    %v1493 = vmax.f32 %v1467, %v1469
    %1518 = vrot.lane.b32.xlu0 %v1470, 8
    %v1519 = vpop.permute.xlu0 %1518
    %1520 = vrot.lane.b32.xlu0 %v1471, 8
    %v1521 = vpop.permute.xlu0 %1520
    %1522 = vrot.lane.b32.xlu0 %v1472, 8
    %v1523 = vpop.permute.xlu0 %1522
    %1524 = vrot.lane.b32.xlu0 %v1473, 8
    %v1525 = vpop.permute.xlu0 %1524
    %1526 = vrot.lane.b32.xlu0 %v1474, 8
    %v1527 = vpop.permute.xlu0 %1526
    %1528 = vrot.lane.b32.xlu0 %v1475, 8
    %v1529 = vpop.permute.xlu0 %1528
    %1530 = vrot.lane.b32.xlu0 %v1476, 8
    %v1531 = vpop.permute.xlu0 %1530
    %1532 = vrot.lane.b32.xlu0 %v1477, 8
    %v1533 = vpop.permute.xlu0 %1532
    %1534 = vrot.lane.b32.xlu0 %v1478, 8
    %v1535 = vpop.permute.xlu0 %1534
    %1536 = vrot.lane.b32.xlu0 %v1479, 8
    %v1537 = vpop.permute.xlu0 %1536
    %1538 = vrot.lane.b32.xlu0 %v1480, 8
    %v1539 = vpop.permute.xlu0 %1538
    %1540 = vrot.lane.b32.xlu0 %v1481, 8
    %v1541 = vpop.permute.xlu0 %1540
    %1542 = vrot.lane.b32.xlu0 %v1482, 8
    %v1543 = vpop.permute.xlu0 %1542
    %1544 = vrot.lane.b32.xlu0 %v1483, 8
    %v1545 = vpop.permute.xlu0 %1544
    %1546 = vrot.lane.b32.xlu0 %v1484, 8
    %v1547 = vpop.permute.xlu0 %1546
    %1548 = vrot.lane.b32.xlu0 %v1485, 8
    %v1549 = vpop.permute.xlu0 %1548
    %1550 = vrot.lane.b32.xlu0 %v1486, 8
    %v1551 = vpop.permute.xlu0 %1550
    %1552 = vrot.lane.b32.xlu0 %v1487, 8
    %v1553 = vpop.permute.xlu0 %1552
    %1554 = vrot.lane.b32.xlu0 %v1488, 8
    %v1555 = vpop.permute.xlu0 %1554
    %1556 = vrot.lane.b32.xlu0 %v1489, 8
    %v1557 = vpop.permute.xlu0 %1556
    %1558 = vrot.lane.b32.xlu0 %v1490, 8
    %v1559 = vpop.permute.xlu0 %1558
    %1560 = vrot.lane.b32.xlu0 %v1491, 8
    %v1561 = vpop.permute.xlu0 %1560
    %1562 = vrot.lane.b32.xlu0 %v1492, 8
    %v1563 = vpop.permute.xlu0 %1562
    %1564 = vrot.lane.b32.xlu0 %v1493, 8
    %v1565 = vpop.permute.xlu0 %1564
    %vm1566 = vcmask 64512
    %v1567 = vsel %vm1566, %v1519, %v1521
    %v1568 = vsel %vm1566, %v1523, %v1525
    %v1569 = vsel %vm1566, %v1527, %v1529
    %v1570 = vsel %vm1566, %v1531, %v1533
    %v1571 = vsel %vm1566, %v1535, %v1537
    %v1572 = vsel %vm1566, %v1539, %v1541
    %v1573 = vsel %vm1566, %v1543, %v1545
    %v1574 = vsel %vm1566, %v1547, %v1549
    %v1575 = vsel %vm1566, %v1551, %v1553
    %v1576 = vsel %vm1566, %v1555, %v1557
    %v1577 = vsel %vm1566, %v1559, %v1561
    %v1578 = vsel %vm1566, %v1563, %v1565
    %v1591 = vmax.f32 %v1470, %v1567
    %v1592 = vmax.f32 %v1472, %v1568
    %v1593 = vmax.f32 %v1474, %v1569
    %v1594 = vmax.f32 %v1476, %v1570
    %v1595 = vmax.f32 %v1478, %v1571
    %v1596 = vmax.f32 %v1480, %v1572
    %v1597 = vmax.f32 %v1482, %v1573
    %v1598 = vmax.f32 %v1484, %v1574
    %v1599 = vmax.f32 %v1486, %v1575
    %v1600 = vmax.f32 %v1488, %v1576
    %v1601 = vmax.f32 %v1490, %v1577
    %v1602 = vmax.f32 %v1492, %v1578
    %v1603 = vmax.f32 %v1591, 0.0
    %v1604 = vmax.f32 %v1592, 0.0
    %v1605 = vmax.f32 %v1593, 0.0
    %v1606 = vmax.f32 %v1594, 0.0
    %v1607 = vmax.f32 %v1595, 0.0
    %v1608 = vmax.f32 %v1596, 0.0
    %v1609 = vmax.f32 %v1597, 0.0
    %v1610 = vmax.f32 %v1598, 0.0
    %v1611 = vmax.f32 %v1599, 0.0
    %v1612 = vmax.f32 %v1600, 0.0
    %v1613 = vmax.f32 %v1601, 0.0
    %v1614 = vmax.f32 %v1602, 0.0
    %v1615 = vld [vmem:[%s3] sm:$0xff]
    %v1616 = vld [vmem:[%s3 + $0x8] sm:$0xff]
    %v1617 = vld [vmem:[%s3 + $0x10] sm:$0xff]
    %v1618 = vld [vmem:[%s3 + $0x18] sm:$0xff]
    %v1619 = vld [vmem:[%s3 + $0x20] sm:$0xff]
    %v1620 = vld [vmem:[%s3 + $0x28] sm:$0xff]
    %v1621 = vld [vmem:[%s3 + $0x30] sm:$0xff]
    %v1622 = vld [vmem:[%s3 + $0x38] sm:$0xff]
    %v1623 = vld [vmem:[%s3 + $0x40] sm:$0xff]
    %v1624 = vld [vmem:[%s3 + $0x48] sm:$0xff]
    %v1625 = vld [vmem:[%s3 + $0x50] sm:$0xff]
    %v1626 = vld [vmem:[%s3 + $0x58] sm:$0xff]
    %v1627 = vld [vmem:[%s3 + $0x60] sm:$0xff]
    %v1628 = vld [vmem:[%s3 + $0x68] sm:$0xff]
    %v1629 = vld [vmem:[%s3 + $0x70] sm:$0xff]
    %v1630 = vld [vmem:[%s3 + $0x78] sm:$0xff]
    %v1631 = vld [vmem:[%s3 + $0x80] sm:$0xff]
    %v1632 = vld [vmem:[%s3 + $0x88] sm:$0xff]
    %v1633 = vld [vmem:[%s3 + $0x90] sm:$0xff]
    %v1634 = vld [vmem:[%s3 + $0x98] sm:$0xff]
    %v1635 = vld [vmem:[%s3 + $0xa0] sm:$0xff]
    %v1636 = vld [vmem:[%s3 + $0xa8] sm:$0xff]
    %v1637 = vld [vmem:[%s3 + $0xb0] sm:$0xff]
    %v1638 = vld [vmem:[%s3 + $0xb8] sm:$0xff]
    %v1639 = vld [vmem:[%s3 + $0xc0] sm:$0xff]
    %v1640 = vld [vmem:[%s3 + $0xc8] sm:$0xff]
    %v1641 = vld [vmem:[%s3 + $0xd0] sm:$0xff]
    %v1642 = vld [vmem:[%s3 + $0xd8] sm:$0xff]
    %v1643 = vld [vmem:[%s3 + $0xe0] sm:$0xff]
    %v1644 = vld [vmem:[%s3 + $0xe8] sm:$0xff]
    %s1645 = scalar_lea.vmem %s3, 240
    %v1646 = vld [vmem:[%s1645] sm:$0xff]
    %v1647 = vld [vmem:[%s1645 + $0x8] sm:$0xff]
    %v1648 = vld [vmem:[%s1645 + $0x10] sm:$0xff]
    %v1649 = vld [vmem:[%s1645 + $0x18] sm:$0xff]
    %v1650 = vld [vmem:[%s1645 + $0x20] sm:$0xff]
    %v1651 = vld [vmem:[%s1645 + $0x28] sm:$0xff]
    %v1652 = vld [vmem:[%s1645 + $0x30] sm:$0xff]
    %v1653 = vld [vmem:[%s1645 + $0x38] sm:$0xff]
    %v1654 = vld [vmem:[%s1645 + $0x40] sm:$0xff]
    %v1655 = vld [vmem:[%s1645 + $0x48] sm:$0xff]
    %v1656 = vld [vmem:[%s1645 + $0x50] sm:$0xff]
    %v1657 = vld [vmem:[%s1645 + $0x58] sm:$0xff]
    %v1658 = vld [vmem:[%s1645 + $0x60] sm:$0xff]
    %v1659 = vld [vmem:[%s1645 + $0x68] sm:$0xff]
    %v1660 = vld [vmem:[%s1645 + $0x70] sm:$0xff]
    %v1661 = vld [vmem:[%s1645 + $0x78] sm:$0xff]
    %v1662 = vld [vmem:[%s1645 + $0x80] sm:$0xff]
    %v1663 = vld [vmem:[%s1645 + $0x88] sm:$0xff]
    %v1664 = vld [vmem:[%s1645 + $0x90] sm:$0xff]
    %v1665 = vld [vmem:[%s1645 + $0x98] sm:$0xff]
    %v1666 = vld [vmem:[%s1645 + $0xa0] sm:$0xff]
    %v1667 = vld [vmem:[%s1645 + $0xa8] sm:$0xff]
    %v1668 = vld [vmem:[%s1645 + $0xb0] sm:$0xff]
    %v1669 = vld [vmem:[%s1645 + $0xb8] sm:$0xff]
    %v1670 = vld [vmem:[%s1645 + $0xc0] sm:$0xff]
    %v1671 = vld [vmem:[%s1645 + $0xc8] sm:$0xff]
    %v1672 = vld [vmem:[%s1645 + $0xd0] sm:$0xff]
    %v1673 = vld [vmem:[%s1645 + $0xd8] sm:$0xff]
    %v1674 = vld [vmem:[%s1645 + $0xe0] sm:$0xff]
    %v1675 = vld [vmem:[%s1645 + $0xe8] sm:$0xff]
    %vm1676 = vcmask 982016
    %v1678 = vsel %vm1676, %v1604, 0
    %v1681 = vsel %vm1676, %v1605, 0
    %v1684 = vsel %vm1676, %v1606, 0
    %v1687 = vsel %vm1676, %v1607, 0
    %v1690 = vsel %vm1676, %v1608, 0
    %v1693 = vsel %vm1676, %v1609, 0
    %v1696 = vsel %vm1676, %v1610, 0
    %v1699 = vsel %vm1676, %v1611, 0
    %1701 = vmatprep.subr.mxu0 0.0
    %1702 = vmatpush1.msra.mxu0 0.0
    %1703 = vmatprep.subr.mxu0 %v1675
    %1704 = vmatpush1.msra.mxu0 %v1674
    %1705 = vmatprep.subr.mxu0 %v1673
    %1706 = vmatpush1.msra.mxu0 %v1672
    %1707 = vmatprep.subr.mxu0 %v1671
    %1708 = vmatpush1.msra.mxu0 %v1670
    %1709 = vmatprep.subr.mxu0 %v1669
    %1710 = vmatpush1.msra.mxu0 %v1668
    %1711 = vmatprep.subr.mxu0 %v1667
    %1712 = vmatpush1.msra.mxu0 %v1666
    %1713 = vmatprep.subr.mxu0 %v1665
    %1714 = vmatpush1.msra.mxu0 %v1664
    %1715 = vmatprep.subr.mxu0 %v1663
    %1716 = vmatpush1.msra.mxu0 %v1662
    %1717 = vmatprep.subr.mxu0 %v1661
    %1718 = vmatpush1.msra.mxu0 %v1660
    %1719 = vmatprep.subr.mxu0 %v1659
    %1720 = vmatpush1.msra.mxu0 %v1658
    %1721 = vmatprep.subr.mxu0 %v1657
    %1722 = vmatpush1.msra.mxu0 %v1656
    %1723 = vmatprep.subr.mxu0 %v1655
    %1724 = vmatpush1.msra.mxu0 %v1654
    %1725 = vmatprep.subr.mxu0 %v1653
    %1726 = vmatpush1.msra.mxu0 %v1652
    %1727 = vmatprep.subr.mxu0 %v1651
    %1728 = vmatpush1.msra.mxu0 %v1650
    %1729 = vmatprep.subr.mxu0 %v1649
    %1730 = vmatpush1.msra.mxu0 %v1648
    %1731 = vmatprep.subr.mxu0 %v1647
    %1732 = vmatpush1.msra.mxu0 %v1646
    %1733 = vmatprep.subr.mxu0 0.0
    %1734 = vmatpush2.msra.mxu0 0.0
    %1735 = vmatprep.subr.mxu0 0.0
    %1736 = vmatpush2.msra.mxu0 0.0
    %1737 = vmatprep.subr.mxu0 0.0
    %1738 = vmatpush2.msra.mxu0 0.0
    %1739 = vmatprep.subr.mxu0 0.0
    %1740 = vmatpush2.msra.mxu0 0.0
    %1741 = vmatprep.subr.mxu0 0.0
    %1742 = vmatpush2.msra.mxu0 0.0
    %1743 = vmatprep.subr.mxu0 0.0
    %1744 = vmatpush2.msra.mxu0 0.0
    %1745 = vmatprep.subr.mxu0 0.0
    %1746 = vmatpush2.msra.mxu0 0.0
    %1747 = vmatprep.subr.mxu0 0.0
    %1748 = vmatpush2.msra.mxu0 0.0
    %1749 = vmatprep.subr.mxu0 0.0
    %1750 = vmatpush2.msra.mxu0 0.0
    %1751 = vmatprep.subr.mxu0 0.0
    %1752 = vmatpush2.msra.mxu0 0.0
    %1753 = vmatprep.subr.mxu0 0.0
    %1754 = vmatpush2.msra.mxu0 0.0
    %1755 = vmatprep.subr.mxu0 0.0
    %1756 = vmatpush2.msra.mxu0 0.0
    %1757 = vmatprep.subr.mxu0 0.0
    %1758 = vmatpush2.msra.mxu0 0.0
    %1759 = vmatprep.subr.mxu0 0.0
    %1760 = vmatpush2.msra.mxu0 0.0
    %1761 = vmatprep.subr.mxu0 0.0
    %1762 = vmatpush2.msra.mxu0 0.0
    %1763 = vmatprep.subr.mxu0 0.0
    %1764 = vmatpush2.msra.mxu0 0.0
    %1765 = vmatprep.mubr.f32.mxu0 0.0
    %1766 = vmatmul.mubr.f32.gmra.mxu0 %v1678
    %v1767 = vpop.f32.mrf.mxu0
    %v1768 = vadd.f32 0.0, %v1767
    %v1769 = vpop.f32.mrf.mxu0
    %v1770 = vadd.f32 0.0, %v1769
    %1771 = vmatprep.mubr.f32.mxu0 0.0
    %1772 = vmatmul.mubr.f32.gmra.mxu0 %v1681
    %v1773 = vpop.f32.mrf.mxu0
    %v1774 = vadd.f32 0.0, %v1773
    %v1775 = vpop.f32.mrf.mxu0
    %v1776 = vadd.f32 0.0, %v1775
    %1777 = vmatprep.mubr.f32.mxu0 0.0
    %1778 = vmatmul.mubr.f32.gmra.mxu0 %v1684
    %v1779 = vpop.f32.mrf.mxu0
    %v1780 = vadd.f32 0.0, %v1779
    %v1781 = vpop.f32.mrf.mxu0
    %v1782 = vadd.f32 0.0, %v1781
    %1783 = vmatprep.mubr.f32.mxu0 0.0
    %1784 = vmatmul.mubr.f32.gmra.mxu0 %v1687
    %v1785 = vpop.f32.mrf.mxu0
    %v1786 = vadd.f32 0.0, %v1785
    %v1787 = vpop.f32.mrf.mxu0
    %v1788 = vadd.f32 0.0, %v1787
    %1789 = vmatprep.mubr.f32.mxu0 0.0
    %1790 = vmatmul.mubr.f32.gmra.mxu0 %v1690
    %v1791 = vpop.f32.mrf.mxu0
    %v1792 = vadd.f32 0.0, %v1791
    %v1793 = vpop.f32.mrf.mxu0
    %v1794 = vadd.f32 0.0, %v1793
    %1795 = vmatprep.mubr.f32.mxu0 0.0
    %1796 = vmatmul.mubr.f32.gmra.mxu0 %v1693
    %v1797 = vpop.f32.mrf.mxu0
    %v1798 = vadd.f32 0.0, %v1797
    %v1799 = vpop.f32.mrf.mxu0
    %v1800 = vadd.f32 0.0, %v1799
    %1801 = vmatprep.mubr.f32.mxu0 0.0
    %1802 = vmatmul.mubr.f32.gmra.mxu0 %v1696
    %v1803 = vpop.f32.mrf.mxu0
    %v1804 = vadd.f32 0.0, %v1803
    %v1805 = vpop.f32.mrf.mxu0
    %v1806 = vadd.f32 0.0, %v1805
    %1807 = vmatprep.mubr.f32.mxu0 0.0
    %1808 = vmatmul.mubr.f32.gmra.mxu0 %v1699
    %v1809 = vpop.f32.mrf.mxu0
    %v1810 = vadd.f32 0.0, %v1809
    %v1811 = vpop.f32.mrf.mxu0
    %v1812 = vadd.f32 0.0, %v1811
    %1813 = vdwg.mxu0
    %v1815 = vsel %vm1676, %v1603, 0
    %1817 = vmatprep.subr.mxu0 0.0
    %1818 = vmatpush1.msra.mxu0 0.0
    %1819 = vmatprep.subr.mxu0 %v1644
    %1820 = vmatpush1.msra.mxu0 %v1643
    %1821 = vmatprep.subr.mxu0 %v1642
    %1822 = vmatpush1.msra.mxu0 %v1641
    %1823 = vmatprep.subr.mxu0 %v1640
    %1824 = vmatpush1.msra.mxu0 %v1639
    %1825 = vmatprep.subr.mxu0 %v1638
    %1826 = vmatpush1.msra.mxu0 %v1637
    %1827 = vmatprep.subr.mxu0 %v1636
    %1828 = vmatpush1.msra.mxu0 %v1635
    %1829 = vmatprep.subr.mxu0 %v1634
    %1830 = vmatpush1.msra.mxu0 %v1633
    %1831 = vmatprep.subr.mxu0 %v1632
    %1832 = vmatpush1.msra.mxu0 %v1631
    %1833 = vmatprep.subr.mxu0 %v1630
    %1834 = vmatpush1.msra.mxu0 %v1629
    %1835 = vmatprep.subr.mxu0 %v1628
    %1836 = vmatpush1.msra.mxu0 %v1627
    %1837 = vmatprep.subr.mxu0 %v1626
    %1838 = vmatpush1.msra.mxu0 %v1625
    %1839 = vmatprep.subr.mxu0 %v1624
    %1840 = vmatpush1.msra.mxu0 %v1623
    %1841 = vmatprep.subr.mxu0 %v1622
    %1842 = vmatpush1.msra.mxu0 %v1621
    %1843 = vmatprep.subr.mxu0 %v1620
    %1844 = vmatpush1.msra.mxu0 %v1619
    %1845 = vmatprep.subr.mxu0 %v1618
    %1846 = vmatpush1.msra.mxu0 %v1617
    %1847 = vmatprep.subr.mxu0 %v1616
    %1848 = vmatpush1.msra.mxu0 %v1615
    %1849 = vmatprep.subr.mxu0 0.0
    %1850 = vmatpush2.msra.mxu0 0.0
    %1851 = vmatprep.subr.mxu0 0.0
    %1852 = vmatpush2.msra.mxu0 0.0
    %1853 = vmatprep.subr.mxu0 0.0
    %1854 = vmatpush2.msra.mxu0 0.0
    %1855 = vmatprep.subr.mxu0 0.0
    %1856 = vmatpush2.msra.mxu0 0.0
    %1857 = vmatprep.subr.mxu0 0.0
    %1858 = vmatpush2.msra.mxu0 0.0
    %1859 = vmatprep.subr.mxu0 0.0
    %1860 = vmatpush2.msra.mxu0 0.0
    %1861 = vmatprep.subr.mxu0 0.0
    %1862 = vmatpush2.msra.mxu0 0.0
    %1863 = vmatprep.subr.mxu0 0.0
    %1864 = vmatpush2.msra.mxu0 0.0
    %1865 = vmatprep.subr.mxu0 0.0
    %1866 = vmatpush2.msra.mxu0 0.0
    %1867 = vmatprep.subr.mxu0 0.0
    %1868 = vmatpush2.msra.mxu0 0.0
    %1869 = vmatprep.subr.mxu0 0.0
    %1870 = vmatpush2.msra.mxu0 0.0
    %1871 = vmatprep.subr.mxu0 0.0
    %1872 = vmatpush2.msra.mxu0 0.0
    %1873 = vmatprep.subr.mxu0 0.0
    %1874 = vmatpush2.msra.mxu0 0.0
    %1875 = vmatprep.subr.mxu0 0.0
    %1876 = vmatpush2.msra.mxu0 0.0
    %1877 = vmatprep.subr.mxu0 0.0
    %1878 = vmatpush2.msra.mxu0 0.0
    %1879 = vmatprep.subr.mxu0 0.0
    %1880 = vmatpush2.msra.mxu0 0.0
    %1881 = vmatprep.mubr.f32.mxu0 0.0
    %1882 = vmatmul.mubr.f32.gmra.mxu0 %v1815
    %v1883 = vpop.f32.mrf.mxu0
    %v1884 = vadd.f32 %v1768, %v1883
    %v1885 = vpop.f32.mrf.mxu0
    %v1886 = vadd.f32 %v1770, %v1885
    %1887 = vmatprep.mubr.f32.mxu0 0.0
    %1888 = vmatmul.mubr.f32.gmra.mxu0 %v1678
    %v1889 = vpop.f32.mrf.mxu0
    %v1890 = vadd.f32 %v1774, %v1889
    %v1891 = vpop.f32.mrf.mxu0
    %v1892 = vadd.f32 %v1776, %v1891
    %1893 = vmatprep.mubr.f32.mxu0 0.0
    %1894 = vmatmul.mubr.f32.gmra.mxu0 %v1681
    %v1895 = vpop.f32.mrf.mxu0
    %v1896 = vadd.f32 %v1780, %v1895
    %v1897 = vpop.f32.mrf.mxu0
    %v1898 = vadd.f32 %v1782, %v1897
    %1899 = vmatprep.mubr.f32.mxu0 0.0
    %1900 = vmatmul.mubr.f32.gmra.mxu0 %v1684
    %v1901 = vpop.f32.mrf.mxu0
    %v1902 = vadd.f32 %v1786, %v1901
    %v1903 = vpop.f32.mrf.mxu0
    %v1904 = vadd.f32 %v1788, %v1903
    %1905 = vmatprep.mubr.f32.mxu0 0.0
    %1906 = vmatmul.mubr.f32.gmra.mxu0 %v1687
    %v1907 = vpop.f32.mrf.mxu0
    %v1908 = vadd.f32 %v1792, %v1907
    %v1909 = vpop.f32.mrf.mxu0
    %v1910 = vadd.f32 %v1794, %v1909
    %1911 = vmatprep.mubr.f32.mxu0 0.0
    %1912 = vmatmul.mubr.f32.gmra.mxu0 %v1690
    %v1913 = vpop.f32.mrf.mxu0
    %v1914 = vadd.f32 %v1798, %v1913
    %v1915 = vpop.f32.mrf.mxu0
    %v1916 = vadd.f32 %v1800, %v1915
    %1917 = vmatprep.mubr.f32.mxu0 0.0
    %1918 = vmatmul.mubr.f32.gmra.mxu0 %v1693
    %v1919 = vpop.f32.mrf.mxu0
    %v1920 = vadd.f32 %v1804, %v1919
    %v1921 = vpop.f32.mrf.mxu0
    %v1922 = vadd.f32 %v1806, %v1921
    %1923 = vmatprep.mubr.f32.mxu0 0.0
    %1924 = vmatmul.mubr.f32.gmra.mxu0 %v1696
    %v1925 = vpop.f32.mrf.mxu0
    %v1926 = vadd.f32 %v1810, %v1925
    %v1927 = vpop.f32.mrf.mxu0
    %v1928 = vadd.f32 %v1812, %v1927
    %1929 = vdwg.mxu0
    %s1930 = scalar_lea.vmem %s3, 480
    %v1931 = vld [vmem:[%s1930] sm:$0xff]
    %v1932 = vld [vmem:[%s1930 + $0x8] sm:$0xff]
    %v1933 = vld [vmem:[%s1930 + $0x10] sm:$0xff]
    %v1934 = vld [vmem:[%s1930 + $0x18] sm:$0xff]
    %v1935 = vld [vmem:[%s1930 + $0x20] sm:$0xff]
    %v1936 = vld [vmem:[%s1930 + $0x28] sm:$0xff]
    %v1937 = vld [vmem:[%s1930 + $0x30] sm:$0xff]
    %v1938 = vld [vmem:[%s1930 + $0x38] sm:$0xff]
    %v1939 = vld [vmem:[%s1930 + $0x40] sm:$0xff]
    %v1940 = vld [vmem:[%s1930 + $0x48] sm:$0xff]
    %v1941 = vld [vmem:[%s1930 + $0x50] sm:$0xff]
    %v1942 = vld [vmem:[%s1930 + $0x58] sm:$0xff]
    %v1943 = vld [vmem:[%s1930 + $0x60] sm:$0xff]
    %v1944 = vld [vmem:[%s1930 + $0x68] sm:$0xff]
    %v1945 = vld [vmem:[%s1930 + $0x70] sm:$0xff]
    %v1946 = vld [vmem:[%s1930 + $0x78] sm:$0xff]
    %v1947 = vld [vmem:[%s1930 + $0x80] sm:$0xff]
    %v1948 = vld [vmem:[%s1930 + $0x88] sm:$0xff]
    %v1949 = vld [vmem:[%s1930 + $0x90] sm:$0xff]
    %v1950 = vld [vmem:[%s1930 + $0x98] sm:$0xff]
    %v1951 = vld [vmem:[%s1930 + $0xa0] sm:$0xff]
    %v1952 = vld [vmem:[%s1930 + $0xa8] sm:$0xff]
    %v1953 = vld [vmem:[%s1930 + $0xb0] sm:$0xff]
    %v1954 = vld [vmem:[%s1930 + $0xb8] sm:$0xff]
    %v1955 = vld [vmem:[%s1930 + $0xc0] sm:$0xff]
    %v1956 = vld [vmem:[%s1930 + $0xc8] sm:$0xff]
    %v1957 = vld [vmem:[%s1930 + $0xd0] sm:$0xff]
    %v1958 = vld [vmem:[%s1930 + $0xd8] sm:$0xff]
    %v1959 = vld [vmem:[%s1930 + $0xe0] sm:$0xff]
    %v1960 = vld [vmem:[%s1930 + $0xe8] sm:$0xff]
    %v1962 = vsel %vm1676, %v1612, 0
    %1964 = vmatprep.subr.mxu0 0.0
    %1965 = vmatpush1.msra.mxu0 0.0
    %1966 = vmatprep.subr.mxu0 %v1960
    %1967 = vmatpush1.msra.mxu0 %v1959
    %1968 = vmatprep.subr.mxu0 %v1958
    %1969 = vmatpush1.msra.mxu0 %v1957
    %1970 = vmatprep.subr.mxu0 %v1956
    %1971 = vmatpush1.msra.mxu0 %v1955
    %1972 = vmatprep.subr.mxu0 %v1954
    %1973 = vmatpush1.msra.mxu0 %v1953
    %1974 = vmatprep.subr.mxu0 %v1952
    %1975 = vmatpush1.msra.mxu0 %v1951
    %1976 = vmatprep.subr.mxu0 %v1950
    %1977 = vmatpush1.msra.mxu0 %v1949
    %1978 = vmatprep.subr.mxu0 %v1948
    %1979 = vmatpush1.msra.mxu0 %v1947
    %1980 = vmatprep.subr.mxu0 %v1946
    %1981 = vmatpush1.msra.mxu0 %v1945
    %1982 = vmatprep.subr.mxu0 %v1944
    %1983 = vmatpush1.msra.mxu0 %v1943
    %1984 = vmatprep.subr.mxu0 %v1942
    %1985 = vmatpush1.msra.mxu0 %v1941
    %1986 = vmatprep.subr.mxu0 %v1940
    %1987 = vmatpush1.msra.mxu0 %v1939
    %1988 = vmatprep.subr.mxu0 %v1938
    %1989 = vmatpush1.msra.mxu0 %v1937
    %1990 = vmatprep.subr.mxu0 %v1936
    %1991 = vmatpush1.msra.mxu0 %v1935
    %1992 = vmatprep.subr.mxu0 %v1934
    %1993 = vmatpush1.msra.mxu0 %v1933
    %1994 = vmatprep.subr.mxu0 %v1932
    %1995 = vmatpush1.msra.mxu0 %v1931
    %1996 = vmatprep.subr.mxu0 0.0
    %1997 = vmatpush2.msra.mxu0 0.0
    %1998 = vmatprep.subr.mxu0 0.0
    %1999 = vmatpush2.msra.mxu0 0.0
    %2000 = vmatprep.subr.mxu0 0.0
    %2001 = vmatpush2.msra.mxu0 0.0
    %2002 = vmatprep.subr.mxu0 0.0
    %2003 = vmatpush2.msra.mxu0 0.0
    %2004 = vmatprep.subr.mxu0 0.0
    %2005 = vmatpush2.msra.mxu0 0.0
    %2006 = vmatprep.subr.mxu0 0.0
    %2007 = vmatpush2.msra.mxu0 0.0
    %2008 = vmatprep.subr.mxu0 0.0
    %2009 = vmatpush2.msra.mxu0 0.0
    %2010 = vmatprep.subr.mxu0 0.0
    %2011 = vmatpush2.msra.mxu0 0.0
    %2012 = vmatprep.subr.mxu0 0.0
    %2013 = vmatpush2.msra.mxu0 0.0
    %2014 = vmatprep.subr.mxu0 0.0
    %2015 = vmatpush2.msra.mxu0 0.0
    %2016 = vmatprep.subr.mxu0 0.0
    %2017 = vmatpush2.msra.mxu0 0.0
    %2018 = vmatprep.subr.mxu0 0.0
    %2019 = vmatpush2.msra.mxu0 0.0
    %2020 = vmatprep.subr.mxu0 0.0
    %2021 = vmatpush2.msra.mxu0 0.0
    %2022 = vmatprep.subr.mxu0 0.0
    %2023 = vmatpush2.msra.mxu0 0.0
    %2024 = vmatprep.subr.mxu0 0.0
    %2025 = vmatpush2.msra.mxu0 0.0
    %2026 = vmatprep.subr.mxu0 0.0
    %2027 = vmatpush2.msra.mxu0 0.0
    %2028 = vmatprep.mubr.f32.mxu0 0.0
    %2029 = vmatmul.mubr.f32.gmra.mxu0 %v1681
    %v2030 = vpop.f32.mrf.mxu0
    %v2031 = vadd.f32 0.0, %v2030
    %v2032 = vpop.f32.mrf.mxu0
    %v2033 = vadd.f32 0.0, %v2032
    %2034 = vmatprep.mubr.f32.mxu0 0.0
    %2035 = vmatmul.mubr.f32.gmra.mxu0 %v1684
    %v2036 = vpop.f32.mrf.mxu0
    %v2037 = vadd.f32 0.0, %v2036
    %v2038 = vpop.f32.mrf.mxu0
    %v2039 = vadd.f32 0.0, %v2038
    %2040 = vmatprep.mubr.f32.mxu0 0.0
    %2041 = vmatmul.mubr.f32.gmra.mxu0 %v1687
    %v2042 = vpop.f32.mrf.mxu0
    %v2043 = vadd.f32 0.0, %v2042
    %v2044 = vpop.f32.mrf.mxu0
    %v2045 = vadd.f32 0.0, %v2044
    %2046 = vmatprep.mubr.f32.mxu0 0.0
    %2047 = vmatmul.mubr.f32.gmra.mxu0 %v1690
    %v2048 = vpop.f32.mrf.mxu0
    %v2049 = vadd.f32 0.0, %v2048
    %v2050 = vpop.f32.mrf.mxu0
    %v2051 = vadd.f32 0.0, %v2050
    %2052 = vmatprep.mubr.f32.mxu0 0.0
    %2053 = vmatmul.mubr.f32.gmra.mxu0 %v1693
    %v2054 = vpop.f32.mrf.mxu0
    %v2055 = vadd.f32 0.0, %v2054
    %v2056 = vpop.f32.mrf.mxu0
    %v2057 = vadd.f32 0.0, %v2056
    %2058 = vmatprep.mubr.f32.mxu0 0.0
    %2059 = vmatmul.mubr.f32.gmra.mxu0 %v1696
    %v2060 = vpop.f32.mrf.mxu0
    %v2061 = vadd.f32 0.0, %v2060
    %v2062 = vpop.f32.mrf.mxu0
    %v2063 = vadd.f32 0.0, %v2062
    %2064 = vmatprep.mubr.f32.mxu0 0.0
    %2065 = vmatmul.mubr.f32.gmra.mxu0 %v1699
    %v2066 = vpop.f32.mrf.mxu0
    %v2067 = vadd.f32 0.0, %v2066
    %v2068 = vpop.f32.mrf.mxu0
    %v2069 = vadd.f32 0.0, %v2068
    %2070 = vmatprep.mubr.f32.mxu0 0.0
    %2071 = vmatmul.mubr.f32.gmra.mxu0 %v1962
    %v2072 = vpop.f32.mrf.mxu0
    %v2073 = vadd.f32 0.0, %v2072
    %v2074 = vpop.f32.mrf.mxu0
    %v2075 = vadd.f32 0.0, %v2074
    %2076 = vdwg.mxu0
    %v2077 = vadd.f32 %v1884, %v2031
    %v2078 = vadd.f32 %v1886, %v2033
    %v2079 = vadd.f32 %v1890, %v2037
    %v2080 = vadd.f32 %v1892, %v2039
    %v2081 = vadd.f32 %v1896, %v2043
    %v2082 = vadd.f32 %v1898, %v2045
    %v2083 = vadd.f32 %v1902, %v2049
    %v2084 = vadd.f32 %v1904, %v2051
    %v2085 = vadd.f32 %v1908, %v2055
    %v2086 = vadd.f32 %v1910, %v2057
    %v2087 = vadd.f32 %v1914, %v2061
    %v2088 = vadd.f32 %v1916, %v2063
    %v2089 = vadd.f32 %v1920, %v2067
    %v2090 = vadd.f32 %v1922, %v2069
    %v2091 = vadd.f32 %v1926, %v2073
    %v2092 = vadd.f32 %v1928, %v2075
    %s2093 = scalar_lea.vmem %s3, 720
    %v2094 = vld [vmem:[%s2093] sm:$0xff]
    %v2095 = vld [vmem:[%s2093 + $0x8] sm:$0xff]
    %v2096 = vld [vmem:[%s2093 + $0x10] sm:$0xff]
    %v2097 = vld [vmem:[%s2093 + $0x18] sm:$0xff]
    %v2098 = vld [vmem:[%s2093 + $0x20] sm:$0xff]
    %v2099 = vld [vmem:[%s2093 + $0x28] sm:$0xff]
    %v2100 = vld [vmem:[%s2093 + $0x30] sm:$0xff]
    %v2101 = vld [vmem:[%s2093 + $0x38] sm:$0xff]
    %v2102 = vld [vmem:[%s2093 + $0x40] sm:$0xff]
    %v2103 = vld [vmem:[%s2093 + $0x48] sm:$0xff]
    %v2104 = vld [vmem:[%s2093 + $0x50] sm:$0xff]
    %v2105 = vld [vmem:[%s2093 + $0x58] sm:$0xff]
    %v2106 = vld [vmem:[%s2093 + $0x60] sm:$0xff]
    %v2107 = vld [vmem:[%s2093 + $0x68] sm:$0xff]
    %v2108 = vld [vmem:[%s2093 + $0x70] sm:$0xff]
    %v2109 = vld [vmem:[%s2093 + $0x78] sm:$0xff]
    %v2110 = vld [vmem:[%s2093 + $0x80] sm:$0xff]
    %v2111 = vld [vmem:[%s2093 + $0x88] sm:$0xff]
    %v2112 = vld [vmem:[%s2093 + $0x90] sm:$0xff]
    %v2113 = vld [vmem:[%s2093 + $0x98] sm:$0xff]
    %v2114 = vld [vmem:[%s2093 + $0xa0] sm:$0xff]
    %v2115 = vld [vmem:[%s2093 + $0xa8] sm:$0xff]
    %v2116 = vld [vmem:[%s2093 + $0xb0] sm:$0xff]
    %v2117 = vld [vmem:[%s2093 + $0xb8] sm:$0xff]
    %v2118 = vld [vmem:[%s2093 + $0xc0] sm:$0xff]
    %v2119 = vld [vmem:[%s2093 + $0xc8] sm:$0xff]
    %v2120 = vld [vmem:[%s2093 + $0xd0] sm:$0xff]
    %v2121 = vld [vmem:[%s2093 + $0xd8] sm:$0xff]
    %v2122 = vld [vmem:[%s2093 + $0xe0] sm:$0xff]
    %v2123 = vld [vmem:[%s2093 + $0xe8] sm:$0xff]
    %v2125 = vsel %vm1676, %v1613, 0
    %2127 = vmatprep.subr.mxu0 0.0
    %2128 = vmatpush1.msra.mxu0 0.0
    %2129 = vmatprep.subr.mxu0 %v2123
    %2130 = vmatpush1.msra.mxu0 %v2122
    %2131 = vmatprep.subr.mxu0 %v2121
    %2132 = vmatpush1.msra.mxu0 %v2120
    %2133 = vmatprep.subr.mxu0 %v2119
    %2134 = vmatpush1.msra.mxu0 %v2118
    %2135 = vmatprep.subr.mxu0 %v2117
    %2136 = vmatpush1.msra.mxu0 %v2116
    %2137 = vmatprep.subr.mxu0 %v2115
    %2138 = vmatpush1.msra.mxu0 %v2114
    %2139 = vmatprep.subr.mxu0 %v2113
    %2140 = vmatpush1.msra.mxu0 %v2112
    %2141 = vmatprep.subr.mxu0 %v2111
    %2142 = vmatpush1.msra.mxu0 %v2110
    %2143 = vmatprep.subr.mxu0 %v2109
    %2144 = vmatpush1.msra.mxu0 %v2108
    %2145 = vmatprep.subr.mxu0 %v2107
    %2146 = vmatpush1.msra.mxu0 %v2106
    %2147 = vmatprep.subr.mxu0 %v2105
    %2148 = vmatpush1.msra.mxu0 %v2104
    %2149 = vmatprep.subr.mxu0 %v2103
    %2150 = vmatpush1.msra.mxu0 %v2102
    %2151 = vmatprep.subr.mxu0 %v2101
    %2152 = vmatpush1.msra.mxu0 %v2100
    %2153 = vmatprep.subr.mxu0 %v2099
    %2154 = vmatpush1.msra.mxu0 %v2098
    %2155 = vmatprep.subr.mxu0 %v2097
    %2156 = vmatpush1.msra.mxu0 %v2096
    %2157 = vmatprep.subr.mxu0 %v2095
    %2158 = vmatpush1.msra.mxu0 %v2094
    %2159 = vmatprep.subr.mxu0 0.0
    %2160 = vmatpush2.msra.mxu0 0.0
    %2161 = vmatprep.subr.mxu0 0.0
    %2162 = vmatpush2.msra.mxu0 0.0
    %2163 = vmatprep.subr.mxu0 0.0
    %2164 = vmatpush2.msra.mxu0 0.0
    %2165 = vmatprep.subr.mxu0 0.0
    %2166 = vmatpush2.msra.mxu0 0.0
    %2167 = vmatprep.subr.mxu0 0.0
    %2168 = vmatpush2.msra.mxu0 0.0
    %2169 = vmatprep.subr.mxu0 0.0
    %2170 = vmatpush2.msra.mxu0 0.0
    %2171 = vmatprep.subr.mxu0 0.0
    %2172 = vmatpush2.msra.mxu0 0.0
    %2173 = vmatprep.subr.mxu0 0.0
    %2174 = vmatpush2.msra.mxu0 0.0
    %2175 = vmatprep.subr.mxu0 0.0
    %2176 = vmatpush2.msra.mxu0 0.0
    %2177 = vmatprep.subr.mxu0 0.0
    %2178 = vmatpush2.msra.mxu0 0.0
    %2179 = vmatprep.subr.mxu0 0.0
    %2180 = vmatpush2.msra.mxu0 0.0
    %2181 = vmatprep.subr.mxu0 0.0
    %2182 = vmatpush2.msra.mxu0 0.0
    %2183 = vmatprep.subr.mxu0 0.0
    %2184 = vmatpush2.msra.mxu0 0.0
    %2185 = vmatprep.subr.mxu0 0.0
    %2186 = vmatpush2.msra.mxu0 0.0
    %2187 = vmatprep.subr.mxu0 0.0
    %2188 = vmatpush2.msra.mxu0 0.0
    %2189 = vmatprep.subr.mxu0 0.0
    %2190 = vmatpush2.msra.mxu0 0.0
    %2191 = vmatprep.mubr.f32.mxu0 0.0
    %2192 = vmatmul.mubr.f32.gmra.mxu0 %v1684
    %v2193 = vpop.f32.mrf.mxu0
    %v2194 = vadd.f32 0.0, %v2193
    %v2195 = vpop.f32.mrf.mxu0
    %v2196 = vadd.f32 0.0, %v2195
    %2197 = vmatprep.mubr.f32.mxu0 0.0
    %2198 = vmatmul.mubr.f32.gmra.mxu0 %v1687
    %v2199 = vpop.f32.mrf.mxu0
    %v2200 = vadd.f32 0.0, %v2199
    %v2201 = vpop.f32.mrf.mxu0
    %v2202 = vadd.f32 0.0, %v2201
    %2203 = vmatprep.mubr.f32.mxu0 0.0
    %2204 = vmatmul.mubr.f32.gmra.mxu0 %v1690
    %v2205 = vpop.f32.mrf.mxu0
    %v2206 = vadd.f32 0.0, %v2205
    %v2207 = vpop.f32.mrf.mxu0
    %v2208 = vadd.f32 0.0, %v2207
    %2209 = vmatprep.mubr.f32.mxu0 0.0
    %2210 = vmatmul.mubr.f32.gmra.mxu0 %v1693
    %v2211 = vpop.f32.mrf.mxu0
    %v2212 = vadd.f32 0.0, %v2211
    %v2213 = vpop.f32.mrf.mxu0
    %v2214 = vadd.f32 0.0, %v2213
    %2215 = vmatprep.mubr.f32.mxu0 0.0
    %2216 = vmatmul.mubr.f32.gmra.mxu0 %v1696
    %v2217 = vpop.f32.mrf.mxu0
    %v2218 = vadd.f32 0.0, %v2217
    %v2219 = vpop.f32.mrf.mxu0
    %v2220 = vadd.f32 0.0, %v2219
    %2221 = vmatprep.mubr.f32.mxu0 0.0
    %2222 = vmatmul.mubr.f32.gmra.mxu0 %v1699
    %v2223 = vpop.f32.mrf.mxu0
    %v2224 = vadd.f32 0.0, %v2223
    %v2225 = vpop.f32.mrf.mxu0
    %v2226 = vadd.f32 0.0, %v2225
    %2227 = vmatprep.mubr.f32.mxu0 0.0
    %2228 = vmatmul.mubr.f32.gmra.mxu0 %v1962
    %v2229 = vpop.f32.mrf.mxu0
    %v2230 = vadd.f32 0.0, %v2229
    %v2231 = vpop.f32.mrf.mxu0
    %v2232 = vadd.f32 0.0, %v2231
    %2233 = vmatprep.mubr.f32.mxu0 0.0
    %2234 = vmatmul.mubr.f32.gmra.mxu0 %v2125
    %v2235 = vpop.f32.mrf.mxu0
    %v2236 = vadd.f32 0.0, %v2235
    %v2237 = vpop.f32.mrf.mxu0
    %v2238 = vadd.f32 0.0, %v2237
    %2239 = vdwg.mxu0
    %v2240 = vadd.f32 %v2077, %v2194
    %v2241 = vadd.f32 %v2078, %v2196
    %v2242 = vadd.f32 %v2079, %v2200
    %v2243 = vadd.f32 %v2080, %v2202
    %v2244 = vadd.f32 %v2081, %v2206
    %v2245 = vadd.f32 %v2082, %v2208
    %v2246 = vadd.f32 %v2083, %v2212
    %v2247 = vadd.f32 %v2084, %v2214
    %v2248 = vadd.f32 %v2085, %v2218
    %v2249 = vadd.f32 %v2086, %v2220
    %v2250 = vadd.f32 %v2087, %v2224
    %v2251 = vadd.f32 %v2088, %v2226
    %v2252 = vadd.f32 %v2089, %v2230
    %v2253 = vadd.f32 %v2090, %v2232
    %v2254 = vadd.f32 %v2091, %v2236
    %v2255 = vadd.f32 %v2092, %v2238
    %s2256 = scalar_lea.vmem %s3, 960
    %v2257 = vld [vmem:[%s2256] sm:$0xff]
    %v2258 = vld [vmem:[%s2256 + $0x8] sm:$0xff]
    %v2259 = vld [vmem:[%s2256 + $0x10] sm:$0xff]
    %v2260 = vld [vmem:[%s2256 + $0x18] sm:$0xff]
    %v2261 = vld [vmem:[%s2256 + $0x20] sm:$0xff]
    %v2262 = vld [vmem:[%s2256 + $0x28] sm:$0xff]
    %v2263 = vld [vmem:[%s2256 + $0x30] sm:$0xff]
    %v2264 = vld [vmem:[%s2256 + $0x38] sm:$0xff]
    %v2265 = vld [vmem:[%s2256 + $0x40] sm:$0xff]
    %v2266 = vld [vmem:[%s2256 + $0x48] sm:$0xff]
    %v2267 = vld [vmem:[%s2256 + $0x50] sm:$0xff]
    %v2268 = vld [vmem:[%s2256 + $0x58] sm:$0xff]
    %v2269 = vld [vmem:[%s2256 + $0x60] sm:$0xff]
    %v2270 = vld [vmem:[%s2256 + $0x68] sm:$0xff]
    %v2271 = vld [vmem:[%s2256 + $0x70] sm:$0xff]
    %v2272 = vld [vmem:[%s2256 + $0x78] sm:$0xff]
    %v2273 = vld [vmem:[%s2256 + $0x80] sm:$0xff]
    %v2274 = vld [vmem:[%s2256 + $0x88] sm:$0xff]
    %v2275 = vld [vmem:[%s2256 + $0x90] sm:$0xff]
    %v2276 = vld [vmem:[%s2256 + $0x98] sm:$0xff]
    %v2277 = vld [vmem:[%s2256 + $0xa0] sm:$0xff]
    %v2278 = vld [vmem:[%s2256 + $0xa8] sm:$0xff]
    %v2279 = vld [vmem:[%s2256 + $0xb0] sm:$0xff]
    %v2280 = vld [vmem:[%s2256 + $0xb8] sm:$0xff]
    %v2281 = vld [vmem:[%s2256 + $0xc0] sm:$0xff]
    %v2282 = vld [vmem:[%s2256 + $0xc8] sm:$0xff]
    %v2283 = vld [vmem:[%s2256 + $0xd0] sm:$0xff]
    %v2284 = vld [vmem:[%s2256 + $0xd8] sm:$0xff]
    %v2285 = vld [vmem:[%s2256 + $0xe0] sm:$0xff]
    %v2286 = vld [vmem:[%s2256 + $0xe8] sm:$0xff]
    %v2288 = vsel %vm1676, %v1614, 0
    %2290 = vmatprep.subr.mxu0 0.0
    %2291 = vmatpush1.msra.mxu0 0.0
    %2292 = vmatprep.subr.mxu0 %v2286
    %2293 = vmatpush1.msra.mxu0 %v2285
    %2294 = vmatprep.subr.mxu0 %v2284
    %2295 = vmatpush1.msra.mxu0 %v2283
    %2296 = vmatprep.subr.mxu0 %v2282
    %2297 = vmatpush1.msra.mxu0 %v2281
    %2298 = vmatprep.subr.mxu0 %v2280
    %2299 = vmatpush1.msra.mxu0 %v2279
    %2300 = vmatprep.subr.mxu0 %v2278
    %2301 = vmatpush1.msra.mxu0 %v2277
    %2302 = vmatprep.subr.mxu0 %v2276
    %2303 = vmatpush1.msra.mxu0 %v2275
    %2304 = vmatprep.subr.mxu0 %v2274
    %2305 = vmatpush1.msra.mxu0 %v2273
    %2306 = vmatprep.subr.mxu0 %v2272
    %2307 = vmatpush1.msra.mxu0 %v2271
    %2308 = vmatprep.subr.mxu0 %v2270
    %2309 = vmatpush1.msra.mxu0 %v2269
    %2310 = vmatprep.subr.mxu0 %v2268
    %2311 = vmatpush1.msra.mxu0 %v2267
    %2312 = vmatprep.subr.mxu0 %v2266
    %2313 = vmatpush1.msra.mxu0 %v2265
    %2314 = vmatprep.subr.mxu0 %v2264
    %2315 = vmatpush1.msra.mxu0 %v2263
    %2316 = vmatprep.subr.mxu0 %v2262
    %2317 = vmatpush1.msra.mxu0 %v2261
    %2318 = vmatprep.subr.mxu0 %v2260
    %2319 = vmatpush1.msra.mxu0 %v2259
    %2320 = vmatprep.subr.mxu0 %v2258
    %2321 = vmatpush1.msra.mxu0 %v2257
    %2322 = vmatprep.subr.mxu0 0.0
    %2323 = vmatpush2.msra.mxu0 0.0
    %2324 = vmatprep.subr.mxu0 0.0
    %2325 = vmatpush2.msra.mxu0 0.0
    %2326 = vmatprep.subr.mxu0 0.0
    %2327 = vmatpush2.msra.mxu0 0.0
    %2328 = vmatprep.subr.mxu0 0.0
    %2329 = vmatpush2.msra.mxu0 0.0
    %2330 = vmatprep.subr.mxu0 0.0
    %2331 = vmatpush2.msra.mxu0 0.0
    %2332 = vmatprep.subr.mxu0 0.0
    %2333 = vmatpush2.msra.mxu0 0.0
    %2334 = vmatprep.subr.mxu0 0.0
    %2335 = vmatpush2.msra.mxu0 0.0
    %2336 = vmatprep.subr.mxu0 0.0
    %2337 = vmatpush2.msra.mxu0 0.0
    %2338 = vmatprep.subr.mxu0 0.0
    %2339 = vmatpush2.msra.mxu0 0.0
    %2340 = vmatprep.subr.mxu0 0.0
    %2341 = vmatpush2.msra.mxu0 0.0
    %2342 = vmatprep.subr.mxu0 0.0
    %2343 = vmatpush2.msra.mxu0 0.0
    %2344 = vmatprep.subr.mxu0 0.0
    %2345 = vmatpush2.msra.mxu0 0.0
    %2346 = vmatprep.subr.mxu0 0.0
    %2347 = vmatpush2.msra.mxu0 0.0
    %2348 = vmatprep.subr.mxu0 0.0
    %2349 = vmatpush2.msra.mxu0 0.0
    %2350 = vmatprep.subr.mxu0 0.0
    %2351 = vmatpush2.msra.mxu0 0.0
    %2352 = vmatprep.subr.mxu0 0.0
    %2353 = vmatpush2.msra.mxu0 0.0
    %2354 = vmatprep.mubr.f32.mxu0 0.0
    %2355 = vmatmul.mubr.f32.gmra.mxu0 %v1687
    %v2356 = vpop.f32.mrf.mxu0
    %v2357 = vadd.f32 0.0, %v2356
    %v2358 = vpop.f32.mrf.mxu0
    %v2359 = vadd.f32 0.0, %v2358
    %2360 = vmatprep.mubr.f32.mxu0 0.0
    %2361 = vmatmul.mubr.f32.gmra.mxu0 %v1690
    %v2362 = vpop.f32.mrf.mxu0
    %v2363 = vadd.f32 0.0, %v2362
    %v2364 = vpop.f32.mrf.mxu0
    %v2365 = vadd.f32 0.0, %v2364
    %2366 = vmatprep.mubr.f32.mxu0 0.0
    %2367 = vmatmul.mubr.f32.gmra.mxu0 %v1693
    %v2368 = vpop.f32.mrf.mxu0
    %v2369 = vadd.f32 0.0, %v2368
    %v2370 = vpop.f32.mrf.mxu0
    %v2371 = vadd.f32 0.0, %v2370
    %2372 = vmatprep.mubr.f32.mxu0 0.0
    %2373 = vmatmul.mubr.f32.gmra.mxu0 %v1696
    %v2374 = vpop.f32.mrf.mxu0
    %v2375 = vadd.f32 0.0, %v2374
    %v2376 = vpop.f32.mrf.mxu0
    %v2377 = vadd.f32 0.0, %v2376
    %2378 = vmatprep.mubr.f32.mxu0 0.0
    %2379 = vmatmul.mubr.f32.gmra.mxu0 %v1699
    %v2380 = vpop.f32.mrf.mxu0
    %v2381 = vadd.f32 0.0, %v2380
    %v2382 = vpop.f32.mrf.mxu0
    %v2383 = vadd.f32 0.0, %v2382
    %2384 = vmatprep.mubr.f32.mxu0 0.0
    %2385 = vmatmul.mubr.f32.gmra.mxu0 %v1962
    %v2386 = vpop.f32.mrf.mxu0
    %v2387 = vadd.f32 0.0, %v2386
    %v2388 = vpop.f32.mrf.mxu0
    %v2389 = vadd.f32 0.0, %v2388
    %2390 = vmatprep.mubr.f32.mxu0 0.0
    %2391 = vmatmul.mubr.f32.gmra.mxu0 %v2125
    %v2392 = vpop.f32.mrf.mxu0
    %v2393 = vadd.f32 0.0, %v2392
    %v2394 = vpop.f32.mrf.mxu0
    %v2395 = vadd.f32 0.0, %v2394
    %2396 = vmatprep.mubr.f32.mxu0 0.0
    %2397 = vmatmul.mubr.f32.gmra.mxu0 %v2288
    %v2398 = vpop.f32.mrf.mxu0
    %v2399 = vadd.f32 0.0, %v2398
    %v2400 = vpop.f32.mrf.mxu0
    %v2401 = vadd.f32 0.0, %v2400
    %2402 = vdwg.mxu0
    %v2403 = vadd.f32 %v2240, %v2357
    %v2404 = vadd.f32 %v2241, %v2359
    %v2405 = vadd.f32 %v2242, %v2363
    %v2406 = vadd.f32 %v2243, %v2365
    %v2407 = vadd.f32 %v2244, %v2369
    %v2408 = vadd.f32 %v2245, %v2371
    %v2409 = vadd.f32 %v2246, %v2375
    %v2410 = vadd.f32 %v2247, %v2377
    %v2411 = vadd.f32 %v2248, %v2381
    %v2412 = vadd.f32 %v2249, %v2383
    %v2413 = vadd.f32 %v2250, %v2387
    %v2414 = vadd.f32 %v2251, %v2389
    %v2415 = vadd.f32 %v2252, %v2393
    %v2416 = vadd.f32 %v2253, %v2395
    %v2417 = vadd.f32 %v2254, %v2399
    %v2418 = vadd.f32 %v2255, %v2401
    %v2419 = vld [vmem:[%s4] sm:$0x3]
    %v2421 = vlaneseq
    %v2422 = vshrl.u32 %v2421, 7
    %v2423 = vsub.s32 0, %v2422
    %v2424 = vrot.slane %v2419, %v2423
    %v2425 = vlaneseq
    %v2426 = vshrl.u32 %v2425, 7
    %v2427 = vsub.s32 1, %v2426
    %v2428 = vrot.slane %v2419, %v2427
    %v2431 = vadd.f32 %v2403, %v2424
    %v2432 = vadd.f32 %v2404, %v2428
    %v2433 = vadd.f32 %v2405, %v2424
    %v2434 = vadd.f32 %v2406, %v2428
    %v2435 = vadd.f32 %v2407, %v2424
    %v2436 = vadd.f32 %v2408, %v2428
    %v2437 = vadd.f32 %v2409, %v2424
    %v2438 = vadd.f32 %v2410, %v2428
    %v2439 = vadd.f32 %v2411, %v2424
    %v2440 = vadd.f32 %v2412, %v2428
    %v2441 = vadd.f32 %v2413, %v2424
    %v2442 = vadd.f32 %v2414, %v2428
    %v2443 = vadd.f32 %v2415, %v2424
    %v2444 = vadd.f32 %v2416, %v2428
    %v2445 = vadd.f32 %v2417, %v2424
    %v2446 = vadd.f32 %v2418, %v2428
    %v2447 = vmax.f32 %v2431, %v2433
    %v2448 = vmax.f32 %v2432, %v2434
    %v2449 = vmax.f32 %v2435, %v2437
    %v2450 = vmax.f32 %v2436, %v2438
    %v2451 = vmax.f32 %v2439, %v2441
    %v2452 = vmax.f32 %v2440, %v2442
    %v2453 = vmax.f32 %v2443, %v2445
    %v2454 = vmax.f32 %v2444, %v2446
    %2463 = vrot.lane.b32.xlu0 %v2447, 48
    %v2464 = vpop.permute.xlu0 %2463
    %2465 = vrot.lane.b32.xlu0 %v2448, 48
    %v2466 = vpop.permute.xlu0 %2465
    %2467 = vrot.lane.b32.xlu0 %v2449, 48
    %v2468 = vpop.permute.xlu0 %2467
    %2469 = vrot.lane.b32.xlu0 %v2450, 48
    %v2470 = vpop.permute.xlu0 %2469
    %2471 = vrot.lane.b32.xlu0 %v2451, 48
    %v2472 = vpop.permute.xlu0 %2471
    %2473 = vrot.lane.b32.xlu0 %v2452, 48
    %v2474 = vpop.permute.xlu0 %2473
    %2475 = vrot.lane.b32.xlu0 %v2453, 48
    %v2476 = vpop.permute.xlu0 %2475
    %2477 = vrot.lane.b32.xlu0 %v2454, 48
    %v2478 = vpop.permute.xlu0 %2477
    %vm2479 = vcmask 392192
    %v2480 = vsel %vm2479, %v2464, %v2466
    %v2481 = vsel %vm2479, %v2468, %v2470
    %v2482 = vsel %vm2479, %v2472, %v2474
    %v2483 = vsel %vm2479, %v2476, %v2478
    %v2488 = vmax.f32 %v2447, %v2480
    %v2489 = vmax.f32 %v2449, %v2481
    %v2490 = vmax.f32 %v2451, %v2482
    %v2491 = vmax.f32 %v2453, %v2483
    %v2492 = vmax.f32 %v2488, 0.0
    %v2493 = vmax.f32 %v2489, 0.0
    %v2494 = vmax.f32 %v2490, 0.0
    %v2495 = vmax.f32 %v2491, 0.0
    %v2496 = vld [vmem:[%s5] sm:$0xff]
    %v2497 = vld [vmem:[%s5 + $0x8] sm:$0xff]
    %v2498 = vld [vmem:[%s5 + $0x10] sm:$0xff]
    %v2499 = vld [vmem:[%s5 + $0x18] sm:$0xff]
    %v2500 = vld [vmem:[%s5 + $0x20] sm:$0xff]
    %v2501 = vld [vmem:[%s5 + $0x28] sm:$0xff]
    %v2502 = vld [vmem:[%s5 + $0x30] sm:$0xff]
    %v2503 = vld [vmem:[%s5 + $0x38] sm:$0xff]
    %v2504 = vld [vmem:[%s5 + $0x40] sm:$0xff]
    %v2505 = vld [vmem:[%s5 + $0x48] sm:$0xff]
    %s2506 = scalar_lea.vmem %s5, 80
    %v2507 = vld [vmem:[%s2506] sm:$0xff]
    %v2508 = vld [vmem:[%s2506 + $0x8] sm:$0xff]
    %v2509 = vld [vmem:[%s2506 + $0x10] sm:$0xff]
    %v2510 = vld [vmem:[%s2506 + $0x18] sm:$0xff]
    %v2511 = vld [vmem:[%s2506 + $0x20] sm:$0xff]
    %v2512 = vld [vmem:[%s2506 + $0x28] sm:$0xff]
    %v2513 = vld [vmem:[%s2506 + $0x30] sm:$0xff]
    %v2514 = vld [vmem:[%s2506 + $0x38] sm:$0xff]
    %v2515 = vld [vmem:[%s2506 + $0x40] sm:$0xff]
    %v2516 = vld [vmem:[%s2506 + $0x48] sm:$0xff]
    %vm2517 = vcmask 654336
    %v2519 = vsel %vm2517, %v2493, 0
    %2521 = vmatprep.subr.mxu0 0.0
    %2522 = vmatpush1.msra.mxu0 0.0
    %2523 = vmatprep.subr.mxu0 0.0
    %2524 = vmatpush1.msra.mxu0 0.0
    %2525 = vmatprep.subr.mxu0 0.0
    %2526 = vmatpush1.msra.mxu0 0.0
    %2527 = vmatprep.subr.mxu0 0.0
    %2528 = vmatpush1.msra.mxu0 0.0
    %2529 = vmatprep.subr.mxu0 0.0
    %2530 = vmatpush1.msra.mxu0 0.0
    %2531 = vmatprep.subr.mxu0 0.0
    %2532 = vmatpush1.msra.mxu0 0.0
    %2533 = vmatprep.subr.mxu0 0.0
    %2534 = vmatpush1.msra.mxu0 %v2516
    %2535 = vmatprep.subr.mxu0 0.0
    %2536 = vmatpush1.msra.mxu0 %v2515
    %2537 = vmatprep.subr.mxu0 0.0
    %2538 = vmatpush1.msra.mxu0 %v2514
    %2539 = vmatprep.subr.mxu0 0.0
    %2540 = vmatpush1.msra.mxu0 %v2513
    %2541 = vmatprep.subr.mxu0 0.0
    %2542 = vmatpush1.msra.mxu0 %v2512
    %2543 = vmatprep.subr.mxu0 0.0
    %2544 = vmatpush1.msra.mxu0 %v2511
    %2545 = vmatprep.subr.mxu0 0.0
    %2546 = vmatpush1.msra.mxu0 %v2510
    %2547 = vmatprep.subr.mxu0 0.0
    %2548 = vmatpush1.msra.mxu0 %v2509
    %2549 = vmatprep.subr.mxu0 0.0
    %2550 = vmatpush1.msra.mxu0 %v2508
    %2551 = vmatprep.subr.mxu0 0.0
    %2552 = vmatpush1.msra.mxu0 %v2507
    %2553 = vmatprep.subr.mxu0 0.0
    %2554 = vmatpush2.msra.mxu0 0.0
    %2555 = vmatprep.subr.mxu0 0.0
    %2556 = vmatpush2.msra.mxu0 0.0
    %2557 = vmatprep.subr.mxu0 0.0
    %2558 = vmatpush2.msra.mxu0 0.0
    %2559 = vmatprep.subr.mxu0 0.0
    %2560 = vmatpush2.msra.mxu0 0.0
    %2561 = vmatprep.subr.mxu0 0.0
    %2562 = vmatpush2.msra.mxu0 0.0
    %2563 = vmatprep.subr.mxu0 0.0
    %2564 = vmatpush2.msra.mxu0 0.0
    %2565 = vmatprep.subr.mxu0 0.0
    %2566 = vmatpush2.msra.mxu0 0.0
    %2567 = vmatprep.subr.mxu0 0.0
    %2568 = vmatpush2.msra.mxu0 0.0
    %2569 = vmatprep.subr.mxu0 0.0
    %2570 = vmatpush2.msra.mxu0 0.0
    %2571 = vmatprep.subr.mxu0 0.0
    %2572 = vmatpush2.msra.mxu0 0.0
    %2573 = vmatprep.subr.mxu0 0.0
    %2574 = vmatpush2.msra.mxu0 0.0
    %2575 = vmatprep.subr.mxu0 0.0
    %2576 = vmatpush2.msra.mxu0 0.0
    %2577 = vmatprep.subr.mxu0 0.0
    %2578 = vmatpush2.msra.mxu0 0.0
    %2579 = vmatprep.subr.mxu0 0.0
    %2580 = vmatpush2.msra.mxu0 0.0
    %2581 = vmatprep.subr.mxu0 0.0
    %2582 = vmatpush2.msra.mxu0 0.0
    %2583 = vmatprep.subr.mxu0 0.0
    %2584 = vmatpush2.msra.mxu0 0.0
    %2585 = vmatprep.mubr.f32.mxu0 0.0
    %2586 = vmatmul.mubr.f32.gmra.mxu0 %v2519
    %v2587 = vpop.f32.mrf.mxu0
    %v2588 = vadd.f32 0.0, %v2587
    %v2589 = vpop.f32.mrf.mxu0
    %2590 = vdwg.mxu0
    %v2592 = vsel %vm2517, %v2492, 0
    %2594 = vmatprep.subr.mxu0 0.0
    %2595 = vmatpush1.msra.mxu0 0.0
    %2596 = vmatprep.subr.mxu0 0.0
    %2597 = vmatpush1.msra.mxu0 0.0
    %2598 = vmatprep.subr.mxu0 0.0
    %2599 = vmatpush1.msra.mxu0 0.0
    %2600 = vmatprep.subr.mxu0 0.0
    %2601 = vmatpush1.msra.mxu0 0.0
    %2602 = vmatprep.subr.mxu0 0.0
    %2603 = vmatpush1.msra.mxu0 0.0
    %2604 = vmatprep.subr.mxu0 0.0
    %2605 = vmatpush1.msra.mxu0 0.0
    %2606 = vmatprep.subr.mxu0 0.0
    %2607 = vmatpush1.msra.mxu0 %v2505
    %2608 = vmatprep.subr.mxu0 0.0
    %2609 = vmatpush1.msra.mxu0 %v2504
    %2610 = vmatprep.subr.mxu0 0.0
    %2611 = vmatpush1.msra.mxu0 %v2503
    %2612 = vmatprep.subr.mxu0 0.0
    %2613 = vmatpush1.msra.mxu0 %v2502
    %2614 = vmatprep.subr.mxu0 0.0
    %2615 = vmatpush1.msra.mxu0 %v2501
    %2616 = vmatprep.subr.mxu0 0.0
    %2617 = vmatpush1.msra.mxu0 %v2500
    %2618 = vmatprep.subr.mxu0 0.0
    %2619 = vmatpush1.msra.mxu0 %v2499
    %2620 = vmatprep.subr.mxu0 0.0
    %2621 = vmatpush1.msra.mxu0 %v2498
    %2622 = vmatprep.subr.mxu0 0.0
    %2623 = vmatpush1.msra.mxu0 %v2497
    %2624 = vmatprep.subr.mxu0 0.0
    %2625 = vmatpush1.msra.mxu0 %v2496
    %2626 = vmatprep.subr.mxu0 0.0
    %2627 = vmatpush2.msra.mxu0 0.0
    %2628 = vmatprep.subr.mxu0 0.0
    %2629 = vmatpush2.msra.mxu0 0.0
    %2630 = vmatprep.subr.mxu0 0.0
    %2631 = vmatpush2.msra.mxu0 0.0
    %2632 = vmatprep.subr.mxu0 0.0
    %2633 = vmatpush2.msra.mxu0 0.0
    %2634 = vmatprep.subr.mxu0 0.0
    %2635 = vmatpush2.msra.mxu0 0.0
    %2636 = vmatprep.subr.mxu0 0.0
    %2637 = vmatpush2.msra.mxu0 0.0
    %2638 = vmatprep.subr.mxu0 0.0
    %2639 = vmatpush2.msra.mxu0 0.0
    %2640 = vmatprep.subr.mxu0 0.0
    %2641 = vmatpush2.msra.mxu0 0.0
    %2642 = vmatprep.subr.mxu0 0.0
    %2643 = vmatpush2.msra.mxu0 0.0
    %2644 = vmatprep.subr.mxu0 0.0
    %2645 = vmatpush2.msra.mxu0 0.0
    %2646 = vmatprep.subr.mxu0 0.0
    %2647 = vmatpush2.msra.mxu0 0.0
    %2648 = vmatprep.subr.mxu0 0.0
    %2649 = vmatpush2.msra.mxu0 0.0
    %2650 = vmatprep.subr.mxu0 0.0
    %2651 = vmatpush2.msra.mxu0 0.0
    %2652 = vmatprep.subr.mxu0 0.0
    %2653 = vmatpush2.msra.mxu0 0.0
    %2654 = vmatprep.subr.mxu0 0.0
    %2655 = vmatpush2.msra.mxu0 0.0
    %2656 = vmatprep.subr.mxu0 0.0
    %2657 = vmatpush2.msra.mxu0 0.0
    %2658 = vmatprep.mubr.f32.mxu0 0.0
    %2659 = vmatmul.mubr.f32.gmra.mxu0 %v2592
    %v2660 = vpop.f32.mrf.mxu0
    %v2661 = vadd.f32 %v2588, %v2660
    %v2662 = vpop.f32.mrf.mxu0
    %2663 = vdwg.mxu0
    %s2664 = scalar_lea.vmem %s5, 160
    %v2665 = vld [vmem:[%s2664] sm:$0xff]
    %v2666 = vld [vmem:[%s2664 + $0x8] sm:$0xff]
    %v2667 = vld [vmem:[%s2664 + $0x10] sm:$0xff]
    %v2668 = vld [vmem:[%s2664 + $0x18] sm:$0xff]
    %v2669 = vld [vmem:[%s2664 + $0x20] sm:$0xff]
    %v2670 = vld [vmem:[%s2664 + $0x28] sm:$0xff]
    %v2671 = vld [vmem:[%s2664 + $0x30] sm:$0xff]
    %v2672 = vld [vmem:[%s2664 + $0x38] sm:$0xff]
    %v2673 = vld [vmem:[%s2664 + $0x40] sm:$0xff]
    %v2674 = vld [vmem:[%s2664 + $0x48] sm:$0xff]
    %v2676 = vsel %vm2517, %v2494, 0
    %2678 = vmatprep.subr.mxu0 0.0
    %2679 = vmatpush1.msra.mxu0 0.0
    %2680 = vmatprep.subr.mxu0 0.0
    %2681 = vmatpush1.msra.mxu0 0.0
    %2682 = vmatprep.subr.mxu0 0.0
    %2683 = vmatpush1.msra.mxu0 0.0
    %2684 = vmatprep.subr.mxu0 0.0
    %2685 = vmatpush1.msra.mxu0 0.0
    %2686 = vmatprep.subr.mxu0 0.0
    %2687 = vmatpush1.msra.mxu0 0.0
    %2688 = vmatprep.subr.mxu0 0.0
    %2689 = vmatpush1.msra.mxu0 0.0
    %2690 = vmatprep.subr.mxu0 0.0
    %2691 = vmatpush1.msra.mxu0 %v2674
    %2692 = vmatprep.subr.mxu0 0.0
    %2693 = vmatpush1.msra.mxu0 %v2673
    %2694 = vmatprep.subr.mxu0 0.0
    %2695 = vmatpush1.msra.mxu0 %v2672
    %2696 = vmatprep.subr.mxu0 0.0
    %2697 = vmatpush1.msra.mxu0 %v2671
    %2698 = vmatprep.subr.mxu0 0.0
    %2699 = vmatpush1.msra.mxu0 %v2670
    %2700 = vmatprep.subr.mxu0 0.0
    %2701 = vmatpush1.msra.mxu0 %v2669
    %2702 = vmatprep.subr.mxu0 0.0
    %2703 = vmatpush1.msra.mxu0 %v2668
    %2704 = vmatprep.subr.mxu0 0.0
    %2705 = vmatpush1.msra.mxu0 %v2667
    %2706 = vmatprep.subr.mxu0 0.0
    %2707 = vmatpush1.msra.mxu0 %v2666
    %2708 = vmatprep.subr.mxu0 0.0
    %2709 = vmatpush1.msra.mxu0 %v2665
    %2710 = vmatprep.subr.mxu0 0.0
    %2711 = vmatpush2.msra.mxu0 0.0
    %2712 = vmatprep.subr.mxu0 0.0
    %2713 = vmatpush2.msra.mxu0 0.0
    %2714 = vmatprep.subr.mxu0 0.0
    %2715 = vmatpush2.msra.mxu0 0.0
    %2716 = vmatprep.subr.mxu0 0.0
    %2717 = vmatpush2.msra.mxu0 0.0
    %2718 = vmatprep.subr.mxu0 0.0
    %2719 = vmatpush2.msra.mxu0 0.0
    %2720 = vmatprep.subr.mxu0 0.0
    %2721 = vmatpush2.msra.mxu0 0.0
    %2722 = vmatprep.subr.mxu0 0.0
    %2723 = vmatpush2.msra.mxu0 0.0
    %2724 = vmatprep.subr.mxu0 0.0
    %2725 = vmatpush2.msra.mxu0 0.0
    %2726 = vmatprep.subr.mxu0 0.0
    %2727 = vmatpush2.msra.mxu0 0.0
    %2728 = vmatprep.subr.mxu0 0.0
    %2729 = vmatpush2.msra.mxu0 0.0
    %2730 = vmatprep.subr.mxu0 0.0
    %2731 = vmatpush2.msra.mxu0 0.0
    %2732 = vmatprep.subr.mxu0 0.0
    %2733 = vmatpush2.msra.mxu0 0.0
    %2734 = vmatprep.subr.mxu0 0.0
    %2735 = vmatpush2.msra.mxu0 0.0
    %2736 = vmatprep.subr.mxu0 0.0
    %2737 = vmatpush2.msra.mxu0 0.0
    %2738 = vmatprep.subr.mxu0 0.0
    %2739 = vmatpush2.msra.mxu0 0.0
    %2740 = vmatprep.subr.mxu0 0.0
    %2741 = vmatpush2.msra.mxu0 0.0
    %2742 = vmatprep.mubr.f32.mxu0 0.0
    %2743 = vmatmul.mubr.f32.gmra.mxu0 %v2676
    %v2744 = vpop.f32.mrf.mxu0
    %v2745 = vadd.f32 0.0, %v2744
    %v2746 = vpop.f32.mrf.mxu0
    %2747 = vdwg.mxu0
    %v2748 = vadd.f32 %v2661, %v2745
    %s2749 = scalar_lea.vmem %s5, 240
    %v2750 = vld [vmem:[%s2749] sm:$0xff]
    %v2751 = vld [vmem:[%s2749 + $0x8] sm:$0xff]
    %v2752 = vld [vmem:[%s2749 + $0x10] sm:$0xff]
    %v2753 = vld [vmem:[%s2749 + $0x18] sm:$0xff]
    %v2754 = vld [vmem:[%s2749 + $0x20] sm:$0xff]
    %v2755 = vld [vmem:[%s2749 + $0x28] sm:$0xff]
    %v2756 = vld [vmem:[%s2749 + $0x30] sm:$0xff]
    %v2757 = vld [vmem:[%s2749 + $0x38] sm:$0xff]
    %v2758 = vld [vmem:[%s2749 + $0x40] sm:$0xff]
    %v2759 = vld [vmem:[%s2749 + $0x48] sm:$0xff]
    %v2761 = vsel %vm2517, %v2495, 0
    %2763 = vmatprep.subr.mxu0 0.0
    %2764 = vmatpush1.msra.mxu0 0.0
    %2765 = vmatprep.subr.mxu0 0.0
    %2766 = vmatpush1.msra.mxu0 0.0
    %2767 = vmatprep.subr.mxu0 0.0
    %2768 = vmatpush1.msra.mxu0 0.0
    %2769 = vmatprep.subr.mxu0 0.0
    %2770 = vmatpush1.msra.mxu0 0.0
    %2771 = vmatprep.subr.mxu0 0.0
    %2772 = vmatpush1.msra.mxu0 0.0
    %2773 = vmatprep.subr.mxu0 0.0
    %2774 = vmatpush1.msra.mxu0 0.0
    %2775 = vmatprep.subr.mxu0 0.0
    %2776 = vmatpush1.msra.mxu0 %v2759
    %2777 = vmatprep.subr.mxu0 0.0
    %2778 = vmatpush1.msra.mxu0 %v2758
    %2779 = vmatprep.subr.mxu0 0.0
    %2780 = vmatpush1.msra.mxu0 %v2757
    %2781 = vmatprep.subr.mxu0 0.0
    %2782 = vmatpush1.msra.mxu0 %v2756
    %2783 = vmatprep.subr.mxu0 0.0
    %2784 = vmatpush1.msra.mxu0 %v2755
    %2785 = vmatprep.subr.mxu0 0.0
    %2786 = vmatpush1.msra.mxu0 %v2754
    %2787 = vmatprep.subr.mxu0 0.0
    %2788 = vmatpush1.msra.mxu0 %v2753
    %2789 = vmatprep.subr.mxu0 0.0
    %2790 = vmatpush1.msra.mxu0 %v2752
    %2791 = vmatprep.subr.mxu0 0.0
    %2792 = vmatpush1.msra.mxu0 %v2751
    %2793 = vmatprep.subr.mxu0 0.0
    %2794 = vmatpush1.msra.mxu0 %v2750
    %2795 = vmatprep.subr.mxu0 0.0
    %2796 = vmatpush2.msra.mxu0 0.0
    %2797 = vmatprep.subr.mxu0 0.0
    %2798 = vmatpush2.msra.mxu0 0.0
    %2799 = vmatprep.subr.mxu0 0.0
    %2800 = vmatpush2.msra.mxu0 0.0
    %2801 = vmatprep.subr.mxu0 0.0
    %2802 = vmatpush2.msra.mxu0 0.0
    %2803 = vmatprep.subr.mxu0 0.0
    %2804 = vmatpush2.msra.mxu0 0.0
    %2805 = vmatprep.subr.mxu0 0.0
    %2806 = vmatpush2.msra.mxu0 0.0
    %2807 = vmatprep.subr.mxu0 0.0
    %2808 = vmatpush2.msra.mxu0 0.0
    %2809 = vmatprep.subr.mxu0 0.0
    %2810 = vmatpush2.msra.mxu0 0.0
    %2811 = vmatprep.subr.mxu0 0.0
    %2812 = vmatpush2.msra.mxu0 0.0
    %2813 = vmatprep.subr.mxu0 0.0
    %2814 = vmatpush2.msra.mxu0 0.0
    %2815 = vmatprep.subr.mxu0 0.0
    %2816 = vmatpush2.msra.mxu0 0.0
    %2817 = vmatprep.subr.mxu0 0.0
    %2818 = vmatpush2.msra.mxu0 0.0
    %2819 = vmatprep.subr.mxu0 0.0
    %2820 = vmatpush2.msra.mxu0 0.0
    %2821 = vmatprep.subr.mxu0 0.0
    %2822 = vmatpush2.msra.mxu0 0.0
    %2823 = vmatprep.subr.mxu0 0.0
    %2824 = vmatpush2.msra.mxu0 0.0
    %2825 = vmatprep.subr.mxu0 0.0
    %2826 = vmatpush2.msra.mxu0 0.0
    %2827 = vmatprep.mubr.f32.mxu0 0.0
    %2828 = vmatmul.mubr.f32.gmra.mxu0 %v2761
    %v2829 = vpop.f32.mrf.mxu0
    %v2830 = vadd.f32 0.0, %v2829
    %v2831 = vpop.f32.mrf.mxu0
    %2832 = vdwg.mxu0
    %v2833 = vadd.f32 %v2748, %v2830
    %v2834 = vld [vmem:[%s6] sm:$0x1]
    %v2836 = vlaneseq
    %v2837 = vshrl.u32 %v2836, 7
    %v2838 = vsub.s32 0, %v2837
    %v2839 = vrot.slane %v2834, %v2838
    %v2841 = vadd.f32 %v2833, %v2839
    %v2842 = vmax.f32 %v2841, 0.0
    %v2843 = vld [vmem:[%s7] sm:$0xff]
    %v2844 = vld [vmem:[%s7 + $0x8] sm:$0xff]
    %v2845 = vld [vmem:[%s7 + $0x10] sm:$0xff]
    %v2846 = vld [vmem:[%s7 + $0x18] sm:$0xff]
    %v2847 = vld [vmem:[%s7 + $0x20] sm:$0xff]
    %v2848 = vld [vmem:[%s7 + $0x28] sm:$0xff]
    %v2849 = vld [vmem:[%s7 + $0x30] sm:$0x3]
    %v2850 = vld [vmem:[%s8] sm:$0x1]
    %v2852 = vlaneseq
    %v2853 = vshrl.u32 %v2852, 7
    %v2854 = vsub.s32 0, %v2853
    %v2855 = vrot.slane %v2850, %v2854
    %vm2857 = vcmask 408576
    %v2859 = vsel %vm2857, %v2842, 0
    %vm2861 = vcmask 1041408
    %v2863 = vsel %vm2861, %v2849, 0
    %2865 = vmatprep.subr.mxu0 0.0
    %2866 = vmatpush1.msra.mxu0 0.0
    %2867 = vmatprep.subr.mxu0 0.0
    %2868 = vmatpush1.msra.mxu0 0.0
    %2869 = vmatprep.subr.mxu0 0.0
    %2870 = vmatpush1.msra.mxu0 0.0
    %2871 = vmatprep.subr.mxu0 0.0
    %2872 = vmatpush1.msra.mxu0 0.0
    %2873 = vmatprep.subr.mxu0 0.0
    %2874 = vmatpush1.msra.mxu0 0.0
    %2875 = vmatprep.subr.mxu0 0.0
    %2876 = vmatpush1.msra.mxu0 0.0
    %2877 = vmatprep.subr.mxu0 0.0
    %2878 = vmatpush1.msra.mxu0 0.0
    %2879 = vmatprep.subr.mxu0 0.0
    %2880 = vmatpush1.msra.mxu0 0.0
    %2881 = vmatprep.subr.mxu0 0.0
    %2882 = vmatpush1.msra.mxu0 0.0
    %2883 = vmatprep.subr.mxu0 0.0
    %2884 = vmatpush1.msra.mxu0 %v2863
    %2885 = vmatprep.subr.mxu0 0.0
    %2886 = vmatpush1.msra.mxu0 %v2848
    %2887 = vmatprep.subr.mxu0 0.0
    %2888 = vmatpush1.msra.mxu0 %v2847
    %2889 = vmatprep.subr.mxu0 0.0
    %2890 = vmatpush1.msra.mxu0 %v2846
    %2891 = vmatprep.subr.mxu0 0.0
    %2892 = vmatpush1.msra.mxu0 %v2845
    %2893 = vmatprep.subr.mxu0 0.0
    %2894 = vmatpush1.msra.mxu0 %v2844
    %2895 = vmatprep.subr.mxu0 0.0
    %2896 = vmatpush1.msra.mxu0 %v2843
    %2897 = vmatprep.subr.mxu0 0.0
    %2898 = vmatpush2.msra.mxu0 0.0
    %2899 = vmatprep.subr.mxu0 0.0
    %2900 = vmatpush2.msra.mxu0 0.0
    %2901 = vmatprep.subr.mxu0 0.0
    %2902 = vmatpush2.msra.mxu0 0.0
    %2903 = vmatprep.subr.mxu0 0.0
    %2904 = vmatpush2.msra.mxu0 0.0
    %2905 = vmatprep.subr.mxu0 0.0
    %2906 = vmatpush2.msra.mxu0 0.0
    %2907 = vmatprep.subr.mxu0 0.0
    %2908 = vmatpush2.msra.mxu0 0.0
    %2909 = vmatprep.subr.mxu0 0.0
    %2910 = vmatpush2.msra.mxu0 0.0
    %2911 = vmatprep.subr.mxu0 0.0
    %2912 = vmatpush2.msra.mxu0 0.0
    %2913 = vmatprep.subr.mxu0 0.0
    %2914 = vmatpush2.msra.mxu0 0.0
    %2915 = vmatprep.subr.mxu0 0.0
    %2916 = vmatpush2.msra.mxu0 0.0
    %2917 = vmatprep.subr.mxu0 0.0
    %2918 = vmatpush2.msra.mxu0 0.0
    %2919 = vmatprep.subr.mxu0 0.0
    %2920 = vmatpush2.msra.mxu0 0.0
    %2921 = vmatprep.subr.mxu0 0.0
    %2922 = vmatpush2.msra.mxu0 0.0
    %2923 = vmatprep.subr.mxu0 0.0
    %2924 = vmatpush2.msra.mxu0 0.0
    %2925 = vmatprep.subr.mxu0 0.0
    %2926 = vmatpush2.msra.mxu0 0.0
    %2927 = vmatprep.subr.mxu0 0.0
    %2928 = vmatpush2.msra.mxu0 0.0
    %2929 = vmatprep.mubr.f32.mxu0 0.0
    %2930 = vmatmul.mubr.f32.gmra.mxu0 %v2859
    %v2931 = vpop.f32.mrf.mxu0
    %v2932 = vadd.f32 %v2855, %v2931
    %v2933 = vpop.f32.mrf.mxu0
    %2934 = vdwg.mxu0
    %vm2935 = vcmask 80896
    %v2936 = vsel %vm2935, %v2932, -inf
    %2937 = vmax.xlane.f32.xlu0 %v2936
    %v2938 = vpop.xlane.xlu0 %2937
    %v2939 = vsub.f32 %v2932, %v2938
    %v2940 = vmul.f32 %v2939, 1.442695
    %v2941 = vpow.pop %v2940
    %v2942 = vsel %vm2935, %v2941, 0.0
    %2943 = vadd.xlane.f32.xlu0 %v2942
    %v2944 = vpop.xlane.xlu0 %2943
    %v2945 = vlog2.pop %v2944
    %v2946 = vmul.f32 %v2945, 0.6931472
    %v2947 = vsub.f32 %v2939, %v2946
    %2948 = vst.msk [vmem:[#allocation2] sm:$0xff] %vm2935, %v2947
    // Predicated region
    $region38: #{tpu_custom_call.1} parent=1 // pred_check
      _
    $region39: #{tpu_custom_call.1} parent=1 // pred_check_branch
      %2950 = sbr.rel (0) target = $region41
    $region40: #{tpu_custom_call.1} parent=1 // pred_region
      %s2952 = ssub.s32 128, 128
      %2953 = vsyncadd [#allocation3], %s2952
      %s2955 = sshll.u32 [#allocation2], 4
      %s2956 = int_to_ptr.vmem [resolvable:$true] %s2955
      %2958 = dma.vmem_to_hbm [thread:$0]  %s2956, 128, %s9, [#allocation3]
    $region41: #{tpu_custom_call.1} parent=1 // pred_fallthru
      _
    // Predicated region
    $region42: #{tpu_custom_call.1} parent=1 // pred_check
      _
    $region43: #{tpu_custom_call.1} parent=1 // pred_check_branch
      %2960 = sbr.rel (0) target = $region45
    $region44: #{tpu_custom_call.1} parent=1 // pred_region
      %2961 = dma.done [#allocation3], 128
    $region45: #{tpu_custom_call.1} parent=1 // pred_fallthru
      _
    %2962 = vsyncpa [#allocation3], 1

</llo_original>
